<compile_context>
chip_gen: v7x
topology: tpu7x:2x2x1
jax: 0.10.0
libtpu: 0.0.40
codegen_flags: <defaults>
</compile_context>

<pallas_src>
import functools
import math

import jax
import jax.numpy as jnp
from jax.experimental import pallas as pl
from jax.experimental.pallas import tpu as pltpu


# ----------------------------------------------------------------------------
# helpers
# ----------------------------------------------------------------------------
def _round_up(x, m):
    return ((x + m - 1) // m) * m


def _block_diag(stacked):
    """(n, in_d, out_d) stacked weights -> (n*in_d, n*out_d) block-diagonal."""
    n, i_d, o_d = stacked.shape
    out = jnp.zeros((n * i_d, n * o_d), stacked.dtype)
    for k in range(n):
        out = out.at[k * i_d:(k + 1) * i_d, k * o_d:(k + 1) * o_d].set(stacked[k])
    return out


def _pack_biases(biases, align=128):
    """Concatenate bias row-vectors into one (1, total) buffer.

    Each bias is padded to a 128-lane boundary so every in-kernel slice starts
    at a lane-aligned static offset.  Returns (buffer, ((offset, length), ...)).
    """
    chunks, offsets, cur = [], [], 0
    for b in biases:
        b = b.reshape(1, -1).astype(jnp.float32)
        n = b.shape[-1]
        padded = _round_up(n, align)
        chunks.append(jnp.pad(b, ((0, 0), (0, padded - n))))
        offsets.append((cur, n))
        cur += padded
    return jnp.concatenate(chunks, axis=-1), tuple(offsets)


# ----------------------------------------------------------------------------
# kernel
# ----------------------------------------------------------------------------
def autocoder_kernel(x_ref,
                     dw1_ref, dw2_ref,                    # fused per-channel compressors
                     ew0_ref, ew1_ref, ew2_ref,           # encoder
                     cw0_ref, cw1_ref, cw2_ref,           # decoder
                     uw1_ref, uw2_ref,                    # fused per-channel expanders
                     bias_ref,                            # packed biases (1, total)
                     out_ref, *, bias_offsets, compute_dtype):
    def bias(k):
        off, n = bias_offsets[k]
        return bias_ref[:, off:off + n]                   # static, lane-aligned slice

    def dense(a, w_ref, k, act=True):
        y = jnp.dot(a.astype(compute_dtype), w_ref[...],
                    preferred_element_type=jnp.float32) + bias(k)
        return jnp.maximum(y, 0.0) if act else y          # bias/ReLU stay f32

    x = x_ref[...]                                        # (Bt, 6*V), lane-dense
    h = dense(x, dw1_ref, 0)                              # (Bt, 6*V/8)   dnn_1..6 layer 1
    code_all = dense(h, dw2_ref, 1)                       # (Bt, 6*V/16)  dnn_1..6 layer 2
    h = dense(code_all, ew0_ref, 2)                       # encoder
    h = dense(h, ew1_ref, 3)
    code = dense(h, ew2_ref, 4, act=False)
    h = dense(code, cw0_ref, 5)                           # decoder
    h = dense(h, cw1_ref, 6)
    decode = dense(h, cw2_ref, 7, act=False)              # (Bt, 6*V/16)
    h = dense(decode, uw1_ref, 8)                         # dnn_u1..6 layer 1
    out = dense(h, uw2_ref, 9, act=False)                 # (Bt, 6*V)
    out_ref[...] = out.astype(out_ref.dtype)              # single lane-dense store


# ----------------------------------------------------------------------------
# wrapper
# ----------------------------------------------------------------------------
def pack_params(params, compute_dtype=jnp.float32):
    """One-time preprocessing: fuse per-channel weights block-diagonally and
    pack all biases into one lane-aligned buffer.  Do this once per model."""
    (dw1, db1, dw2, db2,
     ew0, eb0, ew1, eb1, ew2, eb2,
     cw0, cb0, cw1, cb1, cw2, cb2,
     uw1, ub1, uw2, ub2) = params

    weights = [
        _block_diag(dw1), _block_diag(dw2),               # (6V, 6V/8), (6V/8, 6V/16)
        ew0, ew1, ew2,
        cw0, cw1, cw2,
        _block_diag(uw1), _block_diag(uw2),               # (6V/16, 6V/8), (6V/8, 6V)
    ]
    weights = [w.astype(compute_dtype) for w in weights]
    bias_buf, bias_offsets = _pack_biases(
        [db1, db2, eb0, eb1, eb2, cb0, cb1, cb2, ub1, ub2])
    return weights, bias_buf, bias_offsets


def blocked_autocoder_forward(x, packed, *, max_batch_tile=256):
    """Full reconstruction path (training / coder!=1,2 branch).

    x:      (B, 6, V) float32
    packed: output of pack_params(params)
    """
    weights, bias_buf, bias_offsets = packed
    B, C, V = x.shape
    assert C == 6 and V % 16 == 0
    six_v = 6 * V
    compute_dtype = weights[0].dtype

    # Lane-dense layout: flatten channels into lanes (contiguous reshape).
    x2 = x.reshape(B, six_v).astype(compute_dtype)

    # Batch tile: MXU-sized for large B, 8-aligned for small B; pad ragged tail.
    bt = max_batch_tile if B >= max_batch_tile else _round_up(max(B, 1), 8)
    b_pad = _round_up(B, bt)
    if b_pad != B:
        x2 = jnp.pad(x2, ((0, b_pad - B), (0, 0)))
    grid = (b_pad // bt,)

    def resident(arr):     # weights: DMA'd once, VMEM-resident across batch steps
        return pl.BlockSpec(arr.shape, lambda i: (0, 0))

    out2 = pl.pallas_call(
        functools.partial(autocoder_kernel,
                          bias_offsets=bias_offsets,
                          compute_dtype=compute_dtype),
        out_shape=jax.ShapeDtypeStruct((b_pad, six_v), jnp.float32),
        grid=grid,
        in_specs=[pl.BlockSpec((bt, six_v), lambda i: (i, 0))]
                 + [resident(w) for w in weights]
                 + [resident(bias_buf)],
        out_specs=pl.BlockSpec((bt, six_v), lambda i: (i, 0)),
        compiler_params=pltpu.CompilerParams(
            dimension_semantics=("parallel",),            # megacore on v7x
            vmem_limit_bytes=48 * 1024 * 1024),
    )(x2, *weights, bias_buf)

    return out2[:B].reshape(B, 6, V)


# ----------------------------------------------------------------------------
# parameter init (shapes identical to the PyTorch __init__, pre-transposed)
# ----------------------------------------------------------------------------
def init_params(key, vect_length, num_layer=3, code_length=72):
    V = vect_length
    V8, V16 = V // 8, V // 16
    stacked = 6 * V // 16
    ds = (stacked / code_length) ** (1.0 / num_layer)

    enc_dims = [(int(stacked // ds ** i), int(stacked // ds ** (i + 1)))
                for i in range(num_layer - 1)]
    enc_dims.append((int(stacked // ds ** (num_layer - 1)), code_length))
    dec_dims = [(int(code_length * ds ** i), int(code_length * ds ** (i + 1)))
                for i in range(num_layer - 1)]
    dec_dims.append((int(code_length * ds ** (num_layer - 1)), stacked))

    keys = iter(jax.random.split(key, 64))

    def linear(in_d, out_d, stack=None):
        k1, k2 = next(keys), next(keys)
        bound = 1.0 / math.sqrt(in_d)
        if stack is None:
            w = jax.random.uniform(k1, (in_d, out_d), jnp.float32, -bound, bound)
            b = jax.random.uniform(k2, (1, out_d), jnp.float32, -bound, bound)
        else:
            w = jax.random.uniform(k1, (stack, in_d, out_d), jnp.float32, -bound, bound)
            b = jax.random.uniform(k2, (stack, 1, out_d), jnp.float32, -bound, bound)
        return w, b

    dw1, db1 = linear(V, V8, stack=6)          # dnn_1..6 first Linear
    dw2, db2 = linear(V8, V16, stack=6)        # dnn_1..6 second Linear
    enc = []
    for (i_d, o_d) in enc_dims:
        enc += list(linear(i_d, o_d))
    dec = []
    for (i_d, o_d) in dec_dims:
        dec += list(linear(i_d, o_d))
    uw1, ub1 = linear(V16, V8, stack=6)        # dnn_u1..6 first Linear
    uw2, ub2 = linear(V8, V, stack=6)          # dnn_u1..6 second Linear

    return [dw1, db1, dw2, db2] + enc + dec + [uw1, ub1, uw2, ub2]


# ----------------------------------------------------------------------------
# pure-JAX reference mirroring the PyTorch forward (training branch)
# ----------------------------------------------------------------------------
def reference_forward(x, params):
    (dw1, db1, dw2, db2,
     ew0, eb0, ew1, eb1, ew2, eb2,
     cw0, cb0, cw1, cb1, cw2, cb2,
     uw1, ub1, uw2, ub2) = params
    relu = jax.nn.relu
    codes = []
    for i in range(6):
        h = relu(x[:, i, :] @ dw1[i] + db1[i])
        codes.append(relu(h @ dw2[i] + db2[i]))
    code_all = jnp.concatenate(codes, axis=-1)
    h = relu(code_all @ ew0 + eb0)
    h = relu(h @ ew1 + eb1)
    code = h @ ew2 + eb2
    h = relu(code @ cw0 + cb0)
    h = relu(h @ cw1 + cb1)
    decode = h @ cw2 + cb2
    step = x.shape[-1] // 16
    outs = []
    for i in range(6):
        seg = decode[:, i * step:(i + 1) * step]
        h = relu(seg @ uw1[i] + ub1[i])
        outs.append(h @ uw2[i] + ub2[i])
    return jnp.stack(outs, axis=1)


if __name__ == "__main__":
    VECT_LENGTH = 256
    BATCH = 12

    key = jax.random.PRNGKey(0)
    kx, kp = jax.random.split(key)
    x = jax.random.normal(kx, (BATCH, 6, VECT_LENGTH), dtype=jnp.float32)
    params = init_params(kp, VECT_LENGTH)

    # f32 path (default) -- small batch tile to exercise the multi-step grid
    # and ragged-tail padding.
    packed = pack_params(params)
    out = blocked_autocoder_forward(x, packed, max_batch_tile=8)
    jax.block_until_ready(out)

    ref = reference_forward(x, params)
    assert out.shape == (BATCH, 6, VECT_LENGTH), out.shape
    assert jnp.allclose(out, ref, atol=1e-3, rtol=1e-3), "mismatch vs JAX reference"

    # Optional bf16-MXU path (f32 accumulation / bias / ReLU): check it runs.
    packed_bf16 = pack_params(params, compute_dtype=jnp.bfloat16)
    out_bf16 = blocked_autocoder_forward(x, packed_bf16, max_batch_tile=8)
    jax.block_until_ready(out_bf16)
    assert out_bf16.shape == (BATCH, 6, VECT_LENGTH)
    assert bool(jnp.all(jnp.isfinite(out_bf16)))

    print("KERNEL_OK")
</pallas_src>

<mosaic_0001>
module attributes {stable_mosaic.version = 11 : i64} {
  func.func @autocoder_kernel(%arg0: i32, %arg1: memref<8x1536xf32, #tpu.memory_space<vmem>>, %arg2: memref<1536x192xf32, #tpu.memory_space<vmem>>, %arg3: memref<192x96xf32, #tpu.memory_space<vmem>>, %arg4: memref<96x87xf32, #tpu.memory_space<vmem>>, %arg5: memref<87x79xf32, #tpu.memory_space<vmem>>, %arg6: memref<79x72xf32, #tpu.memory_space<vmem>>, %arg7: memref<72x79xf32, #tpu.memory_space<vmem>>, %arg8: memref<79x87xf32, #tpu.memory_space<vmem>>, %arg9: memref<87x96xf32, #tpu.memory_space<vmem>>, %arg10: memref<96x192xf32, #tpu.memory_space<vmem>>, %arg11: memref<192x1536xf32, #tpu.memory_space<vmem>>, %arg12: memref<1x2944xf32, #tpu.memory_space<vmem>>, %arg13: memref<8x1536xf32, #tpu.memory_space<vmem>>) attributes {dimension_semantics = [#tpu.dimension_semantics<parallel>], iteration_bounds = array<i64: 2>, scalar_prefetch = 0 : i64, scratch_operands = 0 : i64, tpu.core_type = #tpu.core_type<tc>, window_params = [{transform_indices = @transform_0, window_bounds = array<i64: 8, 1536>}, {pipeline_mode = #tpu.pipeline_mode<synchronous>, transform_indices = @transform_1, window_bounds = array<i64: 1536, 192>}, {pipeline_mode = #tpu.pipeline_mode<synchronous>, transform_indices = @transform_2, window_bounds = array<i64: 192, 96>}, {pipeline_mode = #tpu.pipeline_mode<synchronous>, transform_indices = @transform_3, window_bounds = array<i64: 96, 87>}, {pipeline_mode = #tpu.pipeline_mode<synchronous>, transform_indices = @transform_4, window_bounds = array<i64: 87, 79>}, {pipeline_mode = #tpu.pipeline_mode<synchronous>, transform_indices = @transform_5, window_bounds = array<i64: 79, 72>}, {pipeline_mode = #tpu.pipeline_mode<synchronous>, transform_indices = @transform_6, window_bounds = array<i64: 72, 79>}, {pipeline_mode = #tpu.pipeline_mode<synchronous>, transform_indices = @transform_7, window_bounds = array<i64: 79, 87>}, {pipeline_mode = #tpu.pipeline_mode<synchronous>, transform_indices = @transform_8, window_bounds = array<i64: 87, 96>}, {pipeline_mode = #tpu.pipeline_mode<synchronous>, transform_indices = @transform_9, window_bounds = array<i64: 96, 192>}, {pipeline_mode = #tpu.pipeline_mode<synchronous>, transform_indices = @transform_10, window_bounds = array<i64: 192, 1536>}, {pipeline_mode = #tpu.pipeline_mode<synchronous>, transform_indices = @transform_11, window_bounds = array<i64: 1, 2944>}, {transform_indices = @transform_12, window_bounds = array<i64: 8, 1536>}]} {
    %c0 = arith.constant 0 : index
    %c0_0 = arith.constant 0 : index
    %0 = vector.load %arg1[%c0, %c0_0] : memref<8x1536xf32, #tpu.memory_space<vmem>>, vector<8x1536xf32>
    %c0_1 = arith.constant 0 : index
    %c0_2 = arith.constant 0 : index
    %1 = vector.load %arg2[%c0_1, %c0_2] : memref<1536x192xf32, #tpu.memory_space<vmem>>, vector<1536x192xf32>
    %cst = arith.constant dense<0.000000e+00> : vector<8x192xf32>
    %2 = tpu.matmul %0, %1, %cst {dimension_numbers = #tpu.dot_dimension_numbers<[1], [0], [0], [1], [0, 0, 1, 1], [], []>} : vector<8x1536xf32>, vector<1536x192xf32>, vector<8x192xf32> -> vector<8x192xf32>
    %c0_3 = arith.constant 0 : index
    %c0_4 = arith.constant 0 : index
    %3 = vector.load %arg12[%c0_3, %c0_4] : memref<1x2944xf32, #tpu.memory_space<vmem>>, vector<1x192xf32>
    %4 = vector.broadcast %3 : vector<1x192xf32> to vector<8x192xf32>
    %5 = arith.addf %2, %4 : vector<8x192xf32>
    %cst_5 = arith.constant 0.000000e+00 : f32
    %6 = vector.broadcast %cst_5 : f32 to vector<8x192xf32>
    %7 = arith.maximumf %5, %6 : vector<8x192xf32>
    %c0_6 = arith.constant 0 : index
    %c0_7 = arith.constant 0 : index
    %8 = vector.load %arg3[%c0_6, %c0_7] : memref<192x96xf32, #tpu.memory_space<vmem>>, vector<192x96xf32>
    %cst_8 = arith.constant dense<0.000000e+00> : vector<8x96xf32>
    %9 = tpu.matmul %7, %8, %cst_8 {dimension_numbers = #tpu.dot_dimension_numbers<[1], [0], [0], [1], [0, 0, 1, 1], [], []>} : vector<8x192xf32>, vector<192x96xf32>, vector<8x96xf32> -> vector<8x96xf32>
    %c0_9 = arith.constant 0 : index
    %c256 = arith.constant 256 : index
    %10 = vector.load %arg12[%c0_9, %c256] : memref<1x2944xf32, #tpu.memory_space<vmem>>, vector<1x96xf32>
    %11 = vector.broadcast %10 : vector<1x96xf32> to vector<8x96xf32>
    %12 = arith.addf %9, %11 : vector<8x96xf32>
    %cst_10 = arith.constant 0.000000e+00 : f32
    %13 = vector.broadcast %cst_10 : f32 to vector<8x96xf32>
    %14 = arith.maximumf %12, %13 : vector<8x96xf32>
    %c0_11 = arith.constant 0 : index
    %c0_12 = arith.constant 0 : index
    %15 = vector.load %arg4[%c0_11, %c0_12] : memref<96x87xf32, #tpu.memory_space<vmem>>, vector<96x87xf32>
    %cst_13 = arith.constant dense<0.000000e+00> : vector<8x87xf32>
    %16 = tpu.matmul %14, %15, %cst_13 {dimension_numbers = #tpu.dot_dimension_numbers<[1], [0], [0], [1], [0, 0, 1, 1], [], []>} : vector<8x96xf32>, vector<96x87xf32>, vector<8x87xf32> -> vector<8x87xf32>
    %c0_14 = arith.constant 0 : index
    %c384 = arith.constant 384 : index
    %17 = vector.load %arg12[%c0_14, %c384] : memref<1x2944xf32, #tpu.memory_space<vmem>>, vector<1x87xf32>
    %18 = vector.broadcast %17 : vector<1x87xf32> to vector<8x87xf32>
    %19 = arith.addf %16, %18 : vector<8x87xf32>
    %cst_15 = arith.constant 0.000000e+00 : f32
    %20 = vector.broadcast %cst_15 : f32 to vector<8x87xf32>
    %21 = arith.maximumf %19, %20 : vector<8x87xf32>
    %c0_16 = arith.constant 0 : index
    %c0_17 = arith.constant 0 : index
    %22 = vector.load %arg5[%c0_16, %c0_17] : memref<87x79xf32, #tpu.memory_space<vmem>>, vector<87x79xf32>
    %cst_18 = arith.constant dense<0.000000e+00> : vector<8x79xf32>
    %23 = tpu.matmul %21, %22, %cst_18 {dimension_numbers = #tpu.dot_dimension_numbers<[1], [0], [0], [1], [0, 0, 1, 1], [], []>} : vector<8x87xf32>, vector<87x79xf32>, vector<8x79xf32> -> vector<8x79xf32>
    %c0_19 = arith.constant 0 : index
    %c512 = arith.constant 512 : index
    %24 = vector.load %arg12[%c0_19, %c512] : memref<1x2944xf32, #tpu.memory_space<vmem>>, vector<1x79xf32>
    %25 = vector.broadcast %24 : vector<1x79xf32> to vector<8x79xf32>
    %26 = arith.addf %23, %25 : vector<8x79xf32>
    %cst_20 = arith.constant 0.000000e+00 : f32
    %27 = vector.broadcast %cst_20 : f32 to vector<8x79xf32>
    %28 = arith.maximumf %26, %27 : vector<8x79xf32>
    %c0_21 = arith.constant 0 : index
    %c0_22 = arith.constant 0 : index
    %29 = vector.load %arg6[%c0_21, %c0_22] : memref<79x72xf32, #tpu.memory_space<vmem>>, vector<79x72xf32>
    %cst_23 = arith.constant dense<0.000000e+00> : vector<8x72xf32>
    %30 = tpu.matmul %28, %29, %cst_23 {dimension_numbers = #tpu.dot_dimension_numbers<[1], [0], [0], [1], [0, 0, 1, 1], [], []>} : vector<8x79xf32>, vector<79x72xf32>, vector<8x72xf32> -> vector<8x72xf32>
    %c0_24 = arith.constant 0 : index
    %c640 = arith.constant 640 : index
    %31 = vector.load %arg12[%c0_24, %c640] : memref<1x2944xf32, #tpu.memory_space<vmem>>, vector<1x72xf32>
    %32 = vector.broadcast %31 : vector<1x72xf32> to vector<8x72xf32>
    %33 = arith.addf %30, %32 : vector<8x72xf32>
    %c0_25 = arith.constant 0 : index
    %c0_26 = arith.constant 0 : index
    %34 = vector.load %arg7[%c0_25, %c0_26] : memref<72x79xf32, #tpu.memory_space<vmem>>, vector<72x79xf32>
    %cst_27 = arith.constant dense<0.000000e+00> : vector<8x79xf32>
    %35 = tpu.matmul %33, %34, %cst_27 {dimension_numbers = #tpu.dot_dimension_numbers<[1], [0], [0], [1], [0, 0, 1, 1], [], []>} : vector<8x72xf32>, vector<72x79xf32>, vector<8x79xf32> -> vector<8x79xf32>
    %c0_28 = arith.constant 0 : index
    %c768 = arith.constant 768 : index
    %36 = vector.load %arg12[%c0_28, %c768] : memref<1x2944xf32, #tpu.memory_space<vmem>>, vector<1x79xf32>
    %37 = vector.broadcast %36 : vector<1x79xf32> to vector<8x79xf32>
    %38 = arith.addf %35, %37 : vector<8x79xf32>
    %cst_29 = arith.constant 0.000000e+00 : f32
    %39 = vector.broadcast %cst_29 : f32 to vector<8x79xf32>
    %40 = arith.maximumf %38, %39 : vector<8x79xf32>
    %c0_30 = arith.constant 0 : index
    %c0_31 = arith.constant 0 : index
    %41 = vector.load %arg8[%c0_30, %c0_31] : memref<79x87xf32, #tpu.memory_space<vmem>>, vector<79x87xf32>
    %cst_32 = arith.constant dense<0.000000e+00> : vector<8x87xf32>
    %42 = tpu.matmul %40, %41, %cst_32 {dimension_numbers = #tpu.dot_dimension_numbers<[1], [0], [0], [1], [0, 0, 1, 1], [], []>} : vector<8x79xf32>, vector<79x87xf32>, vector<8x87xf32> -> vector<8x87xf32>
    %c0_33 = arith.constant 0 : index
    %c896 = arith.constant 896 : index
    %43 = vector.load %arg12[%c0_33, %c896] : memref<1x2944xf32, #tpu.memory_space<vmem>>, vector<1x87xf32>
    %44 = vector.broadcast %43 : vector<1x87xf32> to vector<8x87xf32>
    %45 = arith.addf %42, %44 : vector<8x87xf32>
    %cst_34 = arith.constant 0.000000e+00 : f32
    %46 = vector.broadcast %cst_34 : f32 to vector<8x87xf32>
    %47 = arith.maximumf %45, %46 : vector<8x87xf32>
    %c0_35 = arith.constant 0 : index
    %c0_36 = arith.constant 0 : index
    %48 = vector.load %arg9[%c0_35, %c0_36] : memref<87x96xf32, #tpu.memory_space<vmem>>, vector<87x96xf32>
    %cst_37 = arith.constant dense<0.000000e+00> : vector<8x96xf32>
    %49 = tpu.matmul %47, %48, %cst_37 {dimension_numbers = #tpu.dot_dimension_numbers<[1], [0], [0], [1], [0, 0, 1, 1], [], []>} : vector<8x87xf32>, vector<87x96xf32>, vector<8x96xf32> -> vector<8x96xf32>
    %c0_38 = arith.constant 0 : index
    %c1024 = arith.constant 1024 : index
    %50 = vector.load %arg12[%c0_38, %c1024] : memref<1x2944xf32, #tpu.memory_space<vmem>>, vector<1x96xf32>
    %51 = vector.broadcast %50 : vector<1x96xf32> to vector<8x96xf32>
    %52 = arith.addf %49, %51 : vector<8x96xf32>
    %c0_39 = arith.constant 0 : index
    %c0_40 = arith.constant 0 : index
    %53 = vector.load %arg10[%c0_39, %c0_40] : memref<96x192xf32, #tpu.memory_space<vmem>>, vector<96x192xf32>
    %cst_41 = arith.constant dense<0.000000e+00> : vector<8x192xf32>
    %54 = tpu.matmul %52, %53, %cst_41 {dimension_numbers = #tpu.dot_dimension_numbers<[1], [0], [0], [1], [0, 0, 1, 1], [], []>} : vector<8x96xf32>, vector<96x192xf32>, vector<8x192xf32> -> vector<8x192xf32>
    %c0_42 = arith.constant 0 : index
    %c1152 = arith.constant 1152 : index
    %55 = vector.load %arg12[%c0_42, %c1152] : memref<1x2944xf32, #tpu.memory_space<vmem>>, vector<1x192xf32>
    %56 = vector.broadcast %55 : vector<1x192xf32> to vector<8x192xf32>
    %57 = arith.addf %54, %56 : vector<8x192xf32>
    %cst_43 = arith.constant 0.000000e+00 : f32
    %58 = vector.broadcast %cst_43 : f32 to vector<8x192xf32>
    %59 = arith.maximumf %57, %58 : vector<8x192xf32>
    %c0_44 = arith.constant 0 : index
    %c0_45 = arith.constant 0 : index
    %60 = vector.load %arg11[%c0_44, %c0_45] : memref<192x1536xf32, #tpu.memory_space<vmem>>, vector<192x1536xf32>
    %cst_46 = arith.constant dense<0.000000e+00> : vector<8x1536xf32>
    %61 = tpu.matmul %59, %60, %cst_46 {dimension_numbers = #tpu.dot_dimension_numbers<[1], [0], [0], [1], [0, 0, 1, 1], [], []>} : vector<8x192xf32>, vector<192x1536xf32>, vector<8x1536xf32> -> vector<8x1536xf32>
    %c0_47 = arith.constant 0 : index
    %c1408 = arith.constant 1408 : index
    %62 = vector.load %arg12[%c0_47, %c1408] : memref<1x2944xf32, #tpu.memory_space<vmem>>, vector<1x1536xf32>
    %63 = vector.broadcast %62 : vector<1x1536xf32> to vector<8x1536xf32>
    %64 = arith.addf %61, %63 : vector<8x1536xf32>
    %c0_48 = arith.constant 0 : index
    %c0_49 = arith.constant 0 : index
    %65 = vector.load %arg13[%c0_48, %c0_49] : memref<8x1536xf32, #tpu.memory_space<vmem>>, vector<8x1536xf32>
    tpu.vector_store %arg13[%c0_48, %c0_49], %64 {strides = array<i32>} : memref<8x1536xf32, #tpu.memory_space<vmem>>, vector<8x1536xf32>,
    return
  }
  func.func @transform_0(%arg0: i32) -> (i32, i32) {
    %c0_i32 = arith.constant 0 : i32
    %c0_i32_0 = arith.constant 0 : i32
    return %arg0, %c0_i32 : i32, i32
  }
  func.func @transform_1(%arg0: i32) -> (i32, i32) {
    %c0_i32 = arith.constant 0 : i32
    %c0_i32_0 = arith.constant 0 : i32
    %c0_i32_1 = arith.constant 0 : i32
    return %c0_i32, %c0_i32_0 : i32, i32
  }
  func.func @transform_2(%arg0: i32) -> (i32, i32) {
    %c0_i32 = arith.constant 0 : i32
    %c0_i32_0 = arith.constant 0 : i32
    %c0_i32_1 = arith.constant 0 : i32
    return %c0_i32, %c0_i32_0 : i32, i32
  }
  func.func @transform_3(%arg0: i32) -> (i32, i32) {
    %c0_i32 = arith.constant 0 : i32
    %c0_i32_0 = arith.constant 0 : i32
    %c0_i32_1 = arith.constant 0 : i32
    return %c0_i32, %c0_i32_0 : i32, i32
  }
  func.func @transform_4(%arg0: i32) -> (i32, i32) {
    %c0_i32 = arith.constant 0 : i32
    %c0_i32_0 = arith.constant 0 : i32
    %c0_i32_1 = arith.constant 0 : i32
    return %c0_i32, %c0_i32_0 : i32, i32
  }
  func.func @transform_5(%arg0: i32) -> (i32, i32) {
    %c0_i32 = arith.constant 0 : i32
    %c0_i32_0 = arith.constant 0 : i32
    %c0_i32_1 = arith.constant 0 : i32
    return %c0_i32, %c0_i32_0 : i32, i32
  }
  func.func @transform_6(%arg0: i32) -> (i32, i32) {
    %c0_i32 = arith.constant 0 : i32
    %c0_i32_0 = arith.constant 0 : i32
    %c0_i32_1 = arith.constant 0 : i32
    return %c0_i32, %c0_i32_0 : i32, i32
  }
  func.func @transform_7(%arg0: i32) -> (i32, i32) {
    %c0_i32 = arith.constant 0 : i32
    %c0_i32_0 = arith.constant 0 : i32
    %c0_i32_1 = arith.constant 0 : i32
    return %c0_i32, %c0_i32_0 : i32, i32
  }
  func.func @transform_8(%arg0: i32) -> (i32, i32) {
    %c0_i32 = arith.constant 0 : i32
    %c0_i32_0 = arith.constant 0 : i32
    %c0_i32_1 = arith.constant 0 : i32
    return %c0_i32, %c0_i32_0 : i32, i32
  }
  func.func @transform_9(%arg0: i32) -> (i32, i32) {
    %c0_i32 = arith.constant 0 : i32
    %c0_i32_0 = arith.constant 0 : i32
    %c0_i32_1 = arith.constant 0 : i32
    return %c0_i32, %c0_i32_0 : i32, i32
  }
  func.func @transform_10(%arg0: i32) -> (i32, i32) {
    %c0_i32 = arith.constant 0 : i32
    %c0_i32_0 = arith.constant 0 : i32
    %c0_i32_1 = arith.constant 0 : i32
    return %c0_i32, %c0_i32_0 : i32, i32
  }
  func.func @transform_11(%arg0: i32) -> (i32, i32) {
    %c0_i32 = arith.constant 0 : i32
    %c0_i32_0 = arith.constant 0 : i32
    %c0_i32_1 = arith.constant 0 : i32
    return %c0_i32, %c0_i32_0 : i32, i32
  }
  func.func @transform_12(%arg0: i32) -> (i32, i32) {
    %c0_i32 = arith.constant 0 : i32
    %c0_i32_0 = arith.constant 0 : i32
    return %arg0, %c0_i32 : i32, i32
  }
}

</mosaic_0001>

<llo_original>
// kernel: tpu_custom_call.1
$region0: #{tpu_custom_call.1}
  #allocation0 [shape = 'u32[]', space=smem, size = 0x4, offset = 0x4, fixed_abs, tag = 'smem constant byte address 0x4 - core index']
  #allocation1 [shape = 'u32[144,128]{1,0:T(1,128)}', space=vmem, size = 0x12000, scoped, tag = 'internal scratch']
  %s0 = inlined_call_operand.vmem [shape: f32[16,1536], index: 0, kind: input, shape index: {}]
  %s1 = inlined_call_operand.vmem [shape: f32[1536,192], index: 1, kind: input, shape index: {}]
  %s2 = inlined_call_operand.vmem [shape: f32[192,96], index: 2, kind: input, shape index: {}]
  %s3 = inlined_call_operand.vmem [shape: f32[96,87], index: 3, kind: input, shape index: {}]
  %s4 = inlined_call_operand.vmem [shape: f32[87,79], index: 4, kind: input, shape index: {}]
  %s5 = inlined_call_operand.vmem [shape: f32[79,72], index: 5, kind: input, shape index: {}]
  %s6 = inlined_call_operand.vmem [shape: f32[72,79], index: 6, kind: input, shape index: {}]
  %s7 = inlined_call_operand.vmem [shape: f32[79,87], index: 7, kind: input, shape index: {}]
  %s8 = inlined_call_operand.vmem [shape: f32[87,96], index: 8, kind: input, shape index: {}]
  %s9 = inlined_call_operand.vmem [shape: f32[96,192], index: 9, kind: input, shape index: {}]
  %s10 = inlined_call_operand.vmem [shape: f32[192,1536], index: 10, kind: input, shape index: {}]
  %s11 = inlined_call_operand.vmem [shape: f32[1,2944], index: 11, kind: input, shape index: {}]
  %s12 = inlined_call_operand.hbm [shape: f32[16,1536], index: 12, kind: output, shape index: {}]
  %s13 = sld [smem:[#allocation0]]
  $region81: #{tpu_custom_call.1} parent=0
    _
  %s15 = ssub.s32 1, %s13
  %s16 = scalar_select 0, %s15, %s13
  $region1: #{tpu_custom_call.1} parent=0
    #allocation2 [shape = 'u8[98304]{0}', space=vmem, size = 0x18000, scoped, tag = 'output window, operand 0']
    #allocation3 [shape = 's32[2]{0}', space=sflag, size = 0x8, scoped, tag = 'scoped memory for tpu_custom_call.1']
    %17 = vsyncpa [#allocation3], 0
    %s18 = scalar_lea.sflag [#allocation3], 1
    %19 = vsyncpa %s18, 0
    loop: start=0, step=1, limit=4
    $region2: #{tpu_custom_call.1} parent=1 // loop_pre_header
      _
    $region3: #{tpu_custom_call.1} parent=1 // loop_header
      %s21 = sphi 0, %s25
      %p22 = scmp.ge.s32.totalorder %s21, 4
      %s31 = sphi 0, %s33
      %s34 = sphi 0, %s31
      %s35 = sphi 0, %s34
      %s51 = sphi 0, %s35
      %s55 = sphi 0, %s55
      %s57 = sphi 0, %s55
      %s58 = sphi 0, %s57
      %s72 = sphi 0, %s58
      %s76 = sphi 0, %s76
      %s78 = sphi 0, %s76
      %s79 = sphi 0, %s78
      %s93 = sphi 0, %s79
      %s97 = sphi 0, %s97
      %s99 = sphi 0, %s97
      %s100 = sphi 0, %s99
      %s114 = sphi 0, %s100
      %s118 = sphi 0, %s118
      %s120 = sphi 0, %s118
      %s121 = sphi 0, %s120
      %s135 = sphi 0, %s121
      %s139 = sphi 0, %s139
      %s141 = sphi 0, %s139
      %s142 = sphi 0, %s141
      %s156 = sphi 0, %s142
      %s160 = sphi 0, %s160
      %s162 = sphi 0, %s160
      %s163 = sphi 0, %s162
      %s177 = sphi 0, %s163
      %s181 = sphi 0, %s181
      %s183 = sphi 0, %s181
      %s184 = sphi 0, %s183
      %s198 = sphi 0, %s184
      %s202 = sphi 0, %s202
      %s204 = sphi 0, %s202
      %s205 = sphi 0, %s204
      %s219 = sphi 0, %s205
      %s223 = sphi 0, %s223
      %s225 = sphi 0, %s223
      %s226 = sphi 0, %s225
      %s240 = sphi 0, %s226
      %s244 = sphi 0, %s244
      %s246 = sphi 0, %s244
      %s247 = sphi 0, %s246
      %s261 = sphi 0, %s247
      %s265 = sphi 0, %s265
      %s267 = sphi 0, %s265
      %s268 = sphi 0, %s267
      %s282 = sphi 0, %s268
      %s288 = sphi 0, %s290
      %s291 = sphi 0, %s288
      %s292 = sphi 0, %s291
      %s308 = sphi 0, %s292
    $region4: #{tpu_custom_call.1} parent=1 // loop_header_branch
      %24 = sbr.rel (%p22) target = $region8
    $region5: #{tpu_custom_call.1} parent=1 // loop_body
      %s26 = ssub.s32 %s21, 1
      %s27 = ssub.s32 %s21, 2
      %s28 = sadd.s32 %s21, 1
      %s29 = ssub.s32 %s21, %s28
      %p30 = scmp.eq.s32.totalorder %s29, 0
      %s32 = sadd.s32 %s31, 1
      %s33 = scalar_select %p30, %s31, %s32
      %p36 = pneg %p30
      %p37 = scmp.eq.s32.totalorder %s21, 1
      %p38 = por %p36, %p37
      %p39 = scmp.ne.s32.totalorder %s31, %s34
      %p40 = scmp.eq.s32.totalorder %s21, 0
      %p41 = por %p39, %p40
      %p42 = scmp.ne.s32.totalorder %s31, %s34
      %p43 = scmp.eq.s32.totalorder %s26, 1
      %p44 = por %p42, %p43
      %p45 = scmp.ne.s32.totalorder %s34, %s35
      %p46 = scmp.eq.s32.totalorder %s26, 0
      %p47 = por %p45, %p46
      %p48 = scmp.ne.s32.totalorder %s34, %s35
      %p49 = scmp.eq.s32.totalorder %s27, 1
      %p50 = por %p48, %p49
      %p52 = scmp.ne.s32.totalorder %s35, %s51
      %p53 = scmp.eq.s32.totalorder %s27, 0
      %p54 = por %p52, %p53
      %s56 = sadd.s32 %s55, 1
      %p59 = scmp.eq.s32.totalorder %s21, 1
      %p60 = scmp.ne.s32.totalorder %s55, %s57
      %p61 = scmp.eq.s32.totalorder %s21, 0
      %p62 = por %p60, %p61
      %p63 = scmp.ne.s32.totalorder %s55, %s57
      %p64 = scmp.eq.s32.totalorder %s26, 1
      %p65 = por %p63, %p64
      %p66 = scmp.ne.s32.totalorder %s57, %s58
      %p67 = scmp.eq.s32.totalorder %s26, 0
      %p68 = por %p66, %p67
      %p69 = scmp.ne.s32.totalorder %s57, %s58
      %p70 = scmp.eq.s32.totalorder %s27, 1
      %p71 = por %p69, %p70
      %p73 = scmp.ne.s32.totalorder %s58, %s72
      %p74 = scmp.eq.s32.totalorder %s27, 0
      %p75 = por %p73, %p74
      %s77 = sadd.s32 %s76, 1
      %p80 = scmp.eq.s32.totalorder %s21, 1
      %p81 = scmp.ne.s32.totalorder %s76, %s78
      %p82 = scmp.eq.s32.totalorder %s21, 0
      %p83 = por %p81, %p82
      %p84 = scmp.ne.s32.totalorder %s76, %s78
      %p85 = scmp.eq.s32.totalorder %s26, 1
      %p86 = por %p84, %p85
      %p87 = scmp.ne.s32.totalorder %s78, %s79
      %p88 = scmp.eq.s32.totalorder %s26, 0
      %p89 = por %p87, %p88
      %p90 = scmp.ne.s32.totalorder %s78, %s79
      %p91 = scmp.eq.s32.totalorder %s27, 1
      %p92 = por %p90, %p91
      %p94 = scmp.ne.s32.totalorder %s79, %s93
      %p95 = scmp.eq.s32.totalorder %s27, 0
      %p96 = por %p94, %p95
      %s98 = sadd.s32 %s97, 1
      %p101 = scmp.eq.s32.totalorder %s21, 1
      %p102 = scmp.ne.s32.totalorder %s97, %s99
      %p103 = scmp.eq.s32.totalorder %s21, 0
      %p104 = por %p102, %p103
      %p105 = scmp.ne.s32.totalorder %s97, %s99
      %p106 = scmp.eq.s32.totalorder %s26, 1
      %p107 = por %p105, %p106
      %p108 = scmp.ne.s32.totalorder %s99, %s100
      %p109 = scmp.eq.s32.totalorder %s26, 0
      %p110 = por %p108, %p109
      %p111 = scmp.ne.s32.totalorder %s99, %s100
      %p112 = scmp.eq.s32.totalorder %s27, 1
      %p113 = por %p111, %p112
      %p115 = scmp.ne.s32.totalorder %s100, %s114
      %p116 = scmp.eq.s32.totalorder %s27, 0
      %p117 = por %p115, %p116
      %s119 = sadd.s32 %s118, 1
      %p122 = scmp.eq.s32.totalorder %s21, 1
      %p123 = scmp.ne.s32.totalorder %s118, %s120
      %p124 = scmp.eq.s32.totalorder %s21, 0
      %p125 = por %p123, %p124
      %p126 = scmp.ne.s32.totalorder %s118, %s120
      %p127 = scmp.eq.s32.totalorder %s26, 1
      %p128 = por %p126, %p127
      %p129 = scmp.ne.s32.totalorder %s120, %s121
      %p130 = scmp.eq.s32.totalorder %s26, 0
      %p131 = por %p129, %p130
      %p132 = scmp.ne.s32.totalorder %s120, %s121
      %p133 = scmp.eq.s32.totalorder %s27, 1
      %p134 = por %p132, %p133
      %p136 = scmp.ne.s32.totalorder %s121, %s135
      %p137 = scmp.eq.s32.totalorder %s27, 0
      %p138 = por %p136, %p137
      %s140 = sadd.s32 %s139, 1
      %p143 = scmp.eq.s32.totalorder %s21, 1
      %p144 = scmp.ne.s32.totalorder %s139, %s141
      %p145 = scmp.eq.s32.totalorder %s21, 0
      %p146 = por %p144, %p145
      %p147 = scmp.ne.s32.totalorder %s139, %s141
      %p148 = scmp.eq.s32.totalorder %s26, 1
      %p149 = por %p147, %p148
      %p150 = scmp.ne.s32.totalorder %s141, %s142
      %p151 = scmp.eq.s32.totalorder %s26, 0
      %p152 = por %p150, %p151
      %p153 = scmp.ne.s32.totalorder %s141, %s142
      %p154 = scmp.eq.s32.totalorder %s27, 1
      %p155 = por %p153, %p154
      %p157 = scmp.ne.s32.totalorder %s142, %s156
      %p158 = scmp.eq.s32.totalorder %s27, 0
      %p159 = por %p157, %p158
      %s161 = sadd.s32 %s160, 1
      %p164 = scmp.eq.s32.totalorder %s21, 1
      %p165 = scmp.ne.s32.totalorder %s160, %s162
      %p166 = scmp.eq.s32.totalorder %s21, 0
      %p167 = por %p165, %p166
      %p168 = scmp.ne.s32.totalorder %s160, %s162
      %p169 = scmp.eq.s32.totalorder %s26, 1
      %p170 = por %p168, %p169
      %p171 = scmp.ne.s32.totalorder %s162, %s163
      %p172 = scmp.eq.s32.totalorder %s26, 0
      %p173 = por %p171, %p172
      %p174 = scmp.ne.s32.totalorder %s162, %s163
      %p175 = scmp.eq.s32.totalorder %s27, 1
      %p176 = por %p174, %p175
      %p178 = scmp.ne.s32.totalorder %s163, %s177
      %p179 = scmp.eq.s32.totalorder %s27, 0
      %p180 = por %p178, %p179
      %s182 = sadd.s32 %s181, 1
      %p185 = scmp.eq.s32.totalorder %s21, 1
      %p186 = scmp.ne.s32.totalorder %s181, %s183
      %p187 = scmp.eq.s32.totalorder %s21, 0
      %p188 = por %p186, %p187
      %p189 = scmp.ne.s32.totalorder %s181, %s183
      %p190 = scmp.eq.s32.totalorder %s26, 1
      %p191 = por %p189, %p190
      %p192 = scmp.ne.s32.totalorder %s183, %s184
      %p193 = scmp.eq.s32.totalorder %s26, 0
      %p194 = por %p192, %p193
      %p195 = scmp.ne.s32.totalorder %s183, %s184
      %p196 = scmp.eq.s32.totalorder %s27, 1
      %p197 = por %p195, %p196
      %p199 = scmp.ne.s32.totalorder %s184, %s198
      %p200 = scmp.eq.s32.totalorder %s27, 0
      %p201 = por %p199, %p200
      %s203 = sadd.s32 %s202, 1
      %p206 = scmp.eq.s32.totalorder %s21, 1
      %p207 = scmp.ne.s32.totalorder %s202, %s204
      %p208 = scmp.eq.s32.totalorder %s21, 0
      %p209 = por %p207, %p208
      %p210 = scmp.ne.s32.totalorder %s202, %s204
      %p211 = scmp.eq.s32.totalorder %s26, 1
      %p212 = por %p210, %p211
      %p213 = scmp.ne.s32.totalorder %s204, %s205
      %p214 = scmp.eq.s32.totalorder %s26, 0
      %p215 = por %p213, %p214
      %p216 = scmp.ne.s32.totalorder %s204, %s205
      %p217 = scmp.eq.s32.totalorder %s27, 1
      %p218 = por %p216, %p217
      %p220 = scmp.ne.s32.totalorder %s205, %s219
      %p221 = scmp.eq.s32.totalorder %s27, 0
      %p222 = por %p220, %p221
      %s224 = sadd.s32 %s223, 1
      %p227 = scmp.eq.s32.totalorder %s21, 1
      %p228 = scmp.ne.s32.totalorder %s223, %s225
      %p229 = scmp.eq.s32.totalorder %s21, 0
      %p230 = por %p228, %p229
      %p231 = scmp.ne.s32.totalorder %s223, %s225
      %p232 = scmp.eq.s32.totalorder %s26, 1
      %p233 = por %p231, %p232
      %p234 = scmp.ne.s32.totalorder %s225, %s226
      %p235 = scmp.eq.s32.totalorder %s26, 0
      %p236 = por %p234, %p235
      %p237 = scmp.ne.s32.totalorder %s225, %s226
      %p238 = scmp.eq.s32.totalorder %s27, 1
      %p239 = por %p237, %p238
      %p241 = scmp.ne.s32.totalorder %s226, %s240
      %p242 = scmp.eq.s32.totalorder %s27, 0
      %p243 = por %p241, %p242
      %s245 = sadd.s32 %s244, 1
      %p248 = scmp.eq.s32.totalorder %s21, 1
      %p249 = scmp.ne.s32.totalorder %s244, %s246
      %p250 = scmp.eq.s32.totalorder %s21, 0
      %p251 = por %p249, %p250
      %p252 = scmp.ne.s32.totalorder %s244, %s246
      %p253 = scmp.eq.s32.totalorder %s26, 1
      %p254 = por %p252, %p253
      %p255 = scmp.ne.s32.totalorder %s246, %s247
      %p256 = scmp.eq.s32.totalorder %s26, 0
      %p257 = por %p255, %p256
      %p258 = scmp.ne.s32.totalorder %s246, %s247
      %p259 = scmp.eq.s32.totalorder %s27, 1
      %p260 = por %p258, %p259
      %p262 = scmp.ne.s32.totalorder %s247, %s261
      %p263 = scmp.eq.s32.totalorder %s27, 0
      %p264 = por %p262, %p263
      %s266 = sadd.s32 %s265, 1
      %p269 = scmp.eq.s32.totalorder %s21, 1
      %p270 = scmp.ne.s32.totalorder %s265, %s267
      %p271 = scmp.eq.s32.totalorder %s21, 0
      %p272 = por %p270, %p271
      %p273 = scmp.ne.s32.totalorder %s265, %s267
      %p274 = scmp.eq.s32.totalorder %s26, 1
      %p275 = por %p273, %p274
      %p276 = scmp.ne.s32.totalorder %s267, %s268
      %p277 = scmp.eq.s32.totalorder %s26, 0
      %p278 = por %p276, %p277
      %p279 = scmp.ne.s32.totalorder %s267, %s268
      %p280 = scmp.eq.s32.totalorder %s27, 1
      %p281 = por %p279, %p280
      %p283 = scmp.ne.s32.totalorder %s268, %s282
      %p284 = scmp.eq.s32.totalorder %s27, 0
      %p285 = por %p283, %p284
      %s286 = ssub.s32 %s21, %s28
      %p287 = scmp.eq.s32.totalorder %s286, 0
      %s289 = sadd.s32 %s288, 1
      %s290 = scalar_select %p287, %s288, %s289
      %p293 = pneg %p287
      %p294 = scmp.eq.s32.totalorder %s21, 1
      %p295 = por %p293, %p294
      %p296 = scmp.ne.s32.totalorder %s288, %s291
      %p297 = scmp.eq.s32.totalorder %s21, 0
      %p298 = por %p296, %p297
      %p299 = scmp.ne.s32.totalorder %s288, %s291
      %p300 = scmp.eq.s32.totalorder %s26, 1
      %p301 = por %p299, %p300
      %p302 = scmp.ne.s32.totalorder %s291, %s292
      %p303 = scmp.eq.s32.totalorder %s26, 0
      %p304 = por %p302, %p303
      %p305 = scmp.ne.s32.totalorder %s291, %s292
      %p306 = scmp.eq.s32.totalorder %s27, 1
      %p307 = por %p305, %p306
      %p309 = scmp.ne.s32.totalorder %s292, %s308
      %p310 = scmp.eq.s32.totalorder %s27, 0
      %p311 = por %p309, %p310
      %p312 = scmp.le.s32.totalorder 1, %s21
      %p313 = scmp.lt.s32.totalorder %s21, 3
      %p314 = pnand %p312, %p313
      %p315 = pneg %p314
      // Predicated region
      $region9: #{tpu_custom_call.1} parent=5 // pred_check
        _
      $region10: #{tpu_custom_call.1} parent=5 // pred_check_branch
        %317 = sbr.rel (%p314) target = $region12
      $region11: #{tpu_custom_call.1} parent=5 // pred_region
        %s318 = ssub.s32 %s21, 1
        // Predicated region
        $region13: #{tpu_custom_call.1} parent=11 // pred_check
          %p319 = pneg %p68
        $region14: #{tpu_custom_call.1} parent=11 // pred_check_branch
          %321 = sbr.rel (%p319) target = $region16
        $region15: #{tpu_custom_call.1} parent=11 // pred_region
          _
        $region16: #{tpu_custom_call.1} parent=11 // pred_fallthru
          _
        // Predicated region
        $region17: #{tpu_custom_call.1} parent=11 // pred_check
          %p322 = pneg %p89
        $region18: #{tpu_custom_call.1} parent=11 // pred_check_branch
          %324 = sbr.rel (%p322) target = $region20
        $region19: #{tpu_custom_call.1} parent=11 // pred_region
          _
        $region20: #{tpu_custom_call.1} parent=11 // pred_fallthru
          _
        // Predicated region
        $region21: #{tpu_custom_call.1} parent=11 // pred_check
          %p325 = pneg %p110
        $region22: #{tpu_custom_call.1} parent=11 // pred_check_branch
          %327 = sbr.rel (%p325) target = $region24
        $region23: #{tpu_custom_call.1} parent=11 // pred_region
          _
        $region24: #{tpu_custom_call.1} parent=11 // pred_fallthru
          _
        // Predicated region
        $region25: #{tpu_custom_call.1} parent=11 // pred_check
          %p328 = pneg %p131
        $region26: #{tpu_custom_call.1} parent=11 // pred_check_branch
          %330 = sbr.rel (%p328) target = $region28
        $region27: #{tpu_custom_call.1} parent=11 // pred_region
          _
        $region28: #{tpu_custom_call.1} parent=11 // pred_fallthru
          _
        // Predicated region
        $region29: #{tpu_custom_call.1} parent=11 // pred_check
          %p331 = pneg %p152
        $region30: #{tpu_custom_call.1} parent=11 // pred_check_branch
          %333 = sbr.rel (%p331) target = $region32
        $region31: #{tpu_custom_call.1} parent=11 // pred_region
          _
        $region32: #{tpu_custom_call.1} parent=11 // pred_fallthru
          _
        // Predicated region
        $region33: #{tpu_custom_call.1} parent=11 // pred_check
          %p334 = pneg %p173
        $region34: #{tpu_custom_call.1} parent=11 // pred_check_branch
          %336 = sbr.rel (%p334) target = $region36
        $region35: #{tpu_custom_call.1} parent=11 // pred_region
          _
        $region36: #{tpu_custom_call.1} parent=11 // pred_fallthru
          _
        // Predicated region
        $region37: #{tpu_custom_call.1} parent=11 // pred_check
          %p337 = pneg %p194
        $region38: #{tpu_custom_call.1} parent=11 // pred_check_branch
          %339 = sbr.rel (%p337) target = $region40
        $region39: #{tpu_custom_call.1} parent=11 // pred_region
          _
        $region40: #{tpu_custom_call.1} parent=11 // pred_fallthru
          _
        // Predicated region
        $region41: #{tpu_custom_call.1} parent=11 // pred_check
          %p340 = pneg %p215
        $region42: #{tpu_custom_call.1} parent=11 // pred_check_branch
          %342 = sbr.rel (%p340) target = $region44
        $region43: #{tpu_custom_call.1} parent=11 // pred_region
          _
        $region44: #{tpu_custom_call.1} parent=11 // pred_fallthru
          _
        // Predicated region
        $region45: #{tpu_custom_call.1} parent=11 // pred_check
          %p343 = pneg %p236
        $region46: #{tpu_custom_call.1} parent=11 // pred_check_branch
          %345 = sbr.rel (%p343) target = $region48
        $region47: #{tpu_custom_call.1} parent=11 // pred_region
          _
        $region48: #{tpu_custom_call.1} parent=11 // pred_fallthru
          _
        // Predicated region
        $region49: #{tpu_custom_call.1} parent=11 // pred_check
          %p346 = pneg %p257
        $region50: #{tpu_custom_call.1} parent=11 // pred_check_branch
          %348 = sbr.rel (%p346) target = $region52
        $region51: #{tpu_custom_call.1} parent=11 // pred_region
          _
        $region52: #{tpu_custom_call.1} parent=11 // pred_fallthru
          _
        // Predicated region
        $region53: #{tpu_custom_call.1} parent=11 // pred_check
          %p349 = pneg %p278
        $region54: #{tpu_custom_call.1} parent=11 // pred_check_branch
          %351 = sbr.rel (%p349) target = $region56
        $region55: #{tpu_custom_call.1} parent=11 // pred_region
          _
        $region56: #{tpu_custom_call.1} parent=11 // pred_fallthru
          _
      $region12: #{tpu_custom_call.1} parent=5 // pred_fallthru
        _
      %p352 = scmp.lt.s32.totalorder %s21, 2
      // Predicated region
      $region57: #{tpu_custom_call.1} parent=5 // pred_check
        %p353 = pneg %p352
      $region58: #{tpu_custom_call.1} parent=5 // pred_check_branch
        %355 = sbr.rel (%p353) target = $region60
      $region59: #{tpu_custom_call.1} parent=5 // pred_region
        // Predicated region
        $region61: #{tpu_custom_call.1} parent=59 // pred_check
          %p356 = pneg %p41
        $region62: #{tpu_custom_call.1} parent=59 // pred_check_branch
          %358 = sbr.rel (%p356) target = $region64
        $region63: #{tpu_custom_call.1} parent=59 // pred_region
          %p359 = scmp.lt.s32.totalorder %s21, 1
          %s360 = scalar_select %p359, %s21, 1
          %s361 = smul.addr %s360, 12
          %s362 = smul.addr %s361, 8
          %s363 = scalar_lea.vmem %s0, %s362
        $region64: #{tpu_custom_call.1} parent=59 // pred_fallthru
          _
      $region60: #{tpu_custom_call.1} parent=5 // pred_fallthru
        _
      %p364 = scmp.le.s32.totalorder 1, %s21
      %p365 = scmp.lt.s32.totalorder %s21, 3
      %p366 = pnand %p364, %p365
      %p367 = pneg %p366
      // Predicated region
      $region65: #{tpu_custom_call.1} parent=5 // pred_check
        _
      $region66: #{tpu_custom_call.1} parent=5 // pred_check_branch
        %369 = sbr.rel (%p366) target = $region68
      $region67: #{tpu_custom_call.1} parent=5 // pred_region
        %s370 = ssub.s32 %s21, 1
        %p371 = scmp.lt.s32.totalorder %s26, 1
        %s372 = scalar_select %p371, %s26, 1
        %s373 = smul.addr %s372, 12
        %s374 = smul.addr %s373, 8
        %s375 = scalar_lea.vmem %s0, %s374
        %p376 = pneg %p47
        %p377 = pneg %p44
        %p378 = pneg %p68
        %p379 = pneg %p65
        %p380 = pneg %p89
        %p381 = pneg %p86
        %p382 = pneg %p110
        %p383 = pneg %p107
        %p384 = pneg %p131
        %p385 = pneg %p128
        %p386 = pneg %p152
        %p387 = pneg %p149
        %p388 = pneg %p173
        %p389 = pneg %p170
        %p390 = pneg %p194
        %p391 = pneg %p191
        %p392 = pneg %p215
        %p393 = pneg %p212
        %p394 = pneg %p236
        %p395 = pneg %p233
        %p396 = pneg %p257
        %p397 = pneg %p254
        %p398 = pneg %p278
        %p399 = pneg %p275
        %p400 = pneg %p304
        %p401 = pneg %p301
        %s402 = sand.u32 %s291, 1
        %s403 = scalar_lea.sflag [#allocation3], %s402
        %s404 = sand.u32 %s291, 1
        %s405 = smul.addr %s404, 96
        %s406 = scalar_lea.vmem [#allocation2], %s405
        %p407 = scmp.lt.s32.totalorder %s26, 1
        %s408 = scalar_select %p407, %s26, 1
        %s409 = smul.addr %s408, 12
        %s410 = smul.addr %s409, 8
        %s411 = scalar_lea.vmem %s0, %s410
        %v412 = vld [vmem:[%s411] sm:$0xff]
        %v413 = vld [vmem:[%s411 + $0x8] sm:$0xff]
        %v414 = vld [vmem:[%s411 + $0x10] sm:$0xff]
        %v415 = vld [vmem:[%s411 + $0x18] sm:$0xff]
        %v416 = vld [vmem:[%s411 + $0x20] sm:$0xff]
        %v417 = vld [vmem:[%s411 + $0x28] sm:$0xff]
        %v418 = vld [vmem:[%s411 + $0x30] sm:$0xff]
        %v419 = vld [vmem:[%s411 + $0x38] sm:$0xff]
        %v420 = vld [vmem:[%s411 + $0x40] sm:$0xff]
        %v421 = vld [vmem:[%s411 + $0x48] sm:$0xff]
        %v422 = vld [vmem:[%s411 + $0x50] sm:$0xff]
        %v423 = vld [vmem:[%s411 + $0x58] sm:$0xff]
        %v424 = vld [vmem:[%s1] sm:$0xff]
        %v425 = vld [vmem:[%s1 + $0x8] sm:$0xff]
        %v426 = vld [vmem:[%s1 + $0x10] sm:$0xff]
        %v427 = vld [vmem:[%s1 + $0x18] sm:$0xff]
        %v428 = vld [vmem:[%s1 + $0x20] sm:$0xff]
        %v429 = vld [vmem:[%s1 + $0x28] sm:$0xff]
        %v430 = vld [vmem:[%s1 + $0x30] sm:$0xff]
        %v431 = vld [vmem:[%s1 + $0x38] sm:$0xff]
        %v432 = vld [vmem:[%s1 + $0x40] sm:$0xff]
        %v433 = vld [vmem:[%s1 + $0x48] sm:$0xff]
        %v434 = vld [vmem:[%s1 + $0x50] sm:$0xff]
        %v435 = vld [vmem:[%s1 + $0x58] sm:$0xff]
        %v436 = vld [vmem:[%s1 + $0x60] sm:$0xff]
        %v437 = vld [vmem:[%s1 + $0x68] sm:$0xff]
        %v438 = vld [vmem:[%s1 + $0x70] sm:$0xff]
        %v439 = vld [vmem:[%s1 + $0x78] sm:$0xff]
        %v440 = vld [vmem:[%s1 + $0x80] sm:$0xff]
        %v441 = vld [vmem:[%s1 + $0x88] sm:$0xff]
        %v442 = vld [vmem:[%s1 + $0x90] sm:$0xff]
        %v443 = vld [vmem:[%s1 + $0x98] sm:$0xff]
        %v444 = vld [vmem:[%s1 + $0xa0] sm:$0xff]
        %v445 = vld [vmem:[%s1 + $0xa8] sm:$0xff]
        %v446 = vld [vmem:[%s1 + $0xb0] sm:$0xff]
        %v447 = vld [vmem:[%s1 + $0xb8] sm:$0xff]
        %v448 = vld [vmem:[%s1 + $0xc0] sm:$0xff]
        %v449 = vld [vmem:[%s1 + $0xc8] sm:$0xff]
        %v450 = vld [vmem:[%s1 + $0xd0] sm:$0xff]
        %v451 = vld [vmem:[%s1 + $0xd8] sm:$0xff]
        %v452 = vld [vmem:[%s1 + $0xe0] sm:$0xff]
        %v453 = vld [vmem:[%s1 + $0xe8] sm:$0xff]
        %v454 = vld [vmem:[%s1 + $0xf0] sm:$0xff]
        %v455 = vld [vmem:[%s1 + $0xf8] sm:$0xff]
        %v456 = vld [vmem:[%s1 + $0x100] sm:$0xff]
        %v457 = vld [vmem:[%s1 + $0x108] sm:$0xff]
        %v458 = vld [vmem:[%s1 + $0x110] sm:$0xff]
        %v459 = vld [vmem:[%s1 + $0x118] sm:$0xff]
        %v460 = vld [vmem:[%s1 + $0x120] sm:$0xff]
        %v461 = vld [vmem:[%s1 + $0x128] sm:$0xff]
        %v462 = vld [vmem:[%s1 + $0x130] sm:$0xff]
        %v463 = vld [vmem:[%s1 + $0x138] sm:$0xff]
        %v464 = vld [vmem:[%s1 + $0x140] sm:$0xff]
        %v465 = vld [vmem:[%s1 + $0x148] sm:$0xff]
        %v466 = vld [vmem:[%s1 + $0x150] sm:$0xff]
        %v467 = vld [vmem:[%s1 + $0x158] sm:$0xff]
        %v468 = vld [vmem:[%s1 + $0x160] sm:$0xff]
        %v469 = vld [vmem:[%s1 + $0x168] sm:$0xff]
        %v470 = vld [vmem:[%s1 + $0x170] sm:$0xff]
        %v471 = vld [vmem:[%s1 + $0x178] sm:$0xff]
        %v472 = vld [vmem:[%s1 + $0x180] sm:$0xff]
        %v473 = vld [vmem:[%s1 + $0x188] sm:$0xff]
        %v474 = vld [vmem:[%s1 + $0x190] sm:$0xff]
        %v475 = vld [vmem:[%s1 + $0x198] sm:$0xff]
        %v476 = vld [vmem:[%s1 + $0x1a0] sm:$0xff]
        %v477 = vld [vmem:[%s1 + $0x1a8] sm:$0xff]
        %v478 = vld [vmem:[%s1 + $0x1b0] sm:$0xff]
        %v479 = vld [vmem:[%s1 + $0x1b8] sm:$0xff]
        %v480 = vld [vmem:[%s1 + $0x1c0] sm:$0xff]
        %v481 = vld [vmem:[%s1 + $0x1c8] sm:$0xff]
        %v482 = vld [vmem:[%s1 + $0x1d0] sm:$0xff]
        %v483 = vld [vmem:[%s1 + $0x1d8] sm:$0xff]
        %v484 = vld [vmem:[%s1 + $0x1e0] sm:$0xff]
        %v485 = vld [vmem:[%s1 + $0x1e8] sm:$0xff]
        %v486 = vld [vmem:[%s1 + $0x1f0] sm:$0xff]
        %v487 = vld [vmem:[%s1 + $0x1f8] sm:$0xff]
        %v488 = vld [vmem:[%s1 + $0x200] sm:$0xff]
        %v489 = vld [vmem:[%s1 + $0x208] sm:$0xff]
        %v490 = vld [vmem:[%s1 + $0x210] sm:$0xff]
        %v491 = vld [vmem:[%s1 + $0x218] sm:$0xff]
        %v492 = vld [vmem:[%s1 + $0x220] sm:$0xff]
        %v493 = vld [vmem:[%s1 + $0x228] sm:$0xff]
        %v494 = vld [vmem:[%s1 + $0x230] sm:$0xff]
        %v495 = vld [vmem:[%s1 + $0x238] sm:$0xff]
        %v496 = vld [vmem:[%s1 + $0x240] sm:$0xff]
        %v497 = vld [vmem:[%s1 + $0x248] sm:$0xff]
        %v498 = vld [vmem:[%s1 + $0x250] sm:$0xff]
        %v499 = vld [vmem:[%s1 + $0x258] sm:$0xff]
        %v500 = vld [vmem:[%s1 + $0x260] sm:$0xff]
        %v501 = vld [vmem:[%s1 + $0x268] sm:$0xff]
        %v502 = vld [vmem:[%s1 + $0x270] sm:$0xff]
        %v503 = vld [vmem:[%s1 + $0x278] sm:$0xff]
        %v504 = vld [vmem:[%s1 + $0x280] sm:$0xff]
        %v505 = vld [vmem:[%s1 + $0x288] sm:$0xff]
        %v506 = vld [vmem:[%s1 + $0x290] sm:$0xff]
        %v507 = vld [vmem:[%s1 + $0x298] sm:$0xff]
        %v508 = vld [vmem:[%s1 + $0x2a0] sm:$0xff]
        %v509 = vld [vmem:[%s1 + $0x2a8] sm:$0xff]
        %v510 = vld [vmem:[%s1 + $0x2b0] sm:$0xff]
        %v511 = vld [vmem:[%s1 + $0x2b8] sm:$0xff]
        %v512 = vld [vmem:[%s1 + $0x2c0] sm:$0xff]
        %v513 = vld [vmem:[%s1 + $0x2c8] sm:$0xff]
        %v514 = vld [vmem:[%s1 + $0x2d0] sm:$0xff]
        %v515 = vld [vmem:[%s1 + $0x2d8] sm:$0xff]
        %v516 = vld [vmem:[%s1 + $0x2e0] sm:$0xff]
        %v517 = vld [vmem:[%s1 + $0x2e8] sm:$0xff]
        %v518 = vld [vmem:[%s1 + $0x2f0] sm:$0xff]
        %v519 = vld [vmem:[%s1 + $0x2f8] sm:$0xff]
        %v520 = vld [vmem:[%s1 + $0x300] sm:$0xff]
        %v521 = vld [vmem:[%s1 + $0x308] sm:$0xff]
        %v522 = vld [vmem:[%s1 + $0x310] sm:$0xff]
        %v523 = vld [vmem:[%s1 + $0x318] sm:$0xff]
        %v524 = vld [vmem:[%s1 + $0x320] sm:$0xff]
        %v525 = vld [vmem:[%s1 + $0x328] sm:$0xff]
        %v526 = vld [vmem:[%s1 + $0x330] sm:$0xff]
        %v527 = vld [vmem:[%s1 + $0x338] sm:$0xff]
        %v528 = vld [vmem:[%s1 + $0x340] sm:$0xff]
        %v529 = vld [vmem:[%s1 + $0x348] sm:$0xff]
        %v530 = vld [vmem:[%s1 + $0x350] sm:$0xff]
        %v531 = vld [vmem:[%s1 + $0x358] sm:$0xff]
        %v532 = vld [vmem:[%s1 + $0x360] sm:$0xff]
        %v533 = vld [vmem:[%s1 + $0x368] sm:$0xff]
        %v534 = vld [vmem:[%s1 + $0x370] sm:$0xff]
        %v535 = vld [vmem:[%s1 + $0x378] sm:$0xff]
        %v536 = vld [vmem:[%s1 + $0x380] sm:$0xff]
        %v537 = vld [vmem:[%s1 + $0x388] sm:$0xff]
        %v538 = vld [vmem:[%s1 + $0x390] sm:$0xff]
        %v539 = vld [vmem:[%s1 + $0x398] sm:$0xff]
        %v540 = vld [vmem:[%s1 + $0x3a0] sm:$0xff]
        %v541 = vld [vmem:[%s1 + $0x3a8] sm:$0xff]
        %v542 = vld [vmem:[%s1 + $0x3b0] sm:$0xff]
        %v543 = vld [vmem:[%s1 + $0x3b8] sm:$0xff]
        %v544 = vld [vmem:[%s1 + $0x3c0] sm:$0xff]
        %v545 = vld [vmem:[%s1 + $0x3c8] sm:$0xff]
        %v546 = vld [vmem:[%s1 + $0x3d0] sm:$0xff]
        %v547 = vld [vmem:[%s1 + $0x3d8] sm:$0xff]
        %v548 = vld [vmem:[%s1 + $0x3e0] sm:$0xff]
        %v549 = vld [vmem:[%s1 + $0x3e8] sm:$0xff]
        %v550 = vld [vmem:[%s1 + $0x3f0] sm:$0xff]
        %v551 = vld [vmem:[%s1 + $0x3f8] sm:$0xff]
        %v552 = vld [vmem:[%s1 + $0x400] sm:$0xff]
        %v553 = vld [vmem:[%s1 + $0x408] sm:$0xff]
        %v554 = vld [vmem:[%s1 + $0x410] sm:$0xff]
        %v555 = vld [vmem:[%s1 + $0x418] sm:$0xff]
        %v556 = vld [vmem:[%s1 + $0x420] sm:$0xff]
        %v557 = vld [vmem:[%s1 + $0x428] sm:$0xff]
        %v558 = vld [vmem:[%s1 + $0x430] sm:$0xff]
        %v559 = vld [vmem:[%s1 + $0x438] sm:$0xff]
        %v560 = vld [vmem:[%s1 + $0x440] sm:$0xff]
        %v561 = vld [vmem:[%s1 + $0x448] sm:$0xff]
        %v562 = vld [vmem:[%s1 + $0x450] sm:$0xff]
        %v563 = vld [vmem:[%s1 + $0x458] sm:$0xff]
        %v564 = vld [vmem:[%s1 + $0x460] sm:$0xff]
        %v565 = vld [vmem:[%s1 + $0x468] sm:$0xff]
        %v566 = vld [vmem:[%s1 + $0x470] sm:$0xff]
        %v567 = vld [vmem:[%s1 + $0x478] sm:$0xff]
        %v568 = vld [vmem:[%s1 + $0x480] sm:$0xff]
        %v569 = vld [vmem:[%s1 + $0x488] sm:$0xff]
        %v570 = vld [vmem:[%s1 + $0x490] sm:$0xff]
        %v571 = vld [vmem:[%s1 + $0x498] sm:$0xff]
        %v572 = vld [vmem:[%s1 + $0x4a0] sm:$0xff]
        %v573 = vld [vmem:[%s1 + $0x4a8] sm:$0xff]
        %v574 = vld [vmem:[%s1 + $0x4b0] sm:$0xff]
        %v575 = vld [vmem:[%s1 + $0x4b8] sm:$0xff]
        %v576 = vld [vmem:[%s1 + $0x4c0] sm:$0xff]
        %v577 = vld [vmem:[%s1 + $0x4c8] sm:$0xff]
        %v578 = vld [vmem:[%s1 + $0x4d0] sm:$0xff]
        %v579 = vld [vmem:[%s1 + $0x4d8] sm:$0xff]
        %v580 = vld [vmem:[%s1 + $0x4e0] sm:$0xff]
        %v581 = vld [vmem:[%s1 + $0x4e8] sm:$0xff]
        %v582 = vld [vmem:[%s1 + $0x4f0] sm:$0xff]
        %v583 = vld [vmem:[%s1 + $0x4f8] sm:$0xff]
        %v584 = vld [vmem:[%s1 + $0x500] sm:$0xff]
        %v585 = vld [vmem:[%s1 + $0x508] sm:$0xff]
        %v586 = vld [vmem:[%s1 + $0x510] sm:$0xff]
        %v587 = vld [vmem:[%s1 + $0x518] sm:$0xff]
        %v588 = vld [vmem:[%s1 + $0x520] sm:$0xff]
        %v589 = vld [vmem:[%s1 + $0x528] sm:$0xff]
        %v590 = vld [vmem:[%s1 + $0x530] sm:$0xff]
        %v591 = vld [vmem:[%s1 + $0x538] sm:$0xff]
        %v592 = vld [vmem:[%s1 + $0x540] sm:$0xff]
        %v593 = vld [vmem:[%s1 + $0x548] sm:$0xff]
        %v594 = vld [vmem:[%s1 + $0x550] sm:$0xff]
        %v595 = vld [vmem:[%s1 + $0x558] sm:$0xff]
        %v596 = vld [vmem:[%s1 + $0x560] sm:$0xff]
        %v597 = vld [vmem:[%s1 + $0x568] sm:$0xff]
        %v598 = vld [vmem:[%s1 + $0x570] sm:$0xff]
        %v599 = vld [vmem:[%s1 + $0x578] sm:$0xff]
        %v600 = vld [vmem:[%s1 + $0x580] sm:$0xff]
        %v601 = vld [vmem:[%s1 + $0x588] sm:$0xff]
        %v602 = vld [vmem:[%s1 + $0x590] sm:$0xff]
        %v603 = vld [vmem:[%s1 + $0x598] sm:$0xff]
        %v604 = vld [vmem:[%s1 + $0x5a0] sm:$0xff]
        %v605 = vld [vmem:[%s1 + $0x5a8] sm:$0xff]
        %v606 = vld [vmem:[%s1 + $0x5b0] sm:$0xff]
        %v607 = vld [vmem:[%s1 + $0x5b8] sm:$0xff]
        %v608 = vld [vmem:[%s1 + $0x5c0] sm:$0xff]
        %v609 = vld [vmem:[%s1 + $0x5c8] sm:$0xff]
        %v610 = vld [vmem:[%s1 + $0x5d0] sm:$0xff]
        %v611 = vld [vmem:[%s1 + $0x5d8] sm:$0xff]
        %v612 = vld [vmem:[%s1 + $0x5e0] sm:$0xff]
        %v613 = vld [vmem:[%s1 + $0x5e8] sm:$0xff]
        %v614 = vld [vmem:[%s1 + $0x5f0] sm:$0xff]
        %v615 = vld [vmem:[%s1 + $0x5f8] sm:$0xff]
        %v616 = vld [vmem:[%s1 + $0x600] sm:$0xff]
        %v617 = vld [vmem:[%s1 + $0x608] sm:$0xff]
        %v618 = vld [vmem:[%s1 + $0x610] sm:$0xff]
        %v619 = vld [vmem:[%s1 + $0x618] sm:$0xff]
        %v620 = vld [vmem:[%s1 + $0x620] sm:$0xff]
        %v621 = vld [vmem:[%s1 + $0x628] sm:$0xff]
        %v622 = vld [vmem:[%s1 + $0x630] sm:$0xff]
        %v623 = vld [vmem:[%s1 + $0x638] sm:$0xff]
        %v624 = vld [vmem:[%s1 + $0x640] sm:$0xff]
        %v625 = vld [vmem:[%s1 + $0x648] sm:$0xff]
        %v626 = vld [vmem:[%s1 + $0x650] sm:$0xff]
        %v627 = vld [vmem:[%s1 + $0x658] sm:$0xff]
        %v628 = vld [vmem:[%s1 + $0x660] sm:$0xff]
        %v629 = vld [vmem:[%s1 + $0x668] sm:$0xff]
        %v630 = vld [vmem:[%s1 + $0x670] sm:$0xff]
        %v631 = vld [vmem:[%s1 + $0x678] sm:$0xff]
        %v632 = vld [vmem:[%s1 + $0x680] sm:$0xff]
        %v633 = vld [vmem:[%s1 + $0x688] sm:$0xff]
        %v634 = vld [vmem:[%s1 + $0x690] sm:$0xff]
        %v635 = vld [vmem:[%s1 + $0x698] sm:$0xff]
        %v636 = vld [vmem:[%s1 + $0x6a0] sm:$0xff]
        %v637 = vld [vmem:[%s1 + $0x6a8] sm:$0xff]
        %v638 = vld [vmem:[%s1 + $0x6b0] sm:$0xff]
        %v639 = vld [vmem:[%s1 + $0x6b8] sm:$0xff]
        %v640 = vld [vmem:[%s1 + $0x6c0] sm:$0xff]
        %v641 = vld [vmem:[%s1 + $0x6c8] sm:$0xff]
        %v642 = vld [vmem:[%s1 + $0x6d0] sm:$0xff]
        %v643 = vld [vmem:[%s1 + $0x6d8] sm:$0xff]
        %v644 = vld [vmem:[%s1 + $0x6e0] sm:$0xff]
        %v645 = vld [vmem:[%s1 + $0x6e8] sm:$0xff]
        %v646 = vld [vmem:[%s1 + $0x6f0] sm:$0xff]
        %v647 = vld [vmem:[%s1 + $0x6f8] sm:$0xff]
        %v648 = vld [vmem:[%s1 + $0x700] sm:$0xff]
        %v649 = vld [vmem:[%s1 + $0x708] sm:$0xff]
        %v650 = vld [vmem:[%s1 + $0x710] sm:$0xff]
        %v651 = vld [vmem:[%s1 + $0x718] sm:$0xff]
        %v652 = vld [vmem:[%s1 + $0x720] sm:$0xff]
        %v653 = vld [vmem:[%s1 + $0x728] sm:$0xff]
        %v654 = vld [vmem:[%s1 + $0x730] sm:$0xff]
        %v655 = vld [vmem:[%s1 + $0x738] sm:$0xff]
        %v656 = vld [vmem:[%s1 + $0x740] sm:$0xff]
        %v657 = vld [vmem:[%s1 + $0x748] sm:$0xff]
        %v658 = vld [vmem:[%s1 + $0x750] sm:$0xff]
        %v659 = vld [vmem:[%s1 + $0x758] sm:$0xff]
        %v660 = vld [vmem:[%s1 + $0x760] sm:$0xff]
        %v661 = vld [vmem:[%s1 + $0x768] sm:$0xff]
        %v662 = vld [vmem:[%s1 + $0x770] sm:$0xff]
        %v663 = vld [vmem:[%s1 + $0x778] sm:$0xff]
        %v664 = vld [vmem:[%s1 + $0x780] sm:$0xff]
        %v665 = vld [vmem:[%s1 + $0x788] sm:$0xff]
        %v666 = vld [vmem:[%s1 + $0x790] sm:$0xff]
        %v667 = vld [vmem:[%s1 + $0x798] sm:$0xff]
        %v668 = vld [vmem:[%s1 + $0x7a0] sm:$0xff]
        %v669 = vld [vmem:[%s1 + $0x7a8] sm:$0xff]
        %v670 = vld [vmem:[%s1 + $0x7b0] sm:$0xff]
        %v671 = vld [vmem:[%s1 + $0x7b8] sm:$0xff]
        %v672 = vld [vmem:[%s1 + $0x7c0] sm:$0xff]
        %v673 = vld [vmem:[%s1 + $0x7c8] sm:$0xff]
        %v674 = vld [vmem:[%s1 + $0x7d0] sm:$0xff]
        %v675 = vld [vmem:[%s1 + $0x7d8] sm:$0xff]
        %v676 = vld [vmem:[%s1 + $0x7e0] sm:$0xff]
        %v677 = vld [vmem:[%s1 + $0x7e8] sm:$0xff]
        %v678 = vld [vmem:[%s1 + $0x7f0] sm:$0xff]
        %v679 = vld [vmem:[%s1 + $0x7f8] sm:$0xff]
        %v680 = vld [vmem:[%s1 + $0x800] sm:$0xff]
        %v681 = vld [vmem:[%s1 + $0x808] sm:$0xff]
        %v682 = vld [vmem:[%s1 + $0x810] sm:$0xff]
        %v683 = vld [vmem:[%s1 + $0x818] sm:$0xff]
        %v684 = vld [vmem:[%s1 + $0x820] sm:$0xff]
        %v685 = vld [vmem:[%s1 + $0x828] sm:$0xff]
        %v686 = vld [vmem:[%s1 + $0x830] sm:$0xff]
        %v687 = vld [vmem:[%s1 + $0x838] sm:$0xff]
        %v688 = vld [vmem:[%s1 + $0x840] sm:$0xff]
        %v689 = vld [vmem:[%s1 + $0x848] sm:$0xff]
        %v690 = vld [vmem:[%s1 + $0x850] sm:$0xff]
        %v691 = vld [vmem:[%s1 + $0x858] sm:$0xff]
        %v692 = vld [vmem:[%s1 + $0x860] sm:$0xff]
        %v693 = vld [vmem:[%s1 + $0x868] sm:$0xff]
        %v694 = vld [vmem:[%s1 + $0x870] sm:$0xff]
        %v695 = vld [vmem:[%s1 + $0x878] sm:$0xff]
        %v696 = vld [vmem:[%s1 + $0x880] sm:$0xff]
        %v697 = vld [vmem:[%s1 + $0x888] sm:$0xff]
        %v698 = vld [vmem:[%s1 + $0x890] sm:$0xff]
        %v699 = vld [vmem:[%s1 + $0x898] sm:$0xff]
        %v700 = vld [vmem:[%s1 + $0x8a0] sm:$0xff]
        %v701 = vld [vmem:[%s1 + $0x8a8] sm:$0xff]
        %v702 = vld [vmem:[%s1 + $0x8b0] sm:$0xff]
        %v703 = vld [vmem:[%s1 + $0x8b8] sm:$0xff]
        %v704 = vld [vmem:[%s1 + $0x8c0] sm:$0xff]
        %v705 = vld [vmem:[%s1 + $0x8c8] sm:$0xff]
        %v706 = vld [vmem:[%s1 + $0x8d0] sm:$0xff]
        %v707 = vld [vmem:[%s1 + $0x8d8] sm:$0xff]
        %v708 = vld [vmem:[%s1 + $0x8e0] sm:$0xff]
        %v709 = vld [vmem:[%s1 + $0x8e8] sm:$0xff]
        %v710 = vld [vmem:[%s1 + $0x8f0] sm:$0xff]
        %v711 = vld [vmem:[%s1 + $0x8f8] sm:$0xff]
        %v712 = vld [vmem:[%s1 + $0x900] sm:$0xff]
        %v713 = vld [vmem:[%s1 + $0x908] sm:$0xff]
        %v714 = vld [vmem:[%s1 + $0x910] sm:$0xff]
        %v715 = vld [vmem:[%s1 + $0x918] sm:$0xff]
        %v716 = vld [vmem:[%s1 + $0x920] sm:$0xff]
        %v717 = vld [vmem:[%s1 + $0x928] sm:$0xff]
        %v718 = vld [vmem:[%s1 + $0x930] sm:$0xff]
        %v719 = vld [vmem:[%s1 + $0x938] sm:$0xff]
        %v720 = vld [vmem:[%s1 + $0x940] sm:$0xff]
        %v721 = vld [vmem:[%s1 + $0x948] sm:$0xff]
        %v722 = vld [vmem:[%s1 + $0x950] sm:$0xff]
        %v723 = vld [vmem:[%s1 + $0x958] sm:$0xff]
        %v724 = vld [vmem:[%s1 + $0x960] sm:$0xff]
        %v725 = vld [vmem:[%s1 + $0x968] sm:$0xff]
        %v726 = vld [vmem:[%s1 + $0x970] sm:$0xff]
        %v727 = vld [vmem:[%s1 + $0x978] sm:$0xff]
        %v728 = vld [vmem:[%s1 + $0x980] sm:$0xff]
        %v729 = vld [vmem:[%s1 + $0x988] sm:$0xff]
        %v730 = vld [vmem:[%s1 + $0x990] sm:$0xff]
        %v731 = vld [vmem:[%s1 + $0x998] sm:$0xff]
        %v732 = vld [vmem:[%s1 + $0x9a0] sm:$0xff]
        %v733 = vld [vmem:[%s1 + $0x9a8] sm:$0xff]
        %v734 = vld [vmem:[%s1 + $0x9b0] sm:$0xff]
        %v735 = vld [vmem:[%s1 + $0x9b8] sm:$0xff]
        %v736 = vld [vmem:[%s1 + $0x9c0] sm:$0xff]
        %v737 = vld [vmem:[%s1 + $0x9c8] sm:$0xff]
        %v738 = vld [vmem:[%s1 + $0x9d0] sm:$0xff]
        %v739 = vld [vmem:[%s1 + $0x9d8] sm:$0xff]
        %v740 = vld [vmem:[%s1 + $0x9e0] sm:$0xff]
        %v741 = vld [vmem:[%s1 + $0x9e8] sm:$0xff]
        %v742 = vld [vmem:[%s1 + $0x9f0] sm:$0xff]
        %v743 = vld [vmem:[%s1 + $0x9f8] sm:$0xff]
        %v744 = vld [vmem:[%s1 + $0xa00] sm:$0xff]
        %v745 = vld [vmem:[%s1 + $0xa08] sm:$0xff]
        %v746 = vld [vmem:[%s1 + $0xa10] sm:$0xff]
        %v747 = vld [vmem:[%s1 + $0xa18] sm:$0xff]
        %v748 = vld [vmem:[%s1 + $0xa20] sm:$0xff]
        %v749 = vld [vmem:[%s1 + $0xa28] sm:$0xff]
        %v750 = vld [vmem:[%s1 + $0xa30] sm:$0xff]
        %v751 = vld [vmem:[%s1 + $0xa38] sm:$0xff]
        %v752 = vld [vmem:[%s1 + $0xa40] sm:$0xff]
        %v753 = vld [vmem:[%s1 + $0xa48] sm:$0xff]
        %v754 = vld [vmem:[%s1 + $0xa50] sm:$0xff]
        %v755 = vld [vmem:[%s1 + $0xa58] sm:$0xff]
        %v756 = vld [vmem:[%s1 + $0xa60] sm:$0xff]
        %v757 = vld [vmem:[%s1 + $0xa68] sm:$0xff]
        %v758 = vld [vmem:[%s1 + $0xa70] sm:$0xff]
        %v759 = vld [vmem:[%s1 + $0xa78] sm:$0xff]
        %v760 = vld [vmem:[%s1 + $0xa80] sm:$0xff]
        %v761 = vld [vmem:[%s1 + $0xa88] sm:$0xff]
        %v762 = vld [vmem:[%s1 + $0xa90] sm:$0xff]
        %v763 = vld [vmem:[%s1 + $0xa98] sm:$0xff]
        %v764 = vld [vmem:[%s1 + $0xaa0] sm:$0xff]
        %v765 = vld [vmem:[%s1 + $0xaa8] sm:$0xff]
        %v766 = vld [vmem:[%s1 + $0xab0] sm:$0xff]
        %v767 = vld [vmem:[%s1 + $0xab8] sm:$0xff]
        %v768 = vld [vmem:[%s1 + $0xac0] sm:$0xff]
        %v769 = vld [vmem:[%s1 + $0xac8] sm:$0xff]
        %v770 = vld [vmem:[%s1 + $0xad0] sm:$0xff]
        %v771 = vld [vmem:[%s1 + $0xad8] sm:$0xff]
        %v772 = vld [vmem:[%s1 + $0xae0] sm:$0xff]
        %v773 = vld [vmem:[%s1 + $0xae8] sm:$0xff]
        %v774 = vld [vmem:[%s1 + $0xaf0] sm:$0xff]
        %v775 = vld [vmem:[%s1 + $0xaf8] sm:$0xff]
        %v776 = vld [vmem:[%s1 + $0xb00] sm:$0xff]
        %v777 = vld [vmem:[%s1 + $0xb08] sm:$0xff]
        %v778 = vld [vmem:[%s1 + $0xb10] sm:$0xff]
        %v779 = vld [vmem:[%s1 + $0xb18] sm:$0xff]
        %v780 = vld [vmem:[%s1 + $0xb20] sm:$0xff]
        %v781 = vld [vmem:[%s1 + $0xb28] sm:$0xff]
        %v782 = vld [vmem:[%s1 + $0xb30] sm:$0xff]
        %v783 = vld [vmem:[%s1 + $0xb38] sm:$0xff]
        %v784 = vld [vmem:[%s1 + $0xb40] sm:$0xff]
        %v785 = vld [vmem:[%s1 + $0xb48] sm:$0xff]
        %v786 = vld [vmem:[%s1 + $0xb50] sm:$0xff]
        %v787 = vld [vmem:[%s1 + $0xb58] sm:$0xff]
        %v788 = vld [vmem:[%s1 + $0xb60] sm:$0xff]
        %v789 = vld [vmem:[%s1 + $0xb68] sm:$0xff]
        %v790 = vld [vmem:[%s1 + $0xb70] sm:$0xff]
        %v791 = vld [vmem:[%s1 + $0xb78] sm:$0xff]
        %v792 = vld [vmem:[%s1 + $0xb80] sm:$0xff]
        %v793 = vld [vmem:[%s1 + $0xb88] sm:$0xff]
        %v794 = vld [vmem:[%s1 + $0xb90] sm:$0xff]
        %v795 = vld [vmem:[%s1 + $0xb98] sm:$0xff]
        %v796 = vld [vmem:[%s1 + $0xba0] sm:$0xff]
        %v797 = vld [vmem:[%s1 + $0xba8] sm:$0xff]
        %v798 = vld [vmem:[%s1 + $0xbb0] sm:$0xff]
        %v799 = vld [vmem:[%s1 + $0xbb8] sm:$0xff]
        %v800 = vld [vmem:[%s1 + $0xbc0] sm:$0xff]
        %v801 = vld [vmem:[%s1 + $0xbc8] sm:$0xff]
        %v802 = vld [vmem:[%s1 + $0xbd0] sm:$0xff]
        %v803 = vld [vmem:[%s1 + $0xbd8] sm:$0xff]
        %v804 = vld [vmem:[%s1 + $0xbe0] sm:$0xff]
        %v805 = vld [vmem:[%s1 + $0xbe8] sm:$0xff]
        %v806 = vld [vmem:[%s1 + $0xbf0] sm:$0xff]
        %v807 = vld [vmem:[%s1 + $0xbf8] sm:$0xff]
        %v808 = vld [vmem:[%s11] sm:$0x3]
        %v810 = vlaneseq
        %v811 = vshrl.u32 %v810, 7
        %v812 = vsub.s32 0, %v811
        %v813 = vrot.slane %v808, %v812
        %v814 = vlaneseq
        %v815 = vshrl.u32 %v814, 7
        %v816 = vsub.s32 1, %v815
        %v817 = vrot.slane %v808, %v816
        %820 = vmatprep.subr.mxu0 %v425
        %821 = vmatpush1.msra.mxu0 %v424
        %822 = vmatprep.subr.mxu0 %v427
        %823 = vmatpush1.msra.mxu0 %v426
        %824 = vmatprep.subr.mxu0 %v429
        %825 = vmatpush1.msra.mxu0 %v428
        %826 = vmatprep.subr.mxu0 %v431
        %827 = vmatpush1.msra.mxu0 %v430
        %828 = vmatprep.subr.mxu0 %v433
        %829 = vmatpush1.msra.mxu0 %v432
        %830 = vmatprep.subr.mxu0 %v435
        %831 = vmatpush1.msra.mxu0 %v434
        %832 = vmatprep.subr.mxu0 %v437
        %833 = vmatpush1.msra.mxu0 %v436
        %834 = vmatprep.subr.mxu0 %v439
        %835 = vmatpush1.msra.mxu0 %v438
        %836 = vmatprep.subr.mxu0 %v441
        %837 = vmatpush1.msra.mxu0 %v440
        %838 = vmatprep.subr.mxu0 %v443
        %839 = vmatpush1.msra.mxu0 %v442
        %840 = vmatprep.subr.mxu0 %v445
        %841 = vmatpush1.msra.mxu0 %v444
        %842 = vmatprep.subr.mxu0 %v447
        %843 = vmatpush1.msra.mxu0 %v446
        %844 = vmatprep.subr.mxu0 %v449
        %845 = vmatpush1.msra.mxu0 %v448
        %846 = vmatprep.subr.mxu0 %v451
        %847 = vmatpush1.msra.mxu0 %v450
        %848 = vmatprep.subr.mxu0 %v453
        %849 = vmatpush1.msra.mxu0 %v452
        %850 = vmatprep.subr.mxu0 %v455
        %851 = vmatpush1.msra.mxu0 %v454
        %852 = vmatprep.subr.mxu0 %v457
        %853 = vmatpush1.msra.mxu0 %v456
        %854 = vmatprep.subr.mxu0 %v459
        %855 = vmatpush1.msra.mxu0 %v458
        %856 = vmatprep.subr.mxu0 %v461
        %857 = vmatpush1.msra.mxu0 %v460
        %858 = vmatprep.subr.mxu0 %v463
        %859 = vmatpush1.msra.mxu0 %v462
        %860 = vmatprep.subr.mxu0 %v465
        %861 = vmatpush1.msra.mxu0 %v464
        %862 = vmatprep.subr.mxu0 %v467
        %863 = vmatpush1.msra.mxu0 %v466
        %864 = vmatprep.subr.mxu0 %v469
        %865 = vmatpush1.msra.mxu0 %v468
        %866 = vmatprep.subr.mxu0 %v471
        %867 = vmatpush1.msra.mxu0 %v470
        %868 = vmatprep.subr.mxu0 %v473
        %869 = vmatpush1.msra.mxu0 %v472
        %870 = vmatprep.subr.mxu0 %v475
        %871 = vmatpush1.msra.mxu0 %v474
        %872 = vmatprep.subr.mxu0 %v477
        %873 = vmatpush1.msra.mxu0 %v476
        %874 = vmatprep.subr.mxu0 %v479
        %875 = vmatpush1.msra.mxu0 %v478
        %876 = vmatprep.subr.mxu0 %v481
        %877 = vmatpush1.msra.mxu0 %v480
        %878 = vmatprep.subr.mxu0 %v483
        %879 = vmatpush1.msra.mxu0 %v482
        %880 = vmatprep.subr.mxu0 %v485
        %881 = vmatpush1.msra.mxu0 %v484
        %882 = vmatprep.subr.mxu0 %v487
        %883 = vmatpush1.msra.mxu0 %v486
        %884 = vmatprep.mubr.f32.mxu0 %v413
        %885 = vmatmul.mubr.f32.gmra.mrb[0].mxu0 %v412
        %v886 = vpop.f32.mrb[0].mxu0
        %v887 = vadd.f32 %v813, %v886
        %v888 = vpop.f32.mrb[0].mxu0
        %v889 = vadd.f32 %v817, %v888
        %890 = vdwg.mxu0
        %891 = vmatprep.subr.mxu0 %v489
        %892 = vmatpush1.msra.mxu0 %v488
        %893 = vmatprep.subr.mxu0 %v491
        %894 = vmatpush1.msra.mxu0 %v490
        %895 = vmatprep.subr.mxu0 %v493
        %896 = vmatpush1.msra.mxu0 %v492
        %897 = vmatprep.subr.mxu0 %v495
        %898 = vmatpush1.msra.mxu0 %v494
        %899 = vmatprep.subr.mxu0 %v497
        %900 = vmatpush1.msra.mxu0 %v496
        %901 = vmatprep.subr.mxu0 %v499
        %902 = vmatpush1.msra.mxu0 %v498
        %903 = vmatprep.subr.mxu0 %v501
        %904 = vmatpush1.msra.mxu0 %v500
        %905 = vmatprep.subr.mxu0 %v503
        %906 = vmatpush1.msra.mxu0 %v502
        %907 = vmatprep.subr.mxu0 %v505
        %908 = vmatpush1.msra.mxu0 %v504
        %909 = vmatprep.subr.mxu0 %v507
        %910 = vmatpush1.msra.mxu0 %v506
        %911 = vmatprep.subr.mxu0 %v509
        %912 = vmatpush1.msra.mxu0 %v508
        %913 = vmatprep.subr.mxu0 %v511
        %914 = vmatpush1.msra.mxu0 %v510
        %915 = vmatprep.subr.mxu0 %v513
        %916 = vmatpush1.msra.mxu0 %v512
        %917 = vmatprep.subr.mxu0 %v515
        %918 = vmatpush1.msra.mxu0 %v514
        %919 = vmatprep.subr.mxu0 %v517
        %920 = vmatpush1.msra.mxu0 %v516
        %921 = vmatprep.subr.mxu0 %v519
        %922 = vmatpush1.msra.mxu0 %v518
        %923 = vmatprep.subr.mxu0 %v521
        %924 = vmatpush1.msra.mxu0 %v520
        %925 = vmatprep.subr.mxu0 %v523
        %926 = vmatpush1.msra.mxu0 %v522
        %927 = vmatprep.subr.mxu0 %v525
        %928 = vmatpush1.msra.mxu0 %v524
        %929 = vmatprep.subr.mxu0 %v527
        %930 = vmatpush1.msra.mxu0 %v526
        %931 = vmatprep.subr.mxu0 %v529
        %932 = vmatpush1.msra.mxu0 %v528
        %933 = vmatprep.subr.mxu0 %v531
        %934 = vmatpush1.msra.mxu0 %v530
        %935 = vmatprep.subr.mxu0 %v533
        %936 = vmatpush1.msra.mxu0 %v532
        %937 = vmatprep.subr.mxu0 %v535
        %938 = vmatpush1.msra.mxu0 %v534
        %939 = vmatprep.subr.mxu0 %v537
        %940 = vmatpush1.msra.mxu0 %v536
        %941 = vmatprep.subr.mxu0 %v539
        %942 = vmatpush1.msra.mxu0 %v538
        %943 = vmatprep.subr.mxu0 %v541
        %944 = vmatpush1.msra.mxu0 %v540
        %945 = vmatprep.subr.mxu0 %v543
        %946 = vmatpush1.msra.mxu0 %v542
        %947 = vmatprep.subr.mxu0 %v545
        %948 = vmatpush1.msra.mxu0 %v544
        %949 = vmatprep.subr.mxu0 %v547
        %950 = vmatpush1.msra.mxu0 %v546
        %951 = vmatprep.subr.mxu0 %v549
        %952 = vmatpush1.msra.mxu0 %v548
        %953 = vmatprep.subr.mxu0 %v551
        %954 = vmatpush1.msra.mxu0 %v550
        %955 = vmatprep.mubr.f32.mxu0 %v415
        %956 = vmatmul.mubr.f32.gmra.mrb[0].mxu0 %v414
        %v957 = vpop.f32.mrb[0].mxu0
        %v958 = vadd.f32 %v887, %v957
        %v959 = vpop.f32.mrb[0].mxu0
        %v960 = vadd.f32 %v889, %v959
        %961 = vdwg.mxu0
        %962 = vmatprep.subr.mxu0 %v553
        %963 = vmatpush1.msra.mxu0 %v552
        %964 = vmatprep.subr.mxu0 %v555
        %965 = vmatpush1.msra.mxu0 %v554
        %966 = vmatprep.subr.mxu0 %v557
        %967 = vmatpush1.msra.mxu0 %v556
        %968 = vmatprep.subr.mxu0 %v559
        %969 = vmatpush1.msra.mxu0 %v558
        %970 = vmatprep.subr.mxu0 %v561
        %971 = vmatpush1.msra.mxu0 %v560
        %972 = vmatprep.subr.mxu0 %v563
        %973 = vmatpush1.msra.mxu0 %v562
        %974 = vmatprep.subr.mxu0 %v565
        %975 = vmatpush1.msra.mxu0 %v564
        %976 = vmatprep.subr.mxu0 %v567
        %977 = vmatpush1.msra.mxu0 %v566
        %978 = vmatprep.subr.mxu0 %v569
        %979 = vmatpush1.msra.mxu0 %v568
        %980 = vmatprep.subr.mxu0 %v571
        %981 = vmatpush1.msra.mxu0 %v570
        %982 = vmatprep.subr.mxu0 %v573
        %983 = vmatpush1.msra.mxu0 %v572
        %984 = vmatprep.subr.mxu0 %v575
        %985 = vmatpush1.msra.mxu0 %v574
        %986 = vmatprep.subr.mxu0 %v577
        %987 = vmatpush1.msra.mxu0 %v576
        %988 = vmatprep.subr.mxu0 %v579
        %989 = vmatpush1.msra.mxu0 %v578
        %990 = vmatprep.subr.mxu0 %v581
        %991 = vmatpush1.msra.mxu0 %v580
        %992 = vmatprep.subr.mxu0 %v583
        %993 = vmatpush1.msra.mxu0 %v582
        %994 = vmatprep.subr.mxu0 %v585
        %995 = vmatpush1.msra.mxu0 %v584
        %996 = vmatprep.subr.mxu0 %v587
        %997 = vmatpush1.msra.mxu0 %v586
        %998 = vmatprep.subr.mxu0 %v589
        %999 = vmatpush1.msra.mxu0 %v588
        %1000 = vmatprep.subr.mxu0 %v591
        %1001 = vmatpush1.msra.mxu0 %v590
        %1002 = vmatprep.subr.mxu0 %v593
        %1003 = vmatpush1.msra.mxu0 %v592
        %1004 = vmatprep.subr.mxu0 %v595
        %1005 = vmatpush1.msra.mxu0 %v594
        %1006 = vmatprep.subr.mxu0 %v597
        %1007 = vmatpush1.msra.mxu0 %v596
        %1008 = vmatprep.subr.mxu0 %v599
        %1009 = vmatpush1.msra.mxu0 %v598
        %1010 = vmatprep.subr.mxu0 %v601
        %1011 = vmatpush1.msra.mxu0 %v600
        %1012 = vmatprep.subr.mxu0 %v603
        %1013 = vmatpush1.msra.mxu0 %v602
        %1014 = vmatprep.subr.mxu0 %v605
        %1015 = vmatpush1.msra.mxu0 %v604
        %1016 = vmatprep.subr.mxu0 %v607
        %1017 = vmatpush1.msra.mxu0 %v606
        %1018 = vmatprep.subr.mxu0 %v609
        %1019 = vmatpush1.msra.mxu0 %v608
        %1020 = vmatprep.subr.mxu0 %v611
        %1021 = vmatpush1.msra.mxu0 %v610
        %1022 = vmatprep.subr.mxu0 %v613
        %1023 = vmatpush1.msra.mxu0 %v612
        %1024 = vmatprep.subr.mxu0 %v615
        %1025 = vmatpush1.msra.mxu0 %v614
        %1026 = vmatprep.mubr.f32.mxu0 %v417
        %1027 = vmatmul.mubr.f32.gmra.mrb[0].mxu0 %v416
        %v1028 = vpop.f32.mrb[0].mxu0
        %v1029 = vadd.f32 %v958, %v1028
        %v1030 = vpop.f32.mrb[0].mxu0
        %v1031 = vadd.f32 %v960, %v1030
        %1032 = vdwg.mxu0
        %1033 = vmatprep.subr.mxu0 %v617
        %1034 = vmatpush1.msra.mxu0 %v616
        %1035 = vmatprep.subr.mxu0 %v619
        %1036 = vmatpush1.msra.mxu0 %v618
        %1037 = vmatprep.subr.mxu0 %v621
        %1038 = vmatpush1.msra.mxu0 %v620
        %1039 = vmatprep.subr.mxu0 %v623
        %1040 = vmatpush1.msra.mxu0 %v622
        %1041 = vmatprep.subr.mxu0 %v625
        %1042 = vmatpush1.msra.mxu0 %v624
        %1043 = vmatprep.subr.mxu0 %v627
        %1044 = vmatpush1.msra.mxu0 %v626
        %1045 = vmatprep.subr.mxu0 %v629
        %1046 = vmatpush1.msra.mxu0 %v628
        %1047 = vmatprep.subr.mxu0 %v631
        %1048 = vmatpush1.msra.mxu0 %v630
        %1049 = vmatprep.subr.mxu0 %v633
        %1050 = vmatpush1.msra.mxu0 %v632
        %1051 = vmatprep.subr.mxu0 %v635
        %1052 = vmatpush1.msra.mxu0 %v634
        %1053 = vmatprep.subr.mxu0 %v637
        %1054 = vmatpush1.msra.mxu0 %v636
        %1055 = vmatprep.subr.mxu0 %v639
        %1056 = vmatpush1.msra.mxu0 %v638
        %1057 = vmatprep.subr.mxu0 %v641
        %1058 = vmatpush1.msra.mxu0 %v640
        %1059 = vmatprep.subr.mxu0 %v643
        %1060 = vmatpush1.msra.mxu0 %v642
        %1061 = vmatprep.subr.mxu0 %v645
        %1062 = vmatpush1.msra.mxu0 %v644
        %1063 = vmatprep.subr.mxu0 %v647
        %1064 = vmatpush1.msra.mxu0 %v646
        %1065 = vmatprep.subr.mxu0 %v649
        %1066 = vmatpush1.msra.mxu0 %v648
        %1067 = vmatprep.subr.mxu0 %v651
        %1068 = vmatpush1.msra.mxu0 %v650
        %1069 = vmatprep.subr.mxu0 %v653
        %1070 = vmatpush1.msra.mxu0 %v652
        %1071 = vmatprep.subr.mxu0 %v655
        %1072 = vmatpush1.msra.mxu0 %v654
        %1073 = vmatprep.subr.mxu0 %v657
        %1074 = vmatpush1.msra.mxu0 %v656
        %1075 = vmatprep.subr.mxu0 %v659
        %1076 = vmatpush1.msra.mxu0 %v658
        %1077 = vmatprep.subr.mxu0 %v661
        %1078 = vmatpush1.msra.mxu0 %v660
        %1079 = vmatprep.subr.mxu0 %v663
        %1080 = vmatpush1.msra.mxu0 %v662
        %1081 = vmatprep.subr.mxu0 %v665
        %1082 = vmatpush1.msra.mxu0 %v664
        %1083 = vmatprep.subr.mxu0 %v667
        %1084 = vmatpush1.msra.mxu0 %v666
        %1085 = vmatprep.subr.mxu0 %v669
        %1086 = vmatpush1.msra.mxu0 %v668
        %1087 = vmatprep.subr.mxu0 %v671
        %1088 = vmatpush1.msra.mxu0 %v670
        %1089 = vmatprep.subr.mxu0 %v673
        %1090 = vmatpush1.msra.mxu0 %v672
        %1091 = vmatprep.subr.mxu0 %v675
        %1092 = vmatpush1.msra.mxu0 %v674
        %1093 = vmatprep.subr.mxu0 %v677
        %1094 = vmatpush1.msra.mxu0 %v676
        %1095 = vmatprep.subr.mxu0 %v679
        %1096 = vmatpush1.msra.mxu0 %v678
        %1097 = vmatprep.mubr.f32.mxu0 %v419
        %1098 = vmatmul.mubr.f32.gmra.mrb[0].mxu0 %v418
        %v1099 = vpop.f32.mrb[0].mxu0
        %v1100 = vadd.f32 %v1029, %v1099
        %v1101 = vpop.f32.mrb[0].mxu0
        %v1102 = vadd.f32 %v1031, %v1101
        %1103 = vdwg.mxu0
        %1104 = vmatprep.subr.mxu0 %v681
        %1105 = vmatpush1.msra.mxu0 %v680
        %1106 = vmatprep.subr.mxu0 %v683
        %1107 = vmatpush1.msra.mxu0 %v682
        %1108 = vmatprep.subr.mxu0 %v685
        %1109 = vmatpush1.msra.mxu0 %v684
        %1110 = vmatprep.subr.mxu0 %v687
        %1111 = vmatpush1.msra.mxu0 %v686
        %1112 = vmatprep.subr.mxu0 %v689
        %1113 = vmatpush1.msra.mxu0 %v688
        %1114 = vmatprep.subr.mxu0 %v691
        %1115 = vmatpush1.msra.mxu0 %v690
        %1116 = vmatprep.subr.mxu0 %v693
        %1117 = vmatpush1.msra.mxu0 %v692
        %1118 = vmatprep.subr.mxu0 %v695
        %1119 = vmatpush1.msra.mxu0 %v694
        %1120 = vmatprep.subr.mxu0 %v697
        %1121 = vmatpush1.msra.mxu0 %v696
        %1122 = vmatprep.subr.mxu0 %v699
        %1123 = vmatpush1.msra.mxu0 %v698
        %1124 = vmatprep.subr.mxu0 %v701
        %1125 = vmatpush1.msra.mxu0 %v700
        %1126 = vmatprep.subr.mxu0 %v703
        %1127 = vmatpush1.msra.mxu0 %v702
        %1128 = vmatprep.subr.mxu0 %v705
        %1129 = vmatpush1.msra.mxu0 %v704
        %1130 = vmatprep.subr.mxu0 %v707
        %1131 = vmatpush1.msra.mxu0 %v706
        %1132 = vmatprep.subr.mxu0 %v709
        %1133 = vmatpush1.msra.mxu0 %v708
        %1134 = vmatprep.subr.mxu0 %v711
        %1135 = vmatpush1.msra.mxu0 %v710
        %1136 = vmatprep.subr.mxu0 %v713
        %1137 = vmatpush1.msra.mxu0 %v712
        %1138 = vmatprep.subr.mxu0 %v715
        %1139 = vmatpush1.msra.mxu0 %v714
        %1140 = vmatprep.subr.mxu0 %v717
        %1141 = vmatpush1.msra.mxu0 %v716
        %1142 = vmatprep.subr.mxu0 %v719
        %1143 = vmatpush1.msra.mxu0 %v718
        %1144 = vmatprep.subr.mxu0 %v721
        %1145 = vmatpush1.msra.mxu0 %v720
        %1146 = vmatprep.subr.mxu0 %v723
        %1147 = vmatpush1.msra.mxu0 %v722
        %1148 = vmatprep.subr.mxu0 %v725
        %1149 = vmatpush1.msra.mxu0 %v724
        %1150 = vmatprep.subr.mxu0 %v727
        %1151 = vmatpush1.msra.mxu0 %v726
        %1152 = vmatprep.subr.mxu0 %v729
        %1153 = vmatpush1.msra.mxu0 %v728
        %1154 = vmatprep.subr.mxu0 %v731
        %1155 = vmatpush1.msra.mxu0 %v730
        %1156 = vmatprep.subr.mxu0 %v733
        %1157 = vmatpush1.msra.mxu0 %v732
        %1158 = vmatprep.subr.mxu0 %v735
        %1159 = vmatpush1.msra.mxu0 %v734
        %1160 = vmatprep.subr.mxu0 %v737
        %1161 = vmatpush1.msra.mxu0 %v736
        %1162 = vmatprep.subr.mxu0 %v739
        %1163 = vmatpush1.msra.mxu0 %v738
        %1164 = vmatprep.subr.mxu0 %v741
        %1165 = vmatpush1.msra.mxu0 %v740
        %1166 = vmatprep.subr.mxu0 %v743
        %1167 = vmatpush1.msra.mxu0 %v742
        %1168 = vmatprep.mubr.f32.mxu0 %v421
        %1169 = vmatmul.mubr.f32.gmra.mrb[0].mxu0 %v420
        %v1170 = vpop.f32.mrb[0].mxu0
        %v1171 = vadd.f32 %v1100, %v1170
        %v1172 = vpop.f32.mrb[0].mxu0
        %v1173 = vadd.f32 %v1102, %v1172
        %1174 = vdwg.mxu0
        %1175 = vmatprep.subr.mxu0 %v745
        %1176 = vmatpush1.msra.mxu0 %v744
        %1177 = vmatprep.subr.mxu0 %v747
        %1178 = vmatpush1.msra.mxu0 %v746
        %1179 = vmatprep.subr.mxu0 %v749
        %1180 = vmatpush1.msra.mxu0 %v748
        %1181 = vmatprep.subr.mxu0 %v751
        %1182 = vmatpush1.msra.mxu0 %v750
        %1183 = vmatprep.subr.mxu0 %v753
        %1184 = vmatpush1.msra.mxu0 %v752
        %1185 = vmatprep.subr.mxu0 %v755
        %1186 = vmatpush1.msra.mxu0 %v754
        %1187 = vmatprep.subr.mxu0 %v757
        %1188 = vmatpush1.msra.mxu0 %v756
        %1189 = vmatprep.subr.mxu0 %v759
        %1190 = vmatpush1.msra.mxu0 %v758
        %1191 = vmatprep.subr.mxu0 %v761
        %1192 = vmatpush1.msra.mxu0 %v760
        %1193 = vmatprep.subr.mxu0 %v763
        %1194 = vmatpush1.msra.mxu0 %v762
        %1195 = vmatprep.subr.mxu0 %v765
        %1196 = vmatpush1.msra.mxu0 %v764
        %1197 = vmatprep.subr.mxu0 %v767
        %1198 = vmatpush1.msra.mxu0 %v766
        %1199 = vmatprep.subr.mxu0 %v769
        %1200 = vmatpush1.msra.mxu0 %v768
        %1201 = vmatprep.subr.mxu0 %v771
        %1202 = vmatpush1.msra.mxu0 %v770
        %1203 = vmatprep.subr.mxu0 %v773
        %1204 = vmatpush1.msra.mxu0 %v772
        %1205 = vmatprep.subr.mxu0 %v775
        %1206 = vmatpush1.msra.mxu0 %v774
        %1207 = vmatprep.subr.mxu0 %v777
        %1208 = vmatpush1.msra.mxu0 %v776
        %1209 = vmatprep.subr.mxu0 %v779
        %1210 = vmatpush1.msra.mxu0 %v778
        %1211 = vmatprep.subr.mxu0 %v781
        %1212 = vmatpush1.msra.mxu0 %v780
        %1213 = vmatprep.subr.mxu0 %v783
        %1214 = vmatpush1.msra.mxu0 %v782
        %1215 = vmatprep.subr.mxu0 %v785
        %1216 = vmatpush1.msra.mxu0 %v784
        %1217 = vmatprep.subr.mxu0 %v787
        %1218 = vmatpush1.msra.mxu0 %v786
        %1219 = vmatprep.subr.mxu0 %v789
        %1220 = vmatpush1.msra.mxu0 %v788
        %1221 = vmatprep.subr.mxu0 %v791
        %1222 = vmatpush1.msra.mxu0 %v790
        %1223 = vmatprep.subr.mxu0 %v793
        %1224 = vmatpush1.msra.mxu0 %v792
        %1225 = vmatprep.subr.mxu0 %v795
        %1226 = vmatpush1.msra.mxu0 %v794
        %1227 = vmatprep.subr.mxu0 %v797
        %1228 = vmatpush1.msra.mxu0 %v796
        %1229 = vmatprep.subr.mxu0 %v799
        %1230 = vmatpush1.msra.mxu0 %v798
        %1231 = vmatprep.subr.mxu0 %v801
        %1232 = vmatpush1.msra.mxu0 %v800
        %1233 = vmatprep.subr.mxu0 %v803
        %1234 = vmatpush1.msra.mxu0 %v802
        %1235 = vmatprep.subr.mxu0 %v805
        %1236 = vmatpush1.msra.mxu0 %v804
        %1237 = vmatprep.subr.mxu0 %v807
        %1238 = vmatpush1.msra.mxu0 %v806
        %1239 = vmatprep.mubr.f32.mxu0 %v423
        %1240 = vmatmul.mubr.f32.gmra.mrb[0].mxu0 %v422
        %v1241 = vpop.f32.mrb[0].mxu0
        %v1242 = vadd.f32 %v1171, %v1241
        %v1243 = vpop.f32.mrb[0].mxu0
        %v1244 = vadd.f32 %v1173, %v1243
        %1245 = vdwg.mxu0
        %v1246 = vmax.f32 %v1242, 0.0
        %v1247 = vmax.f32 %v1244, 0.0
        %v1248 = vld [vmem:[%s2] sm:$0xff]
        %v1249 = vld [vmem:[%s2 + $0x8] sm:$0xff]
        %v1250 = vld [vmem:[%s2 + $0x10] sm:$0xff]
        %v1251 = vld [vmem:[%s2 + $0x18] sm:$0xff]
        %v1252 = vld [vmem:[%s2 + $0x20] sm:$0xff]
        %v1253 = vld [vmem:[%s2 + $0x28] sm:$0xff]
        %v1254 = vld [vmem:[%s2 + $0x30] sm:$0xff]
        %v1255 = vld [vmem:[%s2 + $0x38] sm:$0xff]
        %v1256 = vld [vmem:[%s2 + $0x40] sm:$0xff]
        %v1257 = vld [vmem:[%s2 + $0x48] sm:$0xff]
        %v1258 = vld [vmem:[%s2 + $0x50] sm:$0xff]
        %v1259 = vld [vmem:[%s2 + $0x58] sm:$0xff]
        %v1260 = vld [vmem:[%s2 + $0x60] sm:$0xff]
        %v1261 = vld [vmem:[%s2 + $0x68] sm:$0xff]
        %v1262 = vld [vmem:[%s2 + $0x70] sm:$0xff]
        %v1263 = vld [vmem:[%s2 + $0x78] sm:$0xff]
        %v1264 = vld [vmem:[%s2 + $0x80] sm:$0xff]
        %v1265 = vld [vmem:[%s2 + $0x88] sm:$0xff]
        %v1266 = vld [vmem:[%s2 + $0x90] sm:$0xff]
        %v1267 = vld [vmem:[%s2 + $0x98] sm:$0xff]
        %v1268 = vld [vmem:[%s2 + $0xa0] sm:$0xff]
        %v1269 = vld [vmem:[%s2 + $0xa8] sm:$0xff]
        %v1270 = vld [vmem:[%s2 + $0xb0] sm:$0xff]
        %v1271 = vld [vmem:[%s2 + $0xb8] sm:$0xff]
        %v1272 = vld [vmem:[%s11 + $0x2] sm:$0x1]
        %v1274 = vlaneseq
        %v1275 = vshrl.u32 %v1274, 7
        %v1276 = vsub.s32 0, %v1275
        %v1277 = vrot.slane %v1272, %v1276
        %vm1279 = vcmask 523264
        %v1281 = vsel %vm1279, %v1247, 0
        %1283 = vmatprep.subr.mxu0 0.0
        %1284 = vmatpush1.msra.mxu0 %v1248
        %1285 = vmatprep.subr.mxu0 0.0
        %1286 = vmatpush1.msra.mxu0 %v1249
        %1287 = vmatprep.subr.mxu0 0.0
        %1288 = vmatpush1.msra.mxu0 %v1250
        %1289 = vmatprep.subr.mxu0 0.0
        %1290 = vmatpush1.msra.mxu0 %v1251
        %1291 = vmatprep.subr.mxu0 0.0
        %1292 = vmatpush1.msra.mxu0 %v1252
        %1293 = vmatprep.subr.mxu0 0.0
        %1294 = vmatpush1.msra.mxu0 %v1253
        %1295 = vmatprep.subr.mxu0 0.0
        %1296 = vmatpush1.msra.mxu0 %v1254
        %1297 = vmatprep.subr.mxu0 0.0
        %1298 = vmatpush1.msra.mxu0 %v1255
        %1299 = vmatprep.subr.mxu0 0.0
        %1300 = vmatpush1.msra.mxu0 %v1256
        %1301 = vmatprep.subr.mxu0 0.0
        %1302 = vmatpush1.msra.mxu0 %v1257
        %1303 = vmatprep.subr.mxu0 0.0
        %1304 = vmatpush1.msra.mxu0 %v1258
        %1305 = vmatprep.subr.mxu0 0.0
        %1306 = vmatpush1.msra.mxu0 %v1259
        %1307 = vmatprep.subr.mxu0 0.0
        %1308 = vmatpush1.msra.mxu0 %v1260
        %1309 = vmatprep.subr.mxu0 0.0
        %1310 = vmatpush1.msra.mxu0 %v1261
        %1311 = vmatprep.subr.mxu0 0.0
        %1312 = vmatpush1.msra.mxu0 %v1262
        %1313 = vmatprep.subr.mxu0 0.0
        %1314 = vmatpush1.msra.mxu0 %v1263
        %1315 = vmatprep.subr.mxu0 0.0
        %1316 = vmatpush1.msra.mxu0 %v1264
        %1317 = vmatprep.subr.mxu0 0.0
        %1318 = vmatpush1.msra.mxu0 %v1265
        %1319 = vmatprep.subr.mxu0 0.0
        %1320 = vmatpush1.msra.mxu0 %v1266
        %1321 = vmatprep.subr.mxu0 0.0
        %1322 = vmatpush1.msra.mxu0 %v1267
        %1323 = vmatprep.subr.mxu0 0.0
        %1324 = vmatpush1.msra.mxu0 %v1268
        %1325 = vmatprep.subr.mxu0 0.0
        %1326 = vmatpush1.msra.mxu0 %v1269
        %1327 = vmatprep.subr.mxu0 0.0
        %1328 = vmatpush1.msra.mxu0 %v1270
        %1329 = vmatprep.subr.mxu0 0.0
        %1330 = vmatpush1.msra.mxu0 %v1271
        %1331 = vmatprep.subr.mxu0 0.0
        %1332 = vmatpush1.msra.mxu0 0.0
        %1333 = vmatprep.subr.mxu0 0.0
        %1334 = vmatpush1.msra.mxu0 0.0
        %1335 = vmatprep.subr.mxu0 0.0
        %1336 = vmatpush1.msra.mxu0 0.0
        %1337 = vmatprep.subr.mxu0 0.0
        %1338 = vmatpush1.msra.mxu0 0.0
        %1339 = vmatprep.subr.mxu0 0.0
        %1340 = vmatpush1.msra.mxu0 0.0
        %1341 = vmatprep.subr.mxu0 0.0
        %1342 = vmatpush1.msra.mxu0 0.0
        %1343 = vmatprep.subr.mxu0 0.0
        %1344 = vmatpush1.msra.mxu0 0.0
        %1345 = vmatprep.subr.mxu0 0.0
        %1346 = vmatpush1.msra.mxu0 0.0
        %1347 = vmatprep.mubr.f32.mxu0 %v1281
        %1348 = vmatmul.mubr.f32.gmra.mrb[0].mxu0 %v1246
        %v1349 = vpop.f32.mrb[0].mxu0
        %v1350 = vadd.f32 %v1277, %v1349
        %v1351 = vpop.f32.mrb[0].mxu0
        %1352 = vdwg.mxu0
        %v1353 = vmax.f32 %v1350, 0.0
        %v1354 = vld [vmem:[%s3] sm:$0xff]
        %v1355 = vld [vmem:[%s3 + $0x8] sm:$0xff]
        %v1356 = vld [vmem:[%s3 + $0x10] sm:$0xff]
        %v1357 = vld [vmem:[%s3 + $0x18] sm:$0xff]
        %v1358 = vld [vmem:[%s3 + $0x20] sm:$0xff]
        %v1359 = vld [vmem:[%s3 + $0x28] sm:$0xff]
        %v1360 = vld [vmem:[%s3 + $0x30] sm:$0xff]
        %v1361 = vld [vmem:[%s3 + $0x38] sm:$0xff]
        %v1362 = vld [vmem:[%s3 + $0x40] sm:$0xff]
        %v1363 = vld [vmem:[%s3 + $0x48] sm:$0xff]
        %v1364 = vld [vmem:[%s3 + $0x50] sm:$0xff]
        %v1365 = vld [vmem:[%s3 + $0x58] sm:$0xff]
        %v1366 = vld [vmem:[%s11 + $0x3] sm:$0x1]
        %v1368 = vlaneseq
        %v1369 = vshrl.u32 %v1368, 7
        %v1370 = vsub.s32 0, %v1369
        %v1371 = vrot.slane %v1366, %v1370
        %vm1373 = vcmask 785408
        %v1375 = vsel %vm1373, %v1353, 0
        %1377 = vmatprep.subr.mxu0 0.0
        %1378 = vmatpush1.msra.mxu0 %v1354
        %1379 = vmatprep.subr.mxu0 0.0
        %1380 = vmatpush1.msra.mxu0 %v1355
        %1381 = vmatprep.subr.mxu0 0.0
        %1382 = vmatpush1.msra.mxu0 %v1356
        %1383 = vmatprep.subr.mxu0 0.0
        %1384 = vmatpush1.msra.mxu0 %v1357
        %1385 = vmatprep.subr.mxu0 0.0
        %1386 = vmatpush1.msra.mxu0 %v1358
        %1387 = vmatprep.subr.mxu0 0.0
        %1388 = vmatpush1.msra.mxu0 %v1359
        %1389 = vmatprep.subr.mxu0 0.0
        %1390 = vmatpush1.msra.mxu0 %v1360
        %1391 = vmatprep.subr.mxu0 0.0
        %1392 = vmatpush1.msra.mxu0 %v1361
        %1393 = vmatprep.subr.mxu0 0.0
        %1394 = vmatpush1.msra.mxu0 %v1362
        %1395 = vmatprep.subr.mxu0 0.0
        %1396 = vmatpush1.msra.mxu0 %v1363
        %1397 = vmatprep.subr.mxu0 0.0
        %1398 = vmatpush1.msra.mxu0 %v1364
        %1399 = vmatprep.subr.mxu0 0.0
        %1400 = vmatpush1.msra.mxu0 %v1365
        %1401 = vmatprep.subr.mxu0 0.0
        %1402 = vmatpush1.msra.mxu0 0.0
        %1403 = vmatprep.subr.mxu0 0.0
        %1404 = vmatpush1.msra.mxu0 0.0
        %1405 = vmatprep.subr.mxu0 0.0
        %1406 = vmatpush1.msra.mxu0 0.0
        %1407 = vmatprep.subr.mxu0 0.0
        %1408 = vmatpush1.msra.mxu0 0.0
        %1409 = vmatprep.subr.mxu0 0.0
        %1410 = vmatpush1.msra.mxu0 0.0
        %1411 = vmatprep.subr.mxu0 0.0
        %1412 = vmatpush1.msra.mxu0 0.0
        %1413 = vmatprep.subr.mxu0 0.0
        %1414 = vmatpush1.msra.mxu0 0.0
        %1415 = vmatprep.subr.mxu0 0.0
        %1416 = vmatpush1.msra.mxu0 0.0
        %1417 = vmatprep.subr.mxu0 0.0
        %1418 = vmatpush1.msra.mxu0 0.0
        %1419 = vmatprep.subr.mxu0 0.0
        %1420 = vmatpush1.msra.mxu0 0.0
        %1421 = vmatprep.subr.mxu0 0.0
        %1422 = vmatpush1.msra.mxu0 0.0
        %1423 = vmatprep.subr.mxu0 0.0
        %1424 = vmatpush1.msra.mxu0 0.0
        %1425 = vmatprep.subr.mxu0 0.0
        %1426 = vmatpush1.msra.mxu0 0.0
        %1427 = vmatprep.subr.mxu0 0.0
        %1428 = vmatpush1.msra.mxu0 0.0
        %1429 = vmatprep.subr.mxu0 0.0
        %1430 = vmatpush1.msra.mxu0 0.0
        %1431 = vmatprep.subr.mxu0 0.0
        %1432 = vmatpush1.msra.mxu0 0.0
        %1433 = vmatprep.subr.mxu0 0.0
        %1434 = vmatpush1.msra.mxu0 0.0
        %1435 = vmatprep.subr.mxu0 0.0
        %1436 = vmatpush1.msra.mxu0 0.0
        %1437 = vmatprep.subr.mxu0 0.0
        %1438 = vmatpush1.msra.mxu0 0.0
        %1439 = vmatprep.subr.mxu0 0.0
        %1440 = vmatpush1.msra.mxu0 0.0
        %1441 = vmatprep.mubr.f32.mxu0 0.0
        %1442 = vmatmul.mubr.f32.gmra.mrb[0].mxu0 %v1375
        %v1443 = vpop.f32.mrb[0].mxu0
        %v1444 = vadd.f32 %v1371, %v1443
        %v1445 = vpop.f32.mrb[0].mxu0
        %1446 = vdwg.mxu0
        %v1447 = vmax.f32 %v1444, 0.0
        %v1448 = vld [vmem:[%s4] sm:$0xff]
        %v1449 = vld [vmem:[%s4 + $0x8] sm:$0xff]
        %v1450 = vld [vmem:[%s4 + $0x10] sm:$0xff]
        %v1451 = vld [vmem:[%s4 + $0x18] sm:$0xff]
        %v1452 = vld [vmem:[%s4 + $0x20] sm:$0xff]
        %v1453 = vld [vmem:[%s4 + $0x28] sm:$0xff]
        %v1454 = vld [vmem:[%s4 + $0x30] sm:$0xff]
        %v1455 = vld [vmem:[%s4 + $0x38] sm:$0xff]
        %v1456 = vld [vmem:[%s4 + $0x40] sm:$0xff]
        %v1457 = vld [vmem:[%s4 + $0x48] sm:$0xff]
        %v1458 = vld [vmem:[%s4 + $0x50] sm:$0x7f]
        %v1459 = vld [vmem:[%s11 + $0x4] sm:$0x1]
        %v1461 = vlaneseq
        %v1462 = vshrl.u32 %v1461, 7
        %v1463 = vsub.s32 0, %v1462
        %v1464 = vrot.slane %v1459, %v1463
        %vm1466 = vcmask 711680
        %v1468 = vsel %vm1466, %v1447, 0
        %vm1470 = vcmask 1046528
        %v1472 = vsel %vm1470, %v1458, 0
        %1474 = vmatprep.subr.mxu0 0.0
        %1475 = vmatpush1.msra.mxu0 %v1448
        %1476 = vmatprep.subr.mxu0 0.0
        %1477 = vmatpush1.msra.mxu0 %v1449
        %1478 = vmatprep.subr.mxu0 0.0
        %1479 = vmatpush1.msra.mxu0 %v1450
        %1480 = vmatprep.subr.mxu0 0.0
        %1481 = vmatpush1.msra.mxu0 %v1451
        %1482 = vmatprep.subr.mxu0 0.0
        %1483 = vmatpush1.msra.mxu0 %v1452
        %1484 = vmatprep.subr.mxu0 0.0
        %1485 = vmatpush1.msra.mxu0 %v1453
        %1486 = vmatprep.subr.mxu0 0.0
        %1487 = vmatpush1.msra.mxu0 %v1454
        %1488 = vmatprep.subr.mxu0 0.0
        %1489 = vmatpush1.msra.mxu0 %v1455
        %1490 = vmatprep.subr.mxu0 0.0
        %1491 = vmatpush1.msra.mxu0 %v1456
        %1492 = vmatprep.subr.mxu0 0.0
        %1493 = vmatpush1.msra.mxu0 %v1457
        %1494 = vmatprep.subr.mxu0 0.0
        %1495 = vmatpush1.msra.mxu0 %v1472
        %1496 = vmatprep.subr.mxu0 0.0
        %1497 = vmatpush1.msra.mxu0 0.0
        %1498 = vmatprep.subr.mxu0 0.0
        %1499 = vmatpush1.msra.mxu0 0.0
        %1500 = vmatprep.subr.mxu0 0.0
        %1501 = vmatpush1.msra.mxu0 0.0
        %1502 = vmatprep.subr.mxu0 0.0
        %1503 = vmatpush1.msra.mxu0 0.0
        %1504 = vmatprep.subr.mxu0 0.0
        %1505 = vmatpush1.msra.mxu0 0.0
        %1506 = vmatprep.subr.mxu0 0.0
        %1507 = vmatpush1.msra.mxu0 0.0
        %1508 = vmatprep.subr.mxu0 0.0
        %1509 = vmatpush1.msra.mxu0 0.0
        %1510 = vmatprep.subr.mxu0 0.0
        %1511 = vmatpush1.msra.mxu0 0.0
        %1512 = vmatprep.subr.mxu0 0.0
        %1513 = vmatpush1.msra.mxu0 0.0
        %1514 = vmatprep.subr.mxu0 0.0
        %1515 = vmatpush1.msra.mxu0 0.0
        %1516 = vmatprep.subr.mxu0 0.0
        %1517 = vmatpush1.msra.mxu0 0.0
        %1518 = vmatprep.subr.mxu0 0.0
        %1519 = vmatpush1.msra.mxu0 0.0
        %1520 = vmatprep.subr.mxu0 0.0
        %1521 = vmatpush1.msra.mxu0 0.0
        %1522 = vmatprep.subr.mxu0 0.0
        %1523 = vmatpush1.msra.mxu0 0.0
        %1524 = vmatprep.subr.mxu0 0.0
        %1525 = vmatpush1.msra.mxu0 0.0
        %1526 = vmatprep.subr.mxu0 0.0
        %1527 = vmatpush1.msra.mxu0 0.0
        %1528 = vmatprep.subr.mxu0 0.0
        %1529 = vmatpush1.msra.mxu0 0.0
        %1530 = vmatprep.subr.mxu0 0.0
        %1531 = vmatpush1.msra.mxu0 0.0
        %1532 = vmatprep.subr.mxu0 0.0
        %1533 = vmatpush1.msra.mxu0 0.0
        %1534 = vmatprep.subr.mxu0 0.0
        %1535 = vmatpush1.msra.mxu0 0.0
        %1536 = vmatprep.subr.mxu0 0.0
        %1537 = vmatpush1.msra.mxu0 0.0
        %1538 = vmatprep.mubr.f32.mxu0 0.0
        %1539 = vmatmul.mubr.f32.gmra.mrb[0].mxu0 %v1468
        %v1540 = vpop.f32.mrb[0].mxu0
        %v1541 = vadd.f32 %v1464, %v1540
        %v1542 = vpop.f32.mrb[0].mxu0
        %1543 = vdwg.mxu0
        %v1544 = vmax.f32 %v1541, 0.0
        %v1545 = vld [vmem:[%s5] sm:$0xff]
        %v1546 = vld [vmem:[%s5 + $0x8] sm:$0xff]
        %v1547 = vld [vmem:[%s5 + $0x10] sm:$0xff]
        %v1548 = vld [vmem:[%s5 + $0x18] sm:$0xff]
        %v1549 = vld [vmem:[%s5 + $0x20] sm:$0xff]
        %v1550 = vld [vmem:[%s5 + $0x28] sm:$0xff]
        %v1551 = vld [vmem:[%s5 + $0x30] sm:$0xff]
        %v1552 = vld [vmem:[%s5 + $0x38] sm:$0xff]
        %v1553 = vld [vmem:[%s5 + $0x40] sm:$0xff]
        %v1554 = vld [vmem:[%s5 + $0x48] sm:$0x7f]
        %v1555 = vld [vmem:[%s11 + $0x5] sm:$0x1]
        %v1557 = vlaneseq
        %v1558 = vshrl.u32 %v1557, 7
        %v1559 = vsub.s32 0, %v1558
        %v1560 = vrot.slane %v1555, %v1559
        %vm1562 = vcmask 646144
        %v1564 = vsel %vm1562, %v1544, 0
        %v1567 = vsel %vm1470, %v1554, 0
        %1569 = vmatprep.subr.mxu0 0.0
        %1570 = vmatpush1.msra.mxu0 %v1545
        %1571 = vmatprep.subr.mxu0 0.0
        %1572 = vmatpush1.msra.mxu0 %v1546
        %1573 = vmatprep.subr.mxu0 0.0
        %1574 = vmatpush1.msra.mxu0 %v1547
        %1575 = vmatprep.subr.mxu0 0.0
        %1576 = vmatpush1.msra.mxu0 %v1548
        %1577 = vmatprep.subr.mxu0 0.0
        %1578 = vmatpush1.msra.mxu0 %v1549
        %1579 = vmatprep.subr.mxu0 0.0
        %1580 = vmatpush1.msra.mxu0 %v1550
        %1581 = vmatprep.subr.mxu0 0.0
        %1582 = vmatpush1.msra.mxu0 %v1551
        %1583 = vmatprep.subr.mxu0 0.0
        %1584 = vmatpush1.msra.mxu0 %v1552
        %1585 = vmatprep.subr.mxu0 0.0
        %1586 = vmatpush1.msra.mxu0 %v1553
        %1587 = vmatprep.subr.mxu0 0.0
        %1588 = vmatpush1.msra.mxu0 %v1567
        %1589 = vmatprep.subr.mxu0 0.0
        %1590 = vmatpush1.msra.mxu0 0.0
        %1591 = vmatprep.subr.mxu0 0.0
        %1592 = vmatpush1.msra.mxu0 0.0
        %1593 = vmatprep.subr.mxu0 0.0
        %1594 = vmatpush1.msra.mxu0 0.0
        %1595 = vmatprep.subr.mxu0 0.0
        %1596 = vmatpush1.msra.mxu0 0.0
        %1597 = vmatprep.subr.mxu0 0.0
        %1598 = vmatpush1.msra.mxu0 0.0
        %1599 = vmatprep.subr.mxu0 0.0
        %1600 = vmatpush1.msra.mxu0 0.0
        %1601 = vmatprep.subr.mxu0 0.0
        %1602 = vmatpush1.msra.mxu0 0.0
        %1603 = vmatprep.subr.mxu0 0.0
        %1604 = vmatpush1.msra.mxu0 0.0
        %1605 = vmatprep.subr.mxu0 0.0
        %1606 = vmatpush1.msra.mxu0 0.0
        %1607 = vmatprep.subr.mxu0 0.0
        %1608 = vmatpush1.msra.mxu0 0.0
        %1609 = vmatprep.subr.mxu0 0.0
        %1610 = vmatpush1.msra.mxu0 0.0
        %1611 = vmatprep.subr.mxu0 0.0
        %1612 = vmatpush1.msra.mxu0 0.0
        %1613 = vmatprep.subr.mxu0 0.0
        %1614 = vmatpush1.msra.mxu0 0.0
        %1615 = vmatprep.subr.mxu0 0.0
        %1616 = vmatpush1.msra.mxu0 0.0
        %1617 = vmatprep.subr.mxu0 0.0
        %1618 = vmatpush1.msra.mxu0 0.0
        %1619 = vmatprep.subr.mxu0 0.0
        %1620 = vmatpush1.msra.mxu0 0.0
        %1621 = vmatprep.subr.mxu0 0.0
        %1622 = vmatpush1.msra.mxu0 0.0
        %1623 = vmatprep.subr.mxu0 0.0
        %1624 = vmatpush1.msra.mxu0 0.0
        %1625 = vmatprep.subr.mxu0 0.0
        %1626 = vmatpush1.msra.mxu0 0.0
        %1627 = vmatprep.subr.mxu0 0.0
        %1628 = vmatpush1.msra.mxu0 0.0
        %1629 = vmatprep.subr.mxu0 0.0
        %1630 = vmatpush1.msra.mxu0 0.0
        %1631 = vmatprep.subr.mxu0 0.0
        %1632 = vmatpush1.msra.mxu0 0.0
        %1633 = vmatprep.mubr.f32.mxu0 0.0
        %1634 = vmatmul.mubr.f32.gmra.mrb[0].mxu0 %v1564
        %v1635 = vpop.f32.mrb[0].mxu0
        %v1636 = vadd.f32 %v1560, %v1635
        %v1637 = vpop.f32.mrb[0].mxu0
        %1638 = vdwg.mxu0
        %v1639 = vld [vmem:[%s6] sm:$0xff]
        %v1640 = vld [vmem:[%s6 + $0x8] sm:$0xff]
        %v1641 = vld [vmem:[%s6 + $0x10] sm:$0xff]
        %v1642 = vld [vmem:[%s6 + $0x18] sm:$0xff]
        %v1643 = vld [vmem:[%s6 + $0x20] sm:$0xff]
        %v1644 = vld [vmem:[%s6 + $0x28] sm:$0xff]
        %v1645 = vld [vmem:[%s6 + $0x30] sm:$0xff]
        %v1646 = vld [vmem:[%s6 + $0x38] sm:$0xff]
        %v1647 = vld [vmem:[%s6 + $0x40] sm:$0xff]
        %v1648 = vld [vmem:[%s11 + $0x6] sm:$0x1]
        %v1650 = vlaneseq
        %v1651 = vshrl.u32 %v1650, 7
        %v1652 = vsub.s32 0, %v1651
        %v1653 = vrot.slane %v1648, %v1652
        %vm1655 = vcmask 588800
        %v1657 = vsel %vm1655, %v1636, 0
        %1659 = vmatprep.subr.mxu0 0.0
        %1660 = vmatpush1.msra.mxu0 %v1639
        %1661 = vmatprep.subr.mxu0 0.0
        %1662 = vmatpush1.msra.mxu0 %v1640
        %1663 = vmatprep.subr.mxu0 0.0
        %1664 = vmatpush1.msra.mxu0 %v1641
        %1665 = vmatprep.subr.mxu0 0.0
        %1666 = vmatpush1.msra.mxu0 %v1642
        %1667 = vmatprep.subr.mxu0 0.0
        %1668 = vmatpush1.msra.mxu0 %v1643
        %1669 = vmatprep.subr.mxu0 0.0
        %1670 = vmatpush1.msra.mxu0 %v1644
        %1671 = vmatprep.subr.mxu0 0.0
        %1672 = vmatpush1.msra.mxu0 %v1645
        %1673 = vmatprep.subr.mxu0 0.0
        %1674 = vmatpush1.msra.mxu0 %v1646
        %1675 = vmatprep.subr.mxu0 0.0
        %1676 = vmatpush1.msra.mxu0 %v1647
        %1677 = vmatprep.subr.mxu0 0.0
        %1678 = vmatpush1.msra.mxu0 0.0
        %1679 = vmatprep.subr.mxu0 0.0
        %1680 = vmatpush1.msra.mxu0 0.0
        %1681 = vmatprep.subr.mxu0 0.0
        %1682 = vmatpush1.msra.mxu0 0.0
        %1683 = vmatprep.subr.mxu0 0.0
        %1684 = vmatpush1.msra.mxu0 0.0
        %1685 = vmatprep.subr.mxu0 0.0
        %1686 = vmatpush1.msra.mxu0 0.0
        %1687 = vmatprep.subr.mxu0 0.0
        %1688 = vmatpush1.msra.mxu0 0.0
        %1689 = vmatprep.subr.mxu0 0.0
        %1690 = vmatpush1.msra.mxu0 0.0
        %1691 = vmatprep.subr.mxu0 0.0
        %1692 = vmatpush1.msra.mxu0 0.0
        %1693 = vmatprep.subr.mxu0 0.0
        %1694 = vmatpush1.msra.mxu0 0.0
        %1695 = vmatprep.subr.mxu0 0.0
        %1696 = vmatpush1.msra.mxu0 0.0
        %1697 = vmatprep.subr.mxu0 0.0
        %1698 = vmatpush1.msra.mxu0 0.0
        %1699 = vmatprep.subr.mxu0 0.0
        %1700 = vmatpush1.msra.mxu0 0.0
        %1701 = vmatprep.subr.mxu0 0.0
        %1702 = vmatpush1.msra.mxu0 0.0
        %1703 = vmatprep.subr.mxu0 0.0
        %1704 = vmatpush1.msra.mxu0 0.0
        %1705 = vmatprep.subr.mxu0 0.0
        %1706 = vmatpush1.msra.mxu0 0.0
        %1707 = vmatprep.subr.mxu0 0.0
        %1708 = vmatpush1.msra.mxu0 0.0
        %1709 = vmatprep.subr.mxu0 0.0
        %1710 = vmatpush1.msra.mxu0 0.0
        %1711 = vmatprep.subr.mxu0 0.0
        %1712 = vmatpush1.msra.mxu0 0.0
        %1713 = vmatprep.subr.mxu0 0.0
        %1714 = vmatpush1.msra.mxu0 0.0
        %1715 = vmatprep.subr.mxu0 0.0
        %1716 = vmatpush1.msra.mxu0 0.0
        %1717 = vmatprep.subr.mxu0 0.0
        %1718 = vmatpush1.msra.mxu0 0.0
        %1719 = vmatprep.subr.mxu0 0.0
        %1720 = vmatpush1.msra.mxu0 0.0
        %1721 = vmatprep.subr.mxu0 0.0
        %1722 = vmatpush1.msra.mxu0 0.0
        %1723 = vmatprep.mubr.f32.mxu0 0.0
        %1724 = vmatmul.mubr.f32.gmra.mrb[0].mxu0 %v1657
        %v1725 = vpop.f32.mrb[0].mxu0
        %v1726 = vadd.f32 %v1653, %v1725
        %v1727 = vpop.f32.mrb[0].mxu0
        %1728 = vdwg.mxu0
        %v1729 = vmax.f32 %v1726, 0.0
        %v1730 = vld [vmem:[%s7] sm:$0xff]
        %v1731 = vld [vmem:[%s7 + $0x8] sm:$0xff]
        %v1732 = vld [vmem:[%s7 + $0x10] sm:$0xff]
        %v1733 = vld [vmem:[%s7 + $0x18] sm:$0xff]
        %v1734 = vld [vmem:[%s7 + $0x20] sm:$0xff]
        %v1735 = vld [vmem:[%s7 + $0x28] sm:$0xff]
        %v1736 = vld [vmem:[%s7 + $0x30] sm:$0xff]
        %v1737 = vld [vmem:[%s7 + $0x38] sm:$0xff]
        %v1738 = vld [vmem:[%s7 + $0x40] sm:$0xff]
        %v1739 = vld [vmem:[%s7 + $0x48] sm:$0x7f]
        %v1740 = vld [vmem:[%s11 + $0x7] sm:$0x1]
        %v1742 = vlaneseq
        %v1743 = vshrl.u32 %v1742, 7
        %v1744 = vsub.s32 0, %v1743
        %v1745 = vrot.slane %v1740, %v1744
        %v1748 = vsel %vm1562, %v1729, 0
        %v1751 = vsel %vm1470, %v1739, 0
        %1753 = vmatprep.subr.mxu0 0.0
        %1754 = vmatpush1.msra.mxu0 %v1730
        %1755 = vmatprep.subr.mxu0 0.0
        %1756 = vmatpush1.msra.mxu0 %v1731
        %1757 = vmatprep.subr.mxu0 0.0
        %1758 = vmatpush1.msra.mxu0 %v1732
        %1759 = vmatprep.subr.mxu0 0.0
        %1760 = vmatpush1.msra.mxu0 %v1733
        %1761 = vmatprep.subr.mxu0 0.0
        %1762 = vmatpush1.msra.mxu0 %v1734
        %1763 = vmatprep.subr.mxu0 0.0
        %1764 = vmatpush1.msra.mxu0 %v1735
        %1765 = vmatprep.subr.mxu0 0.0
        %1766 = vmatpush1.msra.mxu0 %v1736
        %1767 = vmatprep.subr.mxu0 0.0
        %1768 = vmatpush1.msra.mxu0 %v1737
        %1769 = vmatprep.subr.mxu0 0.0
        %1770 = vmatpush1.msra.mxu0 %v1738
        %1771 = vmatprep.subr.mxu0 0.0
        %1772 = vmatpush1.msra.mxu0 %v1751
        %1773 = vmatprep.subr.mxu0 0.0
        %1774 = vmatpush1.msra.mxu0 0.0
        %1775 = vmatprep.subr.mxu0 0.0
        %1776 = vmatpush1.msra.mxu0 0.0
        %1777 = vmatprep.subr.mxu0 0.0
        %1778 = vmatpush1.msra.mxu0 0.0
        %1779 = vmatprep.subr.mxu0 0.0
        %1780 = vmatpush1.msra.mxu0 0.0
        %1781 = vmatprep.subr.mxu0 0.0
        %1782 = vmatpush1.msra.mxu0 0.0
        %1783 = vmatprep.subr.mxu0 0.0
        %1784 = vmatpush1.msra.mxu0 0.0
        %1785 = vmatprep.subr.mxu0 0.0
        %1786 = vmatpush1.msra.mxu0 0.0
        %1787 = vmatprep.subr.mxu0 0.0
        %1788 = vmatpush1.msra.mxu0 0.0
        %1789 = vmatprep.subr.mxu0 0.0
        %1790 = vmatpush1.msra.mxu0 0.0
        %1791 = vmatprep.subr.mxu0 0.0
        %1792 = vmatpush1.msra.mxu0 0.0
        %1793 = vmatprep.subr.mxu0 0.0
        %1794 = vmatpush1.msra.mxu0 0.0
        %1795 = vmatprep.subr.mxu0 0.0
        %1796 = vmatpush1.msra.mxu0 0.0
        %1797 = vmatprep.subr.mxu0 0.0
        %1798 = vmatpush1.msra.mxu0 0.0
        %1799 = vmatprep.subr.mxu0 0.0
        %1800 = vmatpush1.msra.mxu0 0.0
        %1801 = vmatprep.subr.mxu0 0.0
        %1802 = vmatpush1.msra.mxu0 0.0
        %1803 = vmatprep.subr.mxu0 0.0
        %1804 = vmatpush1.msra.mxu0 0.0
        %1805 = vmatprep.subr.mxu0 0.0
        %1806 = vmatpush1.msra.mxu0 0.0
        %1807 = vmatprep.subr.mxu0 0.0
        %1808 = vmatpush1.msra.mxu0 0.0
        %1809 = vmatprep.subr.mxu0 0.0
        %1810 = vmatpush1.msra.mxu0 0.0
        %1811 = vmatprep.subr.mxu0 0.0
        %1812 = vmatpush1.msra.mxu0 0.0
        %1813 = vmatprep.subr.mxu0 0.0
        %1814 = vmatpush1.msra.mxu0 0.0
        %1815 = vmatprep.subr.mxu0 0.0
        %1816 = vmatpush1.msra.mxu0 0.0
        %1817 = vmatprep.mubr.f32.mxu0 0.0
        %1818 = vmatmul.mubr.f32.gmra.mrb[0].mxu0 %v1748
        %v1819 = vpop.f32.mrb[0].mxu0
        %v1820 = vadd.f32 %v1745, %v1819
        %v1821 = vpop.f32.mrb[0].mxu0
        %1822 = vdwg.mxu0
        %v1823 = vmax.f32 %v1820, 0.0
        %v1824 = vld [vmem:[%s8] sm:$0xff]
        %v1825 = vld [vmem:[%s8 + $0x8] sm:$0xff]
        %v1826 = vld [vmem:[%s8 + $0x10] sm:$0xff]
        %v1827 = vld [vmem:[%s8 + $0x18] sm:$0xff]
        %v1828 = vld [vmem:[%s8 + $0x20] sm:$0xff]
        %v1829 = vld [vmem:[%s8 + $0x28] sm:$0xff]
        %v1830 = vld [vmem:[%s8 + $0x30] sm:$0xff]
        %v1831 = vld [vmem:[%s8 + $0x38] sm:$0xff]
        %v1832 = vld [vmem:[%s8 + $0x40] sm:$0xff]
        %v1833 = vld [vmem:[%s8 + $0x48] sm:$0xff]
        %v1834 = vld [vmem:[%s8 + $0x50] sm:$0x7f]
        %v1835 = vld [vmem:[%s11 + $0x8] sm:$0x1]
        %v1837 = vlaneseq
        %v1838 = vshrl.u32 %v1837, 7
        %v1839 = vsub.s32 0, %v1838
        %v1840 = vrot.slane %v1835, %v1839
        %v1843 = vsel %vm1466, %v1823, 0
        %v1846 = vsel %vm1470, %v1834, 0
        %1848 = vmatprep.subr.mxu0 0.0
        %1849 = vmatpush1.msra.mxu0 %v1824
        %1850 = vmatprep.subr.mxu0 0.0
        %1851 = vmatpush1.msra.mxu0 %v1825
        %1852 = vmatprep.subr.mxu0 0.0
        %1853 = vmatpush1.msra.mxu0 %v1826
        %1854 = vmatprep.subr.mxu0 0.0
        %1855 = vmatpush1.msra.mxu0 %v1827
        %1856 = vmatprep.subr.mxu0 0.0
        %1857 = vmatpush1.msra.mxu0 %v1828
        %1858 = vmatprep.subr.mxu0 0.0
        %1859 = vmatpush1.msra.mxu0 %v1829
        %1860 = vmatprep.subr.mxu0 0.0
        %1861 = vmatpush1.msra.mxu0 %v1830
        %1862 = vmatprep.subr.mxu0 0.0
        %1863 = vmatpush1.msra.mxu0 %v1831
        %1864 = vmatprep.subr.mxu0 0.0
        %1865 = vmatpush1.msra.mxu0 %v1832
        %1866 = vmatprep.subr.mxu0 0.0
        %1867 = vmatpush1.msra.mxu0 %v1833
        %1868 = vmatprep.subr.mxu0 0.0
        %1869 = vmatpush1.msra.mxu0 %v1846
        %1870 = vmatprep.subr.mxu0 0.0
        %1871 = vmatpush1.msra.mxu0 0.0
        %1872 = vmatprep.subr.mxu0 0.0
        %1873 = vmatpush1.msra.mxu0 0.0
        %1874 = vmatprep.subr.mxu0 0.0
        %1875 = vmatpush1.msra.mxu0 0.0
        %1876 = vmatprep.subr.mxu0 0.0
        %1877 = vmatpush1.msra.mxu0 0.0
        %1878 = vmatprep.subr.mxu0 0.0
        %1879 = vmatpush1.msra.mxu0 0.0
        %1880 = vmatprep.subr.mxu0 0.0
        %1881 = vmatpush1.msra.mxu0 0.0
        %1882 = vmatprep.subr.mxu0 0.0
        %1883 = vmatpush1.msra.mxu0 0.0
        %1884 = vmatprep.subr.mxu0 0.0
        %1885 = vmatpush1.msra.mxu0 0.0
        %1886 = vmatprep.subr.mxu0 0.0
        %1887 = vmatpush1.msra.mxu0 0.0
        %1888 = vmatprep.subr.mxu0 0.0
        %1889 = vmatpush1.msra.mxu0 0.0
        %1890 = vmatprep.subr.mxu0 0.0
        %1891 = vmatpush1.msra.mxu0 0.0
        %1892 = vmatprep.subr.mxu0 0.0
        %1893 = vmatpush1.msra.mxu0 0.0
        %1894 = vmatprep.subr.mxu0 0.0
        %1895 = vmatpush1.msra.mxu0 0.0
        %1896 = vmatprep.subr.mxu0 0.0
        %1897 = vmatpush1.msra.mxu0 0.0
        %1898 = vmatprep.subr.mxu0 0.0
        %1899 = vmatpush1.msra.mxu0 0.0
        %1900 = vmatprep.subr.mxu0 0.0
        %1901 = vmatpush1.msra.mxu0 0.0
        %1902 = vmatprep.subr.mxu0 0.0
        %1903 = vmatpush1.msra.mxu0 0.0
        %1904 = vmatprep.subr.mxu0 0.0
        %1905 = vmatpush1.msra.mxu0 0.0
        %1906 = vmatprep.subr.mxu0 0.0
        %1907 = vmatpush1.msra.mxu0 0.0
        %1908 = vmatprep.subr.mxu0 0.0
        %1909 = vmatpush1.msra.mxu0 0.0
        %1910 = vmatprep.subr.mxu0 0.0
        %1911 = vmatpush1.msra.mxu0 0.0
        %1912 = vmatprep.mubr.f32.mxu0 0.0
        %1913 = vmatmul.mubr.f32.gmra.mrb[0].mxu0 %v1843
        %v1914 = vpop.f32.mrb[0].mxu0
        %v1915 = vadd.f32 %v1840, %v1914
        %v1916 = vpop.f32.mrb[0].mxu0
        %1917 = vdwg.mxu0
        %v1918 = vld [vmem:[%s9] sm:$0xff]
        %v1919 = vld [vmem:[%s9 + $0x8] sm:$0xff]
        %v1920 = vld [vmem:[%s9 + $0x10] sm:$0xff]
        %v1921 = vld [vmem:[%s9 + $0x18] sm:$0xff]
        %v1922 = vld [vmem:[%s9 + $0x20] sm:$0xff]
        %v1923 = vld [vmem:[%s9 + $0x28] sm:$0xff]
        %v1924 = vld [vmem:[%s9 + $0x30] sm:$0xff]
        %v1925 = vld [vmem:[%s9 + $0x38] sm:$0xff]
        %v1926 = vld [vmem:[%s9 + $0x40] sm:$0xff]
        %v1927 = vld [vmem:[%s9 + $0x48] sm:$0xff]
        %v1928 = vld [vmem:[%s9 + $0x50] sm:$0xff]
        %v1929 = vld [vmem:[%s9 + $0x58] sm:$0xff]
        %v1930 = vld [vmem:[%s9 + $0x60] sm:$0xff]
        %v1931 = vld [vmem:[%s9 + $0x68] sm:$0xff]
        %v1932 = vld [vmem:[%s9 + $0x70] sm:$0xff]
        %v1933 = vld [vmem:[%s9 + $0x78] sm:$0xff]
        %v1934 = vld [vmem:[%s9 + $0x80] sm:$0xff]
        %v1935 = vld [vmem:[%s9 + $0x88] sm:$0xff]
        %v1936 = vld [vmem:[%s9 + $0x90] sm:$0xff]
        %v1937 = vld [vmem:[%s9 + $0x98] sm:$0xff]
        %v1938 = vld [vmem:[%s9 + $0xa0] sm:$0xff]
        %v1939 = vld [vmem:[%s9 + $0xa8] sm:$0xff]
        %v1940 = vld [vmem:[%s9 + $0xb0] sm:$0xff]
        %v1941 = vld [vmem:[%s9 + $0xb8] sm:$0xff]
        %v1942 = vld [vmem:[%s11 + $0x9] sm:$0x3]
        %v1944 = vlaneseq
        %v1945 = vshrl.u32 %v1944, 7
        %v1946 = vsub.s32 0, %v1945
        %v1947 = vrot.slane %v1942, %v1946
        %v1948 = vlaneseq
        %v1949 = vshrl.u32 %v1948, 7
        %v1950 = vsub.s32 1, %v1949
        %v1951 = vrot.slane %v1942, %v1950
        %v1955 = vsel %vm1373, %v1915, 0
        %1957 = vmatprep.subr.mxu0 %v1919
        %1958 = vmatpush1.msra.mxu0 %v1918
        %1959 = vmatprep.subr.mxu0 %v1921
        %1960 = vmatpush1.msra.mxu0 %v1920
        %1961 = vmatprep.subr.mxu0 %v1923
        %1962 = vmatpush1.msra.mxu0 %v1922
        %1963 = vmatprep.subr.mxu0 %v1925
        %1964 = vmatpush1.msra.mxu0 %v1924
        %1965 = vmatprep.subr.mxu0 %v1927
        %1966 = vmatpush1.msra.mxu0 %v1926
        %1967 = vmatprep.subr.mxu0 %v1929
        %1968 = vmatpush1.msra.mxu0 %v1928
        %1969 = vmatprep.subr.mxu0 %v1931
        %1970 = vmatpush1.msra.mxu0 %v1930
        %1971 = vmatprep.subr.mxu0 %v1933
        %1972 = vmatpush1.msra.mxu0 %v1932
        %1973 = vmatprep.subr.mxu0 %v1935
        %1974 = vmatpush1.msra.mxu0 %v1934
        %1975 = vmatprep.subr.mxu0 %v1937
        %1976 = vmatpush1.msra.mxu0 %v1936
        %1977 = vmatprep.subr.mxu0 %v1939
        %1978 = vmatpush1.msra.mxu0 %v1938
        %1979 = vmatprep.subr.mxu0 %v1941
        %1980 = vmatpush1.msra.mxu0 %v1940
        %1981 = vmatprep.subr.mxu0 0.0
        %1982 = vmatpush1.msra.mxu0 0.0
        %1983 = vmatprep.subr.mxu0 0.0
        %1984 = vmatpush1.msra.mxu0 0.0
        %1985 = vmatprep.subr.mxu0 0.0
        %1986 = vmatpush1.msra.mxu0 0.0
        %1987 = vmatprep.subr.mxu0 0.0
        %1988 = vmatpush1.msra.mxu0 0.0
        %1989 = vmatprep.subr.mxu0 0.0
        %1990 = vmatpush1.msra.mxu0 0.0
        %1991 = vmatprep.subr.mxu0 0.0
        %1992 = vmatpush1.msra.mxu0 0.0
        %1993 = vmatprep.subr.mxu0 0.0
        %1994 = vmatpush1.msra.mxu0 0.0
        %1995 = vmatprep.subr.mxu0 0.0
        %1996 = vmatpush1.msra.mxu0 0.0
        %1997 = vmatprep.subr.mxu0 0.0
        %1998 = vmatpush1.msra.mxu0 0.0
        %1999 = vmatprep.subr.mxu0 0.0
        %2000 = vmatpush1.msra.mxu0 0.0
        %2001 = vmatprep.subr.mxu0 0.0
        %2002 = vmatpush1.msra.mxu0 0.0
        %2003 = vmatprep.subr.mxu0 0.0
        %2004 = vmatpush1.msra.mxu0 0.0
        %2005 = vmatprep.subr.mxu0 0.0
        %2006 = vmatpush1.msra.mxu0 0.0
        %2007 = vmatprep.subr.mxu0 0.0
        %2008 = vmatpush1.msra.mxu0 0.0
        %2009 = vmatprep.subr.mxu0 0.0
        %2010 = vmatpush1.msra.mxu0 0.0
        %2011 = vmatprep.subr.mxu0 0.0
        %2012 = vmatpush1.msra.mxu0 0.0
        %2013 = vmatprep.subr.mxu0 0.0
        %2014 = vmatpush1.msra.mxu0 0.0
        %2015 = vmatprep.subr.mxu0 0.0
        %2016 = vmatpush1.msra.mxu0 0.0
        %2017 = vmatprep.subr.mxu0 0.0
        %2018 = vmatpush1.msra.mxu0 0.0
        %2019 = vmatprep.subr.mxu0 0.0
        %2020 = vmatpush1.msra.mxu0 0.0
        %2021 = vmatprep.mubr.f32.mxu0 0.0
        %2022 = vmatmul.mubr.f32.gmra.mrb[0].mxu0 %v1955
        %v2023 = vpop.f32.mrb[0].mxu0
        %v2024 = vadd.f32 %v1947, %v2023
        %v2025 = vpop.f32.mrb[0].mxu0
        %v2026 = vadd.f32 %v1951, %v2025
        %2027 = vdwg.mxu0
        %v2028 = vmax.f32 %v2024, 0.0
        %v2029 = vmax.f32 %v2026, 0.0
        %v2030 = vld [vmem:[%s10] sm:$0xff]
        %v2031 = vld [vmem:[%s10 + $0x8] sm:$0xff]
        %v2032 = vld [vmem:[%s10 + $0x10] sm:$0xff]
        %v2033 = vld [vmem:[%s10 + $0x18] sm:$0xff]
        %v2034 = vld [vmem:[%s10 + $0x20] sm:$0xff]
        %v2035 = vld [vmem:[%s10 + $0x28] sm:$0xff]
        %v2036 = vld [vmem:[%s10 + $0x30] sm:$0xff]
        %v2037 = vld [vmem:[%s10 + $0x38] sm:$0xff]
        %v2038 = vld [vmem:[%s10 + $0x40] sm:$0xff]
        %v2039 = vld [vmem:[%s10 + $0x48] sm:$0xff]
        %v2040 = vld [vmem:[%s10 + $0x50] sm:$0xff]
        %v2041 = vld [vmem:[%s10 + $0x58] sm:$0xff]
        %v2042 = vld [vmem:[%s10 + $0x60] sm:$0xff]
        %v2043 = vld [vmem:[%s10 + $0x68] sm:$0xff]
        %v2044 = vld [vmem:[%s10 + $0x70] sm:$0xff]
        %v2045 = vld [vmem:[%s10 + $0x78] sm:$0xff]
        %v2046 = vld [vmem:[%s10 + $0x80] sm:$0xff]
        %v2047 = vld [vmem:[%s10 + $0x88] sm:$0xff]
        %v2048 = vld [vmem:[%s10 + $0x90] sm:$0xff]
        %v2049 = vld [vmem:[%s10 + $0x98] sm:$0xff]
        %v2050 = vld [vmem:[%s10 + $0xa0] sm:$0xff]
        %v2051 = vld [vmem:[%s10 + $0xa8] sm:$0xff]
        %v2052 = vld [vmem:[%s10 + $0xb0] sm:$0xff]
        %v2053 = vld [vmem:[%s10 + $0xb8] sm:$0xff]
        %v2054 = vld [vmem:[%s10 + $0xc0] sm:$0xff]
        %v2055 = vld [vmem:[%s10 + $0xc8] sm:$0xff]
        %v2056 = vld [vmem:[%s10 + $0xd0] sm:$0xff]
        %v2057 = vld [vmem:[%s10 + $0xd8] sm:$0xff]
        %v2058 = vld [vmem:[%s10 + $0xe0] sm:$0xff]
        %v2059 = vld [vmem:[%s10 + $0xe8] sm:$0xff]
        %v2060 = vld [vmem:[%s10 + $0xf0] sm:$0xff]
        %v2061 = vld [vmem:[%s10 + $0xf8] sm:$0xff]
        %v2062 = vld [vmem:[%s10 + $0x100] sm:$0xff]
        %v2063 = vld [vmem:[%s10 + $0x108] sm:$0xff]
        %v2064 = vld [vmem:[%s10 + $0x110] sm:$0xff]
        %v2065 = vld [vmem:[%s10 + $0x118] sm:$0xff]
        %v2066 = vld [vmem:[%s10 + $0x120] sm:$0xff]
        %v2067 = vld [vmem:[%s10 + $0x128] sm:$0xff]
        %v2068 = vld [vmem:[%s10 + $0x130] sm:$0xff]
        %v2069 = vld [vmem:[%s10 + $0x138] sm:$0xff]
        %v2070 = vld [vmem:[%s10 + $0x140] sm:$0xff]
        %v2071 = vld [vmem:[%s10 + $0x148] sm:$0xff]
        %v2072 = vld [vmem:[%s10 + $0x150] sm:$0xff]
        %v2073 = vld [vmem:[%s10 + $0x158] sm:$0xff]
        %v2074 = vld [vmem:[%s10 + $0x160] sm:$0xff]
        %v2075 = vld [vmem:[%s10 + $0x168] sm:$0xff]
        %v2076 = vld [vmem:[%s10 + $0x170] sm:$0xff]
        %v2077 = vld [vmem:[%s10 + $0x178] sm:$0xff]
        %v2078 = vld [vmem:[%s10 + $0x180] sm:$0xff]
        %v2079 = vld [vmem:[%s10 + $0x188] sm:$0xff]
        %v2080 = vld [vmem:[%s10 + $0x190] sm:$0xff]
        %v2081 = vld [vmem:[%s10 + $0x198] sm:$0xff]
        %v2082 = vld [vmem:[%s10 + $0x1a0] sm:$0xff]
        %v2083 = vld [vmem:[%s10 + $0x1a8] sm:$0xff]
        %v2084 = vld [vmem:[%s10 + $0x1b0] sm:$0xff]
        %v2085 = vld [vmem:[%s10 + $0x1b8] sm:$0xff]
        %v2086 = vld [vmem:[%s10 + $0x1c0] sm:$0xff]
        %v2087 = vld [vmem:[%s10 + $0x1c8] sm:$0xff]
        %v2088 = vld [vmem:[%s10 + $0x1d0] sm:$0xff]
        %v2089 = vld [vmem:[%s10 + $0x1d8] sm:$0xff]
        %v2090 = vld [vmem:[%s10 + $0x1e0] sm:$0xff]
        %v2091 = vld [vmem:[%s10 + $0x1e8] sm:$0xff]
        %v2092 = vld [vmem:[%s10 + $0x1f0] sm:$0xff]
        %v2093 = vld [vmem:[%s10 + $0x1f8] sm:$0xff]
        %v2094 = vld [vmem:[%s10 + $0x200] sm:$0xff]
        %v2095 = vld [vmem:[%s10 + $0x208] sm:$0xff]
        %v2096 = vld [vmem:[%s10 + $0x210] sm:$0xff]
        %v2097 = vld [vmem:[%s10 + $0x218] sm:$0xff]
        %v2098 = vld [vmem:[%s10 + $0x220] sm:$0xff]
        %v2099 = vld [vmem:[%s10 + $0x228] sm:$0xff]
        %v2100 = vld [vmem:[%s10 + $0x230] sm:$0xff]
        %v2101 = vld [vmem:[%s10 + $0x238] sm:$0xff]
        %v2102 = vld [vmem:[%s10 + $0x240] sm:$0xff]
        %v2103 = vld [vmem:[%s10 + $0x248] sm:$0xff]
        %v2104 = vld [vmem:[%s10 + $0x250] sm:$0xff]
        %v2105 = vld [vmem:[%s10 + $0x258] sm:$0xff]
        %v2106 = vld [vmem:[%s10 + $0x260] sm:$0xff]
        %v2107 = vld [vmem:[%s10 + $0x268] sm:$0xff]
        %v2108 = vld [vmem:[%s10 + $0x270] sm:$0xff]
        %v2109 = vld [vmem:[%s10 + $0x278] sm:$0xff]
        %v2110 = vld [vmem:[%s10 + $0x280] sm:$0xff]
        %v2111 = vld [vmem:[%s10 + $0x288] sm:$0xff]
        %v2112 = vld [vmem:[%s10 + $0x290] sm:$0xff]
        %v2113 = vld [vmem:[%s10 + $0x298] sm:$0xff]
        %v2114 = vld [vmem:[%s10 + $0x2a0] sm:$0xff]
        %v2115 = vld [vmem:[%s10 + $0x2a8] sm:$0xff]
        %v2116 = vld [vmem:[%s10 + $0x2b0] sm:$0xff]
        %v2117 = vld [vmem:[%s10 + $0x2b8] sm:$0xff]
        %v2118 = vld [vmem:[%s10 + $0x2c0] sm:$0xff]
        %v2119 = vld [vmem:[%s10 + $0x2c8] sm:$0xff]
        %v2120 = vld [vmem:[%s10 + $0x2d0] sm:$0xff]
        %v2121 = vld [vmem:[%s10 + $0x2d8] sm:$0xff]
        %v2122 = vld [vmem:[%s10 + $0x2e0] sm:$0xff]
        %v2123 = vld [vmem:[%s10 + $0x2e8] sm:$0xff]
        %v2124 = vld [vmem:[%s10 + $0x2f0] sm:$0xff]
        %v2125 = vld [vmem:[%s10 + $0x2f8] sm:$0xff]
        %v2126 = vld [vmem:[%s10 + $0x300] sm:$0xff]
        %v2127 = vld [vmem:[%s10 + $0x308] sm:$0xff]
        %v2128 = vld [vmem:[%s10 + $0x310] sm:$0xff]
        %v2129 = vld [vmem:[%s10 + $0x318] sm:$0xff]
        %v2130 = vld [vmem:[%s10 + $0x320] sm:$0xff]
        %v2131 = vld [vmem:[%s10 + $0x328] sm:$0xff]
        %v2132 = vld [vmem:[%s10 + $0x330] sm:$0xff]
        %v2133 = vld [vmem:[%s10 + $0x338] sm:$0xff]
        %v2134 = vld [vmem:[%s10 + $0x340] sm:$0xff]
        %v2135 = vld [vmem:[%s10 + $0x348] sm:$0xff]
        %v2136 = vld [vmem:[%s10 + $0x350] sm:$0xff]
        %v2137 = vld [vmem:[%s10 + $0x358] sm:$0xff]
        %v2138 = vld [vmem:[%s10 + $0x360] sm:$0xff]
        %v2139 = vld [vmem:[%s10 + $0x368] sm:$0xff]
        %v2140 = vld [vmem:[%s10 + $0x370] sm:$0xff]
        %v2141 = vld [vmem:[%s10 + $0x378] sm:$0xff]
        %v2142 = vld [vmem:[%s10 + $0x380] sm:$0xff]
        %v2143 = vld [vmem:[%s10 + $0x388] sm:$0xff]
        %v2144 = vld [vmem:[%s10 + $0x390] sm:$0xff]
        %v2145 = vld [vmem:[%s10 + $0x398] sm:$0xff]
        %v2146 = vld [vmem:[%s10 + $0x3a0] sm:$0xff]
        %v2147 = vld [vmem:[%s10 + $0x3a8] sm:$0xff]
        %v2148 = vld [vmem:[%s10 + $0x3b0] sm:$0xff]
        %v2149 = vld [vmem:[%s10 + $0x3b8] sm:$0xff]
        %v2150 = vld [vmem:[%s10 + $0x3c0] sm:$0xff]
        %v2151 = vld [vmem:[%s10 + $0x3c8] sm:$0xff]
        %v2152 = vld [vmem:[%s10 + $0x3d0] sm:$0xff]
        %v2153 = vld [vmem:[%s10 + $0x3d8] sm:$0xff]
        %v2154 = vld [vmem:[%s10 + $0x3e0] sm:$0xff]
        %v2155 = vld [vmem:[%s10 + $0x3e8] sm:$0xff]
        %v2156 = vld [vmem:[%s10 + $0x3f0] sm:$0xff]
        %v2157 = vld [vmem:[%s10 + $0x3f8] sm:$0xff]
        %v2158 = vld [vmem:[%s10 + $0x400] sm:$0xff]
        %v2159 = vld [vmem:[%s10 + $0x408] sm:$0xff]
        %v2160 = vld [vmem:[%s10 + $0x410] sm:$0xff]
        %v2161 = vld [vmem:[%s10 + $0x418] sm:$0xff]
        %v2162 = vld [vmem:[%s10 + $0x420] sm:$0xff]
        %v2163 = vld [vmem:[%s10 + $0x428] sm:$0xff]
        %v2164 = vld [vmem:[%s10 + $0x430] sm:$0xff]
        %v2165 = vld [vmem:[%s10 + $0x438] sm:$0xff]
        %v2166 = vld [vmem:[%s10 + $0x440] sm:$0xff]
        %v2167 = vld [vmem:[%s10 + $0x448] sm:$0xff]
        %v2168 = vld [vmem:[%s10 + $0x450] sm:$0xff]
        %v2169 = vld [vmem:[%s10 + $0x458] sm:$0xff]
        %v2170 = vld [vmem:[%s10 + $0x460] sm:$0xff]
        %v2171 = vld [vmem:[%s10 + $0x468] sm:$0xff]
        %v2172 = vld [vmem:[%s10 + $0x470] sm:$0xff]
        %v2173 = vld [vmem:[%s10 + $0x478] sm:$0xff]
        %v2174 = vld [vmem:[%s10 + $0x480] sm:$0xff]
        %v2175 = vld [vmem:[%s10 + $0x488] sm:$0xff]
        %v2176 = vld [vmem:[%s10 + $0x490] sm:$0xff]
        %v2177 = vld [vmem:[%s10 + $0x498] sm:$0xff]
        %v2178 = vld [vmem:[%s10 + $0x4a0] sm:$0xff]
        %v2179 = vld [vmem:[%s10 + $0x4a8] sm:$0xff]
        %v2180 = vld [vmem:[%s10 + $0x4b0] sm:$0xff]
        %v2181 = vld [vmem:[%s10 + $0x4b8] sm:$0xff]
        %v2182 = vld [vmem:[%s10 + $0x4c0] sm:$0xff]
        %v2183 = vld [vmem:[%s10 + $0x4c8] sm:$0xff]
        %v2184 = vld [vmem:[%s10 + $0x4d0] sm:$0xff]
        %v2185 = vld [vmem:[%s10 + $0x4d8] sm:$0xff]
        %v2186 = vld [vmem:[%s10 + $0x4e0] sm:$0xff]
        %v2187 = vld [vmem:[%s10 + $0x4e8] sm:$0xff]
        %v2188 = vld [vmem:[%s10 + $0x4f0] sm:$0xff]
        %v2189 = vld [vmem:[%s10 + $0x4f8] sm:$0xff]
        %v2190 = vld [vmem:[%s10 + $0x500] sm:$0xff]
        %v2191 = vld [vmem:[%s10 + $0x508] sm:$0xff]
        %v2192 = vld [vmem:[%s10 + $0x510] sm:$0xff]
        %v2193 = vld [vmem:[%s10 + $0x518] sm:$0xff]
        %v2194 = vld [vmem:[%s10 + $0x520] sm:$0xff]
        %v2195 = vld [vmem:[%s10 + $0x528] sm:$0xff]
        %v2196 = vld [vmem:[%s10 + $0x530] sm:$0xff]
        %v2197 = vld [vmem:[%s10 + $0x538] sm:$0xff]
        %v2198 = vld [vmem:[%s10 + $0x540] sm:$0xff]
        %v2199 = vld [vmem:[%s10 + $0x548] sm:$0xff]
        %v2200 = vld [vmem:[%s10 + $0x550] sm:$0xff]
        %v2201 = vld [vmem:[%s10 + $0x558] sm:$0xff]
        %v2202 = vld [vmem:[%s10 + $0x560] sm:$0xff]
        %v2203 = vld [vmem:[%s10 + $0x568] sm:$0xff]
        %v2204 = vld [vmem:[%s10 + $0x570] sm:$0xff]
        %v2205 = vld [vmem:[%s10 + $0x578] sm:$0xff]
        %v2206 = vld [vmem:[%s10 + $0x580] sm:$0xff]
        %v2207 = vld [vmem:[%s10 + $0x588] sm:$0xff]
        %v2208 = vld [vmem:[%s10 + $0x590] sm:$0xff]
        %v2209 = vld [vmem:[%s10 + $0x598] sm:$0xff]
        %v2210 = vld [vmem:[%s10 + $0x5a0] sm:$0xff]
        %v2211 = vld [vmem:[%s10 + $0x5a8] sm:$0xff]
        %v2212 = vld [vmem:[%s10 + $0x5b0] sm:$0xff]
        %v2213 = vld [vmem:[%s10 + $0x5b8] sm:$0xff]
        %v2214 = vld [vmem:[%s10 + $0x5c0] sm:$0xff]
        %v2215 = vld [vmem:[%s10 + $0x5c8] sm:$0xff]
        %v2216 = vld [vmem:[%s10 + $0x5d0] sm:$0xff]
        %v2217 = vld [vmem:[%s10 + $0x5d8] sm:$0xff]
        %v2218 = vld [vmem:[%s10 + $0x5e0] sm:$0xff]
        %v2219 = vld [vmem:[%s10 + $0x5e8] sm:$0xff]
        %v2220 = vld [vmem:[%s10 + $0x5f0] sm:$0xff]
        %v2221 = vld [vmem:[%s10 + $0x5f8] sm:$0xff]
        %v2222 = vld [vmem:[%s10 + $0x600] sm:$0xff]
        %v2223 = vld [vmem:[%s10 + $0x608] sm:$0xff]
        %v2224 = vld [vmem:[%s10 + $0x610] sm:$0xff]
        %v2225 = vld [vmem:[%s10 + $0x618] sm:$0xff]
        %v2226 = vld [vmem:[%s10 + $0x620] sm:$0xff]
        %v2227 = vld [vmem:[%s10 + $0x628] sm:$0xff]
        %v2228 = vld [vmem:[%s10 + $0x630] sm:$0xff]
        %v2229 = vld [vmem:[%s10 + $0x638] sm:$0xff]
        %v2230 = vld [vmem:[%s10 + $0x640] sm:$0xff]
        %v2231 = vld [vmem:[%s10 + $0x648] sm:$0xff]
        %v2232 = vld [vmem:[%s10 + $0x650] sm:$0xff]
        %v2233 = vld [vmem:[%s10 + $0x658] sm:$0xff]
        %v2234 = vld [vmem:[%s10 + $0x660] sm:$0xff]
        %v2235 = vld [vmem:[%s10 + $0x668] sm:$0xff]
        %v2236 = vld [vmem:[%s10 + $0x670] sm:$0xff]
        %v2237 = vld [vmem:[%s10 + $0x678] sm:$0xff]
        %v2238 = vld [vmem:[%s10 + $0x680] sm:$0xff]
        %v2239 = vld [vmem:[%s10 + $0x688] sm:$0xff]
        %v2240 = vld [vmem:[%s10 + $0x690] sm:$0xff]
        %v2241 = vld [vmem:[%s10 + $0x698] sm:$0xff]
        %v2242 = vld [vmem:[%s10 + $0x6a0] sm:$0xff]
        %v2243 = vld [vmem:[%s10 + $0x6a8] sm:$0xff]
        %v2244 = vld [vmem:[%s10 + $0x6b0] sm:$0xff]
        %v2245 = vld [vmem:[%s10 + $0x6b8] sm:$0xff]
        %v2246 = vld [vmem:[%s10 + $0x6c0] sm:$0xff]
        %v2247 = vld [vmem:[%s10 + $0x6c8] sm:$0xff]
        %v2248 = vld [vmem:[%s10 + $0x6d0] sm:$0xff]
        %v2249 = vld [vmem:[%s10 + $0x6d8] sm:$0xff]
        %v2250 = vld [vmem:[%s10 + $0x6e0] sm:$0xff]
        %v2251 = vld [vmem:[%s10 + $0x6e8] sm:$0xff]
        %v2252 = vld [vmem:[%s10 + $0x6f0] sm:$0xff]
        %v2253 = vld [vmem:[%s10 + $0x6f8] sm:$0xff]
        %v2254 = vld [vmem:[%s10 + $0x700] sm:$0xff]
        %v2255 = vld [vmem:[%s10 + $0x708] sm:$0xff]
        %v2256 = vld [vmem:[%s10 + $0x710] sm:$0xff]
        %v2257 = vld [vmem:[%s10 + $0x718] sm:$0xff]
        %v2258 = vld [vmem:[%s10 + $0x720] sm:$0xff]
        %v2259 = vld [vmem:[%s10 + $0x728] sm:$0xff]
        %v2260 = vld [vmem:[%s10 + $0x730] sm:$0xff]
        %v2261 = vld [vmem:[%s10 + $0x738] sm:$0xff]
        %v2262 = vld [vmem:[%s10 + $0x740] sm:$0xff]
        %v2263 = vld [vmem:[%s10 + $0x748] sm:$0xff]
        %v2264 = vld [vmem:[%s10 + $0x750] sm:$0xff]
        %v2265 = vld [vmem:[%s10 + $0x758] sm:$0xff]
        %v2266 = vld [vmem:[%s10 + $0x760] sm:$0xff]
        %v2267 = vld [vmem:[%s10 + $0x768] sm:$0xff]
        %v2268 = vld [vmem:[%s10 + $0x770] sm:$0xff]
        %v2269 = vld [vmem:[%s10 + $0x778] sm:$0xff]
        %v2270 = vld [vmem:[%s10 + $0x780] sm:$0xff]
        %v2271 = vld [vmem:[%s10 + $0x788] sm:$0xff]
        %v2272 = vld [vmem:[%s10 + $0x790] sm:$0xff]
        %v2273 = vld [vmem:[%s10 + $0x798] sm:$0xff]
        %v2274 = vld [vmem:[%s10 + $0x7a0] sm:$0xff]
        %v2275 = vld [vmem:[%s10 + $0x7a8] sm:$0xff]
        %v2276 = vld [vmem:[%s10 + $0x7b0] sm:$0xff]
        %v2277 = vld [vmem:[%s10 + $0x7b8] sm:$0xff]
        %v2278 = vld [vmem:[%s10 + $0x7c0] sm:$0xff]
        %v2279 = vld [vmem:[%s10 + $0x7c8] sm:$0xff]
        %v2280 = vld [vmem:[%s10 + $0x7d0] sm:$0xff]
        %v2281 = vld [vmem:[%s10 + $0x7d8] sm:$0xff]
        %v2282 = vld [vmem:[%s10 + $0x7e0] sm:$0xff]
        %v2283 = vld [vmem:[%s10 + $0x7e8] sm:$0xff]
        %v2284 = vld [vmem:[%s10 + $0x7f0] sm:$0xff]
        %v2285 = vld [vmem:[%s10 + $0x7f8] sm:$0xff]
        %v2286 = vld [vmem:[%s10 + $0x800] sm:$0xff]
        %v2287 = vld [vmem:[%s10 + $0x808] sm:$0xff]
        %v2288 = vld [vmem:[%s10 + $0x810] sm:$0xff]
        %v2289 = vld [vmem:[%s10 + $0x818] sm:$0xff]
        %v2290 = vld [vmem:[%s10 + $0x820] sm:$0xff]
        %v2291 = vld [vmem:[%s10 + $0x828] sm:$0xff]
        %v2292 = vld [vmem:[%s10 + $0x830] sm:$0xff]
        %v2293 = vld [vmem:[%s10 + $0x838] sm:$0xff]
        %v2294 = vld [vmem:[%s10 + $0x840] sm:$0xff]
        %v2295 = vld [vmem:[%s10 + $0x848] sm:$0xff]
        %v2296 = vld [vmem:[%s10 + $0x850] sm:$0xff]
        %v2297 = vld [vmem:[%s10 + $0x858] sm:$0xff]
        %v2298 = vld [vmem:[%s10 + $0x860] sm:$0xff]
        %v2299 = vld [vmem:[%s10 + $0x868] sm:$0xff]
        %v2300 = vld [vmem:[%s10 + $0x870] sm:$0xff]
        %v2301 = vld [vmem:[%s10 + $0x878] sm:$0xff]
        %v2302 = vld [vmem:[%s10 + $0x880] sm:$0xff]
        %v2303 = vld [vmem:[%s10 + $0x888] sm:$0xff]
        %v2304 = vld [vmem:[%s10 + $0x890] sm:$0xff]
        %v2305 = vld [vmem:[%s10 + $0x898] sm:$0xff]
        %v2306 = vld [vmem:[%s10 + $0x8a0] sm:$0xff]
        %v2307 = vld [vmem:[%s10 + $0x8a8] sm:$0xff]
        %v2308 = vld [vmem:[%s10 + $0x8b0] sm:$0xff]
        %v2309 = vld [vmem:[%s10 + $0x8b8] sm:$0xff]
        %v2310 = vld [vmem:[%s10 + $0x8c0] sm:$0xff]
        %v2311 = vld [vmem:[%s10 + $0x8c8] sm:$0xff]
        %v2312 = vld [vmem:[%s10 + $0x8d0] sm:$0xff]
        %v2313 = vld [vmem:[%s10 + $0x8d8] sm:$0xff]
        %v2314 = vld [vmem:[%s10 + $0x8e0] sm:$0xff]
        %v2315 = vld [vmem:[%s10 + $0x8e8] sm:$0xff]
        %v2316 = vld [vmem:[%s10 + $0x8f0] sm:$0xff]
        %v2317 = vld [vmem:[%s10 + $0x8f8] sm:$0xff]
        %v2318 = vld [vmem:[%s11 + $0xb] sm:$0xff]
        %v2319 = vld [vmem:[%s11 + $0x13] sm:$0xf]
        %v2322 = vlaneseq
        %v2323 = vshrl.u32 %v2322, 7
        %v2324 = vsub.s32 0, %v2323
        %v2325 = vrot.slane %v2318, %v2324
        %v2326 = vlaneseq
        %v2327 = vshrl.u32 %v2326, 7
        %v2328 = vsub.s32 1, %v2327
        %v2329 = vrot.slane %v2318, %v2328
        %v2330 = vlaneseq
        %v2331 = vshrl.u32 %v2330, 7
        %v2332 = vsub.s32 2, %v2331
        %v2333 = vrot.slane %v2318, %v2332
        %v2334 = vlaneseq
        %v2335 = vshrl.u32 %v2334, 7
        %v2336 = vsub.s32 3, %v2335
        %v2337 = vrot.slane %v2318, %v2336
        %v2338 = vlaneseq
        %v2339 = vshrl.u32 %v2338, 7
        %v2340 = vsub.s32 4, %v2339
        %v2341 = vrot.slane %v2318, %v2340
        %v2342 = vlaneseq
        %v2343 = vshrl.u32 %v2342, 7
        %v2344 = vsub.s32 5, %v2343
        %v2345 = vrot.slane %v2318, %v2344
        %v2346 = vlaneseq
        %v2347 = vshrl.u32 %v2346, 7
        %v2348 = vsub.s32 6, %v2347
        %v2349 = vrot.slane %v2318, %v2348
        %v2350 = vlaneseq
        %v2351 = vshrl.u32 %v2350, 7
        %v2352 = vsub.s32 7, %v2351
        %v2353 = vrot.slane %v2318, %v2352
        %v2354 = vlaneseq
        %v2355 = vshrl.u32 %v2354, 7
        %v2356 = vsub.s32 0, %v2355
        %v2357 = vrot.slane %v2319, %v2356
        %v2358 = vlaneseq
        %v2359 = vshrl.u32 %v2358, 7
        %v2360 = vsub.s32 1, %v2359
        %v2361 = vrot.slane %v2319, %v2360
        %v2362 = vlaneseq
        %v2363 = vshrl.u32 %v2362, 7
        %v2364 = vsub.s32 2, %v2363
        %v2365 = vrot.slane %v2319, %v2364
        %v2366 = vlaneseq
        %v2367 = vshrl.u32 %v2366, 7
        %v2368 = vsub.s32 3, %v2367
        %v2369 = vrot.slane %v2319, %v2368
        %v2383 = vsel %vm1279, %v2029, 0
        %2385 = vmatprep.subr.mxu0 %v2031
        %2386 = vmatpush1.msra.mxu0 %v2030
        %2387 = vmatprep.subr.mxu0 %v2043
        %2388 = vmatpush1.msra.mxu0 %v2042
        %2389 = vmatprep.subr.mxu0 %v2055
        %2390 = vmatpush1.msra.mxu0 %v2054
        %2391 = vmatprep.subr.mxu0 %v2067
        %2392 = vmatpush1.msra.mxu0 %v2066
        %2393 = vmatprep.subr.mxu0 %v2079
        %2394 = vmatpush1.msra.mxu0 %v2078
        %2395 = vmatprep.subr.mxu0 %v2091
        %2396 = vmatpush1.msra.mxu0 %v2090
        %2397 = vmatprep.subr.mxu0 %v2103
        %2398 = vmatpush1.msra.mxu0 %v2102
        %2399 = vmatprep.subr.mxu0 %v2115
        %2400 = vmatpush1.msra.mxu0 %v2114
        %2401 = vmatprep.subr.mxu0 %v2127
        %2402 = vmatpush1.msra.mxu0 %v2126
        %2403 = vmatprep.subr.mxu0 %v2139
        %2404 = vmatpush1.msra.mxu0 %v2138
        %2405 = vmatprep.subr.mxu0 %v2151
        %2406 = vmatpush1.msra.mxu0 %v2150
        %2407 = vmatprep.subr.mxu0 %v2163
        %2408 = vmatpush1.msra.mxu0 %v2162
        %2409 = vmatprep.subr.mxu0 %v2175
        %2410 = vmatpush1.msra.mxu0 %v2174
        %2411 = vmatprep.subr.mxu0 %v2187
        %2412 = vmatpush1.msra.mxu0 %v2186
        %2413 = vmatprep.subr.mxu0 %v2199
        %2414 = vmatpush1.msra.mxu0 %v2198
        %2415 = vmatprep.subr.mxu0 %v2211
        %2416 = vmatpush1.msra.mxu0 %v2210
        %2417 = vmatprep.subr.mxu0 %v2223
        %2418 = vmatpush1.msra.mxu0 %v2222
        %2419 = vmatprep.subr.mxu0 %v2235
        %2420 = vmatpush1.msra.mxu0 %v2234
        %2421 = vmatprep.subr.mxu0 %v2247
        %2422 = vmatpush1.msra.mxu0 %v2246
        %2423 = vmatprep.subr.mxu0 %v2259
        %2424 = vmatpush1.msra.mxu0 %v2258
        %2425 = vmatprep.subr.mxu0 %v2271
        %2426 = vmatpush1.msra.mxu0 %v2270
        %2427 = vmatprep.subr.mxu0 %v2283
        %2428 = vmatpush1.msra.mxu0 %v2282
        %2429 = vmatprep.subr.mxu0 %v2295
        %2430 = vmatpush1.msra.mxu0 %v2294
        %2431 = vmatprep.subr.mxu0 %v2307
        %2432 = vmatpush1.msra.mxu0 %v2306
        %2433 = vmatprep.subr.mxu0 0.0
        %2434 = vmatpush1.msra.mxu0 0.0
        %2435 = vmatprep.subr.mxu0 0.0
        %2436 = vmatpush1.msra.mxu0 0.0
        %2437 = vmatprep.subr.mxu0 0.0
        %2438 = vmatpush1.msra.mxu0 0.0
        %2439 = vmatprep.subr.mxu0 0.0
        %2440 = vmatpush1.msra.mxu0 0.0
        %2441 = vmatprep.subr.mxu0 0.0
        %2442 = vmatpush1.msra.mxu0 0.0
        %2443 = vmatprep.subr.mxu0 0.0
        %2444 = vmatpush1.msra.mxu0 0.0
        %2445 = vmatprep.subr.mxu0 0.0
        %2446 = vmatpush1.msra.mxu0 0.0
        %2447 = vmatprep.subr.mxu0 0.0
        %2448 = vmatpush1.msra.mxu0 0.0
        %2449 = vmatprep.mubr.f32.mxu0 %v2383
        %2450 = vmatmul.mubr.f32.gmra.mrb[0].mxu0 %v2028
        %v2451 = vpop.f32.mrb[0].mxu0
        %v2452 = vadd.f32 %v2325, %v2451
        %v2453 = vpop.f32.mrb[0].mxu0
        %v2454 = vadd.f32 %v2329, %v2453
        %2455 = vdwg.mxu0
        %2456 = vmatprep.subr.mxu0 %v2033
        %2457 = vmatpush1.msra.mxu0 %v2032
        %2458 = vmatprep.subr.mxu0 %v2045
        %2459 = vmatpush1.msra.mxu0 %v2044
        %2460 = vmatprep.subr.mxu0 %v2057
        %2461 = vmatpush1.msra.mxu0 %v2056
        %2462 = vmatprep.subr.mxu0 %v2069
        %2463 = vmatpush1.msra.mxu0 %v2068
        %2464 = vmatprep.subr.mxu0 %v2081
        %2465 = vmatpush1.msra.mxu0 %v2080
        %2466 = vmatprep.subr.mxu0 %v2093
        %2467 = vmatpush1.msra.mxu0 %v2092
        %2468 = vmatprep.subr.mxu0 %v2105
        %2469 = vmatpush1.msra.mxu0 %v2104
        %2470 = vmatprep.subr.mxu0 %v2117
        %2471 = vmatpush1.msra.mxu0 %v2116
        %2472 = vmatprep.subr.mxu0 %v2129
        %2473 = vmatpush1.msra.mxu0 %v2128
        %2474 = vmatprep.subr.mxu0 %v2141
        %2475 = vmatpush1.msra.mxu0 %v2140
        %2476 = vmatprep.subr.mxu0 %v2153
        %2477 = vmatpush1.msra.mxu0 %v2152
        %2478 = vmatprep.subr.mxu0 %v2165
        %2479 = vmatpush1.msra.mxu0 %v2164
        %2480 = vmatprep.subr.mxu0 %v2177
        %2481 = vmatpush1.msra.mxu0 %v2176
        %2482 = vmatprep.subr.mxu0 %v2189
        %2483 = vmatpush1.msra.mxu0 %v2188
        %2484 = vmatprep.subr.mxu0 %v2201
        %2485 = vmatpush1.msra.mxu0 %v2200
        %2486 = vmatprep.subr.mxu0 %v2213
        %2487 = vmatpush1.msra.mxu0 %v2212
        %2488 = vmatprep.subr.mxu0 %v2225
        %2489 = vmatpush1.msra.mxu0 %v2224
        %2490 = vmatprep.subr.mxu0 %v2237
        %2491 = vmatpush1.msra.mxu0 %v2236
        %2492 = vmatprep.subr.mxu0 %v2249
        %2493 = vmatpush1.msra.mxu0 %v2248
        %2494 = vmatprep.subr.mxu0 %v2261
        %2495 = vmatpush1.msra.mxu0 %v2260
        %2496 = vmatprep.subr.mxu0 %v2273
        %2497 = vmatpush1.msra.mxu0 %v2272
        %2498 = vmatprep.subr.mxu0 %v2285
        %2499 = vmatpush1.msra.mxu0 %v2284
        %2500 = vmatprep.subr.mxu0 %v2297
        %2501 = vmatpush1.msra.mxu0 %v2296
        %2502 = vmatprep.subr.mxu0 %v2309
        %2503 = vmatpush1.msra.mxu0 %v2308
        %2504 = vmatprep.subr.mxu0 0.0
        %2505 = vmatpush1.msra.mxu0 0.0
        %2506 = vmatprep.subr.mxu0 0.0
        %2507 = vmatpush1.msra.mxu0 0.0
        %2508 = vmatprep.subr.mxu0 0.0
        %2509 = vmatpush1.msra.mxu0 0.0
        %2510 = vmatprep.subr.mxu0 0.0
        %2511 = vmatpush1.msra.mxu0 0.0
        %2512 = vmatprep.subr.mxu0 0.0
        %2513 = vmatpush1.msra.mxu0 0.0
        %2514 = vmatprep.subr.mxu0 0.0
        %2515 = vmatpush1.msra.mxu0 0.0
        %2516 = vmatprep.subr.mxu0 0.0
        %2517 = vmatpush1.msra.mxu0 0.0
        %2518 = vmatprep.subr.mxu0 0.0
        %2519 = vmatpush1.msra.mxu0 0.0
        %2520 = vmatprep.mubr.f32.mxu0 %v2383
        %2521 = vmatmul.mubr.f32.gmra.mrb[0].mxu0 %v2028
        %v2522 = vpop.f32.mrb[0].mxu0
        %v2523 = vadd.f32 %v2333, %v2522
        %v2524 = vpop.f32.mrb[0].mxu0
        %v2525 = vadd.f32 %v2337, %v2524
        %2526 = vdwg.mxu0
        %2527 = vmatprep.subr.mxu0 %v2035
        %2528 = vmatpush1.msra.mxu0 %v2034
        %2529 = vmatprep.subr.mxu0 %v2047
        %2530 = vmatpush1.msra.mxu0 %v2046
        %2531 = vmatprep.subr.mxu0 %v2059
        %2532 = vmatpush1.msra.mxu0 %v2058
        %2533 = vmatprep.subr.mxu0 %v2071
        %2534 = vmatpush1.msra.mxu0 %v2070
        %2535 = vmatprep.subr.mxu0 %v2083
        %2536 = vmatpush1.msra.mxu0 %v2082
        %2537 = vmatprep.subr.mxu0 %v2095
        %2538 = vmatpush1.msra.mxu0 %v2094
        %2539 = vmatprep.subr.mxu0 %v2107
        %2540 = vmatpush1.msra.mxu0 %v2106
        %2541 = vmatprep.subr.mxu0 %v2119
        %2542 = vmatpush1.msra.mxu0 %v2118
        %2543 = vmatprep.subr.mxu0 %v2131
        %2544 = vmatpush1.msra.mxu0 %v2130
        %2545 = vmatprep.subr.mxu0 %v2143
        %2546 = vmatpush1.msra.mxu0 %v2142
        %2547 = vmatprep.subr.mxu0 %v2155
        %2548 = vmatpush1.msra.mxu0 %v2154
        %2549 = vmatprep.subr.mxu0 %v2167
        %2550 = vmatpush1.msra.mxu0 %v2166
        %2551 = vmatprep.subr.mxu0 %v2179
        %2552 = vmatpush1.msra.mxu0 %v2178
        %2553 = vmatprep.subr.mxu0 %v2191
        %2554 = vmatpush1.msra.mxu0 %v2190
        %2555 = vmatprep.subr.mxu0 %v2203
        %2556 = vmatpush1.msra.mxu0 %v2202
        %2557 = vmatprep.subr.mxu0 %v2215
        %2558 = vmatpush1.msra.mxu0 %v2214
        %2559 = vmatprep.subr.mxu0 %v2227
        %2560 = vmatpush1.msra.mxu0 %v2226
        %2561 = vmatprep.subr.mxu0 %v2239
        %2562 = vmatpush1.msra.mxu0 %v2238
        %2563 = vmatprep.subr.mxu0 %v2251
        %2564 = vmatpush1.msra.mxu0 %v2250
        %2565 = vmatprep.subr.mxu0 %v2263
        %2566 = vmatpush1.msra.mxu0 %v2262
        %2567 = vmatprep.subr.mxu0 %v2275
        %2568 = vmatpush1.msra.mxu0 %v2274
        %2569 = vmatprep.subr.mxu0 %v2287
        %2570 = vmatpush1.msra.mxu0 %v2286
        %2571 = vmatprep.subr.mxu0 %v2299
        %2572 = vmatpush1.msra.mxu0 %v2298
        %2573 = vmatprep.subr.mxu0 %v2311
        %2574 = vmatpush1.msra.mxu0 %v2310
        %2575 = vmatprep.subr.mxu0 0.0
        %2576 = vmatpush1.msra.mxu0 0.0
        %2577 = vmatprep.subr.mxu0 0.0
        %2578 = vmatpush1.msra.mxu0 0.0
        %2579 = vmatprep.subr.mxu0 0.0
        %2580 = vmatpush1.msra.mxu0 0.0
        %2581 = vmatprep.subr.mxu0 0.0
        %2582 = vmatpush1.msra.mxu0 0.0
        %2583 = vmatprep.subr.mxu0 0.0
        %2584 = vmatpush1.msra.mxu0 0.0
        %2585 = vmatprep.subr.mxu0 0.0
        %2586 = vmatpush1.msra.mxu0 0.0
        %2587 = vmatprep.subr.mxu0 0.0
        %2588 = vmatpush1.msra.mxu0 0.0
        %2589 = vmatprep.subr.mxu0 0.0
        %2590 = vmatpush1.msra.mxu0 0.0
        %2591 = vmatprep.mubr.f32.mxu0 %v2383
        %2592 = vmatmul.mubr.f32.gmra.mrb[0].mxu0 %v2028
        %v2593 = vpop.f32.mrb[0].mxu0
        %v2594 = vadd.f32 %v2341, %v2593
        %v2595 = vpop.f32.mrb[0].mxu0
        %v2596 = vadd.f32 %v2345, %v2595
        %2597 = vdwg.mxu0
        %2598 = vmatprep.subr.mxu0 %v2037
        %2599 = vmatpush1.msra.mxu0 %v2036
        %2600 = vmatprep.subr.mxu0 %v2049
        %2601 = vmatpush1.msra.mxu0 %v2048
        %2602 = vmatprep.subr.mxu0 %v2061
        %2603 = vmatpush1.msra.mxu0 %v2060
        %2604 = vmatprep.subr.mxu0 %v2073
        %2605 = vmatpush1.msra.mxu0 %v2072
        %2606 = vmatprep.subr.mxu0 %v2085
        %2607 = vmatpush1.msra.mxu0 %v2084
        %2608 = vmatprep.subr.mxu0 %v2097
        %2609 = vmatpush1.msra.mxu0 %v2096
        %2610 = vmatprep.subr.mxu0 %v2109
        %2611 = vmatpush1.msra.mxu0 %v2108
        %2612 = vmatprep.subr.mxu0 %v2121
        %2613 = vmatpush1.msra.mxu0 %v2120
        %2614 = vmatprep.subr.mxu0 %v2133
        %2615 = vmatpush1.msra.mxu0 %v2132
        %2616 = vmatprep.subr.mxu0 %v2145
        %2617 = vmatpush1.msra.mxu0 %v2144
        %2618 = vmatprep.subr.mxu0 %v2157
        %2619 = vmatpush1.msra.mxu0 %v2156
        %2620 = vmatprep.subr.mxu0 %v2169
        %2621 = vmatpush1.msra.mxu0 %v2168
        %2622 = vmatprep.subr.mxu0 %v2181
        %2623 = vmatpush1.msra.mxu0 %v2180
        %2624 = vmatprep.subr.mxu0 %v2193
        %2625 = vmatpush1.msra.mxu0 %v2192
        %2626 = vmatprep.subr.mxu0 %v2205
        %2627 = vmatpush1.msra.mxu0 %v2204
        %2628 = vmatprep.subr.mxu0 %v2217
        %2629 = vmatpush1.msra.mxu0 %v2216
        %2630 = vmatprep.subr.mxu0 %v2229
        %2631 = vmatpush1.msra.mxu0 %v2228
        %2632 = vmatprep.subr.mxu0 %v2241
        %2633 = vmatpush1.msra.mxu0 %v2240
        %2634 = vmatprep.subr.mxu0 %v2253
        %2635 = vmatpush1.msra.mxu0 %v2252
        %2636 = vmatprep.subr.mxu0 %v2265
        %2637 = vmatpush1.msra.mxu0 %v2264
        %2638 = vmatprep.subr.mxu0 %v2277
        %2639 = vmatpush1.msra.mxu0 %v2276
        %2640 = vmatprep.subr.mxu0 %v2289
        %2641 = vmatpush1.msra.mxu0 %v2288
        %2642 = vmatprep.subr.mxu0 %v2301
        %2643 = vmatpush1.msra.mxu0 %v2300
        %2644 = vmatprep.subr.mxu0 %v2313
        %2645 = vmatpush1.msra.mxu0 %v2312
        %2646 = vmatprep.subr.mxu0 0.0
        %2647 = vmatpush1.msra.mxu0 0.0
        %2648 = vmatprep.subr.mxu0 0.0
        %2649 = vmatpush1.msra.mxu0 0.0
        %2650 = vmatprep.subr.mxu0 0.0
        %2651 = vmatpush1.msra.mxu0 0.0
        %2652 = vmatprep.subr.mxu0 0.0
        %2653 = vmatpush1.msra.mxu0 0.0
        %2654 = vmatprep.subr.mxu0 0.0
        %2655 = vmatpush1.msra.mxu0 0.0
        %2656 = vmatprep.subr.mxu0 0.0
        %2657 = vmatpush1.msra.mxu0 0.0
        %2658 = vmatprep.subr.mxu0 0.0
        %2659 = vmatpush1.msra.mxu0 0.0
        %2660 = vmatprep.subr.mxu0 0.0
        %2661 = vmatpush1.msra.mxu0 0.0
        %2662 = vmatprep.mubr.f32.mxu0 %v2383
        %2663 = vmatmul.mubr.f32.gmra.mrb[0].mxu0 %v2028
        %v2664 = vpop.f32.mrb[0].mxu0
        %v2665 = vadd.f32 %v2349, %v2664
        %v2666 = vpop.f32.mrb[0].mxu0
        %v2667 = vadd.f32 %v2353, %v2666
        %2668 = vdwg.mxu0
        %2669 = vmatprep.subr.mxu0 %v2039
        %2670 = vmatpush1.msra.mxu0 %v2038
        %2671 = vmatprep.subr.mxu0 %v2051
        %2672 = vmatpush1.msra.mxu0 %v2050
        %2673 = vmatprep.subr.mxu0 %v2063
        %2674 = vmatpush1.msra.mxu0 %v2062
        %2675 = vmatprep.subr.mxu0 %v2075
        %2676 = vmatpush1.msra.mxu0 %v2074
        %2677 = vmatprep.subr.mxu0 %v2087
        %2678 = vmatpush1.msra.mxu0 %v2086
        %2679 = vmatprep.subr.mxu0 %v2099
        %2680 = vmatpush1.msra.mxu0 %v2098
        %2681 = vmatprep.subr.mxu0 %v2111
        %2682 = vmatpush1.msra.mxu0 %v2110
        %2683 = vmatprep.subr.mxu0 %v2123
        %2684 = vmatpush1.msra.mxu0 %v2122
        %2685 = vmatprep.subr.mxu0 %v2135
        %2686 = vmatpush1.msra.mxu0 %v2134
        %2687 = vmatprep.subr.mxu0 %v2147
        %2688 = vmatpush1.msra.mxu0 %v2146
        %2689 = vmatprep.subr.mxu0 %v2159
        %2690 = vmatpush1.msra.mxu0 %v2158
        %2691 = vmatprep.subr.mxu0 %v2171
        %2692 = vmatpush1.msra.mxu0 %v2170
        %2693 = vmatprep.subr.mxu0 %v2183
        %2694 = vmatpush1.msra.mxu0 %v2182
        %2695 = vmatprep.subr.mxu0 %v2195
        %2696 = vmatpush1.msra.mxu0 %v2194
        %2697 = vmatprep.subr.mxu0 %v2207
        %2698 = vmatpush1.msra.mxu0 %v2206
        %2699 = vmatprep.subr.mxu0 %v2219
        %2700 = vmatpush1.msra.mxu0 %v2218
        %2701 = vmatprep.subr.mxu0 %v2231
        %2702 = vmatpush1.msra.mxu0 %v2230
        %2703 = vmatprep.subr.mxu0 %v2243
        %2704 = vmatpush1.msra.mxu0 %v2242
        %2705 = vmatprep.subr.mxu0 %v2255
        %2706 = vmatpush1.msra.mxu0 %v2254
        %2707 = vmatprep.subr.mxu0 %v2267
        %2708 = vmatpush1.msra.mxu0 %v2266
        %2709 = vmatprep.subr.mxu0 %v2279
        %2710 = vmatpush1.msra.mxu0 %v2278
        %2711 = vmatprep.subr.mxu0 %v2291
        %2712 = vmatpush1.msra.mxu0 %v2290
        %2713 = vmatprep.subr.mxu0 %v2303
        %2714 = vmatpush1.msra.mxu0 %v2302
        %2715 = vmatprep.subr.mxu0 %v2315
        %2716 = vmatpush1.msra.mxu0 %v2314
        %2717 = vmatprep.subr.mxu0 0.0
        %2718 = vmatpush1.msra.mxu0 0.0
        %2719 = vmatprep.subr.mxu0 0.0
        %2720 = vmatpush1.msra.mxu0 0.0
        %2721 = vmatprep.subr.mxu0 0.0
        %2722 = vmatpush1.msra.mxu0 0.0
        %2723 = vmatprep.subr.mxu0 0.0
        %2724 = vmatpush1.msra.mxu0 0.0
        %2725 = vmatprep.subr.mxu0 0.0
        %2726 = vmatpush1.msra.mxu0 0.0
        %2727 = vmatprep.subr.mxu0 0.0
        %2728 = vmatpush1.msra.mxu0 0.0
        %2729 = vmatprep.subr.mxu0 0.0
        %2730 = vmatpush1.msra.mxu0 0.0
        %2731 = vmatprep.subr.mxu0 0.0
        %2732 = vmatpush1.msra.mxu0 0.0
        %2733 = vmatprep.mubr.f32.mxu0 %v2383
        %2734 = vmatmul.mubr.f32.gmra.mrb[0].mxu0 %v2028
        %v2735 = vpop.f32.mrb[0].mxu0
        %v2736 = vadd.f32 %v2357, %v2735
        %v2737 = vpop.f32.mrb[0].mxu0
        %v2738 = vadd.f32 %v2361, %v2737
        %2739 = vdwg.mxu0
        %2740 = vmatprep.subr.mxu0 %v2041
        %2741 = vmatpush1.msra.mxu0 %v2040
        %2742 = vmatprep.subr.mxu0 %v2053
        %2743 = vmatpush1.msra.mxu0 %v2052
        %2744 = vmatprep.subr.mxu0 %v2065
        %2745 = vmatpush1.msra.mxu0 %v2064
        %2746 = vmatprep.subr.mxu0 %v2077
        %2747 = vmatpush1.msra.mxu0 %v2076
        %2748 = vmatprep.subr.mxu0 %v2089
        %2749 = vmatpush1.msra.mxu0 %v2088
        %2750 = vmatprep.subr.mxu0 %v2101
        %2751 = vmatpush1.msra.mxu0 %v2100
        %2752 = vmatprep.subr.mxu0 %v2113
        %2753 = vmatpush1.msra.mxu0 %v2112
        %2754 = vmatprep.subr.mxu0 %v2125
        %2755 = vmatpush1.msra.mxu0 %v2124
        %2756 = vmatprep.subr.mxu0 %v2137
        %2757 = vmatpush1.msra.mxu0 %v2136
        %2758 = vmatprep.subr.mxu0 %v2149
        %2759 = vmatpush1.msra.mxu0 %v2148
        %2760 = vmatprep.subr.mxu0 %v2161
        %2761 = vmatpush1.msra.mxu0 %v2160
        %2762 = vmatprep.subr.mxu0 %v2173
        %2763 = vmatpush1.msra.mxu0 %v2172
        %2764 = vmatprep.subr.mxu0 %v2185
        %2765 = vmatpush1.msra.mxu0 %v2184
        %2766 = vmatprep.subr.mxu0 %v2197
        %2767 = vmatpush1.msra.mxu0 %v2196
        %2768 = vmatprep.subr.mxu0 %v2209
        %2769 = vmatpush1.msra.mxu0 %v2208
        %2770 = vmatprep.subr.mxu0 %v2221
        %2771 = vmatpush1.msra.mxu0 %v2220
        %2772 = vmatprep.subr.mxu0 %v2233
        %2773 = vmatpush1.msra.mxu0 %v2232
        %2774 = vmatprep.subr.mxu0 %v2245
        %2775 = vmatpush1.msra.mxu0 %v2244
        %2776 = vmatprep.subr.mxu0 %v2257
        %2777 = vmatpush1.msra.mxu0 %v2256
        %2778 = vmatprep.subr.mxu0 %v2269
        %2779 = vmatpush1.msra.mxu0 %v2268
        %2780 = vmatprep.subr.mxu0 %v2281
        %2781 = vmatpush1.msra.mxu0 %v2280
        %2782 = vmatprep.subr.mxu0 %v2293
        %2783 = vmatpush1.msra.mxu0 %v2292
        %2784 = vmatprep.subr.mxu0 %v2305
        %2785 = vmatpush1.msra.mxu0 %v2304
        %2786 = vmatprep.subr.mxu0 %v2317
        %2787 = vmatpush1.msra.mxu0 %v2316
        %2788 = vmatprep.subr.mxu0 0.0
        %2789 = vmatpush1.msra.mxu0 0.0
        %2790 = vmatprep.subr.mxu0 0.0
        %2791 = vmatpush1.msra.mxu0 0.0
        %2792 = vmatprep.subr.mxu0 0.0
        %2793 = vmatpush1.msra.mxu0 0.0
        %2794 = vmatprep.subr.mxu0 0.0
        %2795 = vmatpush1.msra.mxu0 0.0
        %2796 = vmatprep.subr.mxu0 0.0
        %2797 = vmatpush1.msra.mxu0 0.0
        %2798 = vmatprep.subr.mxu0 0.0
        %2799 = vmatpush1.msra.mxu0 0.0
        %2800 = vmatprep.subr.mxu0 0.0
        %2801 = vmatpush1.msra.mxu0 0.0
        %2802 = vmatprep.subr.mxu0 0.0
        %2803 = vmatpush1.msra.mxu0 0.0
        %2804 = vmatprep.mubr.f32.mxu0 %v2383
        %2805 = vmatmul.mubr.f32.gmra.mrb[0].mxu0 %v2028
        %v2806 = vpop.f32.mrb[0].mxu0
        %v2807 = vadd.f32 %v2365, %v2806
        %v2808 = vpop.f32.mrb[0].mxu0
        %v2809 = vadd.f32 %v2369, %v2808
        %2810 = vdwg.mxu0
        %2811 = vst [vmem:[%s406] sm:$0xff] %v2452
        %2812 = vst [vmem:[%s406 + $0x8] sm:$0xff] %v2454
        %2813 = vst [vmem:[%s406 + $0x10] sm:$0xff] %v2523
        %2814 = vst [vmem:[%s406 + $0x18] sm:$0xff] %v2525
        %2815 = vst [vmem:[%s406 + $0x20] sm:$0xff] %v2594
        %2816 = vst [vmem:[%s406 + $0x28] sm:$0xff] %v2596
        %2817 = vst [vmem:[%s406 + $0x30] sm:$0xff] %v2665
        %2818 = vst [vmem:[%s406 + $0x38] sm:$0xff] %v2667
        %2819 = vst [vmem:[%s406 + $0x40] sm:$0xff] %v2736
        %2820 = vst [vmem:[%s406 + $0x48] sm:$0xff] %v2738
        %2821 = vst [vmem:[%s406 + $0x50] sm:$0xff] %v2807
        %2822 = vst [vmem:[%s406 + $0x58] sm:$0xff] %v2809
        %s2823 = sand.u32 %s291, 1
        %s2824 = scalar_lea.sflag [#allocation3], %s2823
        %s2825 = sand.u32 %s291, 1
        %s2826 = smul.addr %s2825, 96
        %s2827 = scalar_lea.vmem [#allocation2], %s2826
        // Predicated region
        $region69: #{tpu_custom_call.1} parent=67 // pred_check
          %p2828 = pneg %p301
        $region70: #{tpu_custom_call.1} parent=67 // pred_check_branch
          %2830 = sbr.rel (%p2828) target = $region72
        $region71: #{tpu_custom_call.1} parent=67 // pred_region
          %s2832 = ssub.s32 1536, 1536
          %2833 = vsyncadd %s2824, %s2832
          %s2834 = smul.addr %s26, 12
          %s2835 = smul.addr %s2834, 128
          %s2836 = scalar_lea.hbm %s12, %s2835
          %s2838 = sshll.u32 %s2827, 4
          %s2839 = int_to_ptr.vmem [resolvable:$true] %s2838
          %2841 = dma.vmem_to_hbm [thread:$0]  %s2839, 1536, %s2836, %s2824
        $region72: #{tpu_custom_call.1} parent=67 // pred_fallthru
          _
      $region68: #{tpu_custom_call.1} parent=5 // pred_fallthru
        _
      %p2842 = scmp.le.s32.totalorder 2, %s21
      // Predicated region
      $region73: #{tpu_custom_call.1} parent=5 // pred_check
        %p2843 = pneg %p2842
      $region74: #{tpu_custom_call.1} parent=5 // pred_check_branch
        %2845 = sbr.rel (%p2843) target = $region76
      $region75: #{tpu_custom_call.1} parent=5 // pred_region
        %s2846 = ssub.s32 %s21, 2
        // Predicated region
        $region77: #{tpu_custom_call.1} parent=75 // pred_check
          %p2847 = pneg %p307
        $region78: #{tpu_custom_call.1} parent=75 // pred_check_branch
          %2849 = sbr.rel (%p2847) target = $region80
        $region79: #{tpu_custom_call.1} parent=75 // pred_region
          %s2850 = sand.u32 %s292, 1
          %s2851 = scalar_lea.sflag [#allocation3], %s2850
          %s2852 = sand.u32 %s292, 1
          %s2853 = smul.addr %s2852, 96
          %s2854 = scalar_lea.vmem [#allocation2], %s2853
          %2855 = dma.done %s2851, 1536
        $region80: #{tpu_custom_call.1} parent=75 // pred_fallthru
          _
      $region76: #{tpu_custom_call.1} parent=5 // pred_fallthru
        _
    $region6: #{tpu_custom_call.1} parent=1 // loop_footer
      %s25 = sadd.s32 1, %s21
    $region7: #{tpu_custom_call.1} parent=1 // loop_footer_branch
      %20 = sbr.rel target = $region3
    $region8: #{tpu_custom_call.1} parent=1 // loop_exit
      _
    %2856 = vsyncpa [#allocation3], 1
    %s2857 = scalar_lea.sflag [#allocation3], 1
    %2858 = vsyncpa %s2857, 1

</llo_original>
